<compile_context>
chip_gen: v7x
topology: tpu7x:2x2x1
jax: 0.10.0
libtpu: 0.0.40
codegen_flags: <defaults>
</compile_context>

<pallas_src>
import functools

import jax
import jax.numpy as jnp
from jax import lax
from jax.experimental import pallas as pl
from jax.experimental.pallas import tpu as pltpu

KERNEL_SIZE = 3
NUM_CHANNELS = 64
REDUCTION_RATIO = 16


def _conv3x3_rows(src_ref, nrows, w_ref, b_ref, col_ref, acc_ref, *, W, C):
    """3x3 SAME conv over an (nrows+2, W+2, C) zero-padded f32 slab.

    Per-dy accumulating im2col: for each kernel row dy the three dx taps are
    packed into an (nrows*W, 3C) bf16 col buffer and contracted against the
    (3C, C) bf16 weight slice w_ref[dy] on the MXU with f32 accumulation.
    Returns the (nrows*W, C) f32 conv output + bias as a value.
    """
    M = nrows * W
    for dy in range(KERNEL_SIZE):
        for dx in range(KERNEL_SIZE):
            col_ref[0:M, dx * C:(dx + 1) * C] = (
                src_ref[dy:dy + nrows, dx:dx + W, :]
                .reshape(M, C).astype(jnp.bfloat16))
        contrib = jnp.dot(col_ref[0:M, :], w_ref[dy],
                          preferred_element_type=jnp.float32)
        if dy == 0:
            acc_ref[0:M, :] = contrib
        else:
            acc_ref[0:M, :] += contrib
    return acc_ref[0:M, :] + b_ref[...]


def rcab_kernel(x_ref, w1_ref, b1_ref, w2_ref, b2_ref,
                wa1_ref, ba1_ref, wa2_ref, ba2_ref,
                out_ref,
                pad_ref, act_pad_ref, col_ref, acc_ref, pool_ref,
                *, H, W, C, TH):
    t = pl.program_id(1)
    n_tiles = pl.num_programs(1)
    r0 = t * TH                                    # first output row of this tile
    start = pl.multiple_of(r0 * W, TH * W)         # row offset into (H*W, C)

    # ---- build the zero-padded x slab for this tile: image rows r0-2 .. r0+TH+1
    zcol = jnp.zeros((TH + 4, 1, C), jnp.float32)
    pad_ref[:, 0:1, :] = zcol                      # left zero column
    pad_ref[:, W + 1:W + 2, :] = zcol              # right zero column
    # interior rows (always inside the image)
    pad_ref[2:TH + 2, 1:W + 1, :] = (
        x_ref[0, pl.ds(start, TH * W), :].reshape(TH, W, C))
    # 2-row top / bottom halo, zeroed outside the image
    for i, off in ((0, -2), (1, -1), (TH + 2, TH), (TH + 3, TH + 1)):
        src = r0 + off
        valid = jnp.logical_and(src >= 0, src < H)
        srcc = jnp.clip(src, 0, H - 1)
        row = x_ref[0, pl.ds(pl.multiple_of(srcc * W, W), W), :]   # (W, C)
        pad_ref[i, 1:W + 1, :] = jnp.where(valid, row, 0.0)

    # ---- conv1 -> ReLU over TH+2 rows (1-row activation halo for conv2) ----
    act = jnp.maximum(
        _conv3x3_rows(pad_ref, TH + 2, w1_ref, b1_ref, col_ref, acc_ref,
                      W=W, C=C), 0.0)                              # ((TH+2)*W, C)
    act_pad_ref[:, 1:W + 1, :] = act.reshape(TH + 2, W, C)
    zcol2 = jnp.zeros((TH + 2, 1, C), jnp.float32)
    act_pad_ref[:, 0:1, :] = zcol2
    act_pad_ref[:, W + 1:W + 2, :] = zcol2

    # conv2 must see *zero* padding (not conv1-of-padding) outside the image
    @pl.when(r0 == 0)
    def _():
        act_pad_ref[0] = jnp.zeros((W + 2, C), jnp.float32)

    @pl.when(r0 + TH == H)
    def _():
        act_pad_ref[TH + 1] = jnp.zeros((W + 2, C), jnp.float32)

    # ---- conv2: residual rows of this tile, stored into the resident output ----
    res = _conv3x3_rows(act_pad_ref, TH, w2_ref, b2_ref, col_ref, acc_ref,
                        W=W, C=C)                                  # (TH*W, C) f32
    out_ref[0, pl.ds(start, TH * W), :] = res.astype(out_ref.dtype)

    # ---- phase 1 of channel attention: accumulate per-tile pooled sums ----
    @pl.when(t == 0)
    def _():
        pool_ref[...] = jnp.zeros_like(pool_ref)

    pool_ref[...] += jnp.sum(res, axis=0, keepdims=True)

    # ---- phase 2 (last tile): gate the whole resident residual + add input ----
    @pl.when(t == n_tiles - 1)
    def _():
        pooled = pool_ref[...] * (1.0 / (H * W))                   # full-image mean
        h1 = jnp.maximum(
            jnp.dot(pooled, wa1_ref[...],
                    preferred_element_type=jnp.float32) + ba1_ref[...], 0.0)
        scale = jax.nn.sigmoid(
            jnp.dot(h1, wa2_ref[...],
                    preferred_element_type=jnp.float32) + ba2_ref[...])  # (1, C)
        out_ref[0] = (x_ref[0] + out_ref[0] * scale).astype(out_ref.dtype)


def rcab_forward(x_nchw, params, *, tile_h=8):
    """x_nchw: (N, C, H, W) float32 — matches the PyTorch module interface."""
    w1, b1, w2, b2, wa1, ba1, wa2, ba2 = params
    N, C, H, W = x_nchw.shape
    Cr = wa1.shape[1]
    K = KERNEL_SIZE

    TH = min(tile_h, H)
    assert H % TH == 0, "H must be divisible by the row tile"
    assert W % 8 == 0, "W must be sublane-aligned"
    T = H // TH

    # TODO(synk): drop these NCHW<->NHWC transposes by keeping the model in an
    # NHWC (or C-major transposed) layout end-to-end; for one mem-bound block
    # they are full HBM round trips of the activation tensor.
    x_flat = jnp.transpose(x_nchw, (0, 2, 3, 1)).reshape(N, H * W, C)
    # Conv weights (Kh, Kw, Cin, Cout) -> per-dy (3, 3C, C) bf16 for the MXU.
    w1r = w1.reshape(K, K * C, C).astype(jnp.bfloat16)
    w2r = w2.reshape(K, K * C, C).astype(jnp.bfloat16)

    kernel = functools.partial(rcab_kernel, H=H, W=W, C=C, TH=TH)
    out_flat = pl.pallas_call(
        kernel,
        out_shape=jax.ShapeDtypeStruct((N, H * W, C), x_flat.dtype),
        grid=(N, T),
        in_specs=[
            pl.BlockSpec((1, H * W, C), lambda n, t: (n, 0, 0)),   # x (resident per n)
            pl.BlockSpec((K, K * C, C), lambda n, t: (0, 0, 0)),   # w1 (bf16)
            pl.BlockSpec((1, C), lambda n, t: (0, 0)),             # b1
            pl.BlockSpec((K, K * C, C), lambda n, t: (0, 0, 0)),   # w2 (bf16)
            pl.BlockSpec((1, C), lambda n, t: (0, 0)),             # b2
            pl.BlockSpec((C, Cr), lambda n, t: (0, 0)),            # wa1
            pl.BlockSpec((1, Cr), lambda n, t: (0, 0)),            # ba1
            pl.BlockSpec((Cr, C), lambda n, t: (0, 0)),            # wa2
            pl.BlockSpec((1, C), lambda n, t: (0, 0)),             # ba2
        ],
        out_specs=pl.BlockSpec((1, H * W, C), lambda n, t: (n, 0, 0)),
        scratch_shapes=[
            pltpu.VMEM((TH + 4, W + 2, C), jnp.float32),        # padded x slab
            pltpu.VMEM((TH + 2, W + 2, C), jnp.float32),        # padded act slab
            pltpu.VMEM(((TH + 2) * W, K * C), jnp.bfloat16),    # per-dy im2col (bf16)
            pltpu.VMEM(((TH + 2) * W, C), jnp.float32),         # f32 conv accumulator
            pltpu.VMEM((1, C), jnp.float32),                    # pooled-sum accumulator
        ],
        compiler_params=pltpu.CompilerParams(
            dimension_semantics=("parallel", "arbitrary"),
            vmem_limit_bytes=48 * 1024 * 1024),
    )(x_flat, w1r, b1.reshape(1, C), w2r, b2.reshape(1, C),
      wa1, ba1.reshape(1, Cr), wa2, ba2.reshape(1, C))

    return jnp.transpose(out_flat.reshape(N, H, W, C), (0, 3, 1, 2))


def rcab_reference(x, params):
    """Pure-JAX reference mirroring the PyTorch module exactly (NCHW, f32)."""
    w1, b1, w2, b2, wa1, ba1, wa2, ba2 = params
    dn = ('NCHW', 'HWIO', 'NCHW')
    y = lax.conv_general_dilated(x, w1, (1, 1), 'SAME', dimension_numbers=dn,
                                 precision=lax.Precision.HIGHEST)
    y = jnp.maximum(y + b1[None, :, None, None], 0.0)
    r = lax.conv_general_dilated(y, w2, (1, 1), 'SAME', dimension_numbers=dn,
                                 precision=lax.Precision.HIGHEST)
    r = r + b2[None, :, None, None]
    pooled = jnp.mean(r, axis=(2, 3))                         # (N, C)
    h = jnp.maximum(pooled @ wa1 + ba1, 0.0)
    s = jax.nn.sigmoid(h @ wa2 + ba2)                         # (N, C)
    return x + r * s[:, :, None, None]


if __name__ == "__main__":
    N, C, H, W = 2, NUM_CHANNELS, 16, 16
    Cr = C // REDUCTION_RATIO

    keys = jax.random.split(jax.random.PRNGKey(0), 9)
    x = jax.random.normal(keys[0], (N, C, H, W), jnp.float32)
    # Deterministic synthetic parameters (shapes per nn.Module __init__).
    w1 = jax.random.normal(keys[1], (KERNEL_SIZE, KERNEL_SIZE, C, C), jnp.float32) * 0.05
    b1 = jax.random.normal(keys[2], (C,), jnp.float32) * 0.05
    w2 = jax.random.normal(keys[3], (KERNEL_SIZE, KERNEL_SIZE, C, C), jnp.float32) * 0.05
    b2 = jax.random.normal(keys[4], (C,), jnp.float32) * 0.05
    wa1 = jax.random.normal(keys[5], (C, Cr), jnp.float32) * 0.05   # 1x1 conv C -> C/r
    ba1 = jax.random.normal(keys[6], (Cr,), jnp.float32) * 0.05
    wa2 = jax.random.normal(keys[7], (Cr, C), jnp.float32) * 0.05   # 1x1 conv C/r -> C
    ba2 = jax.random.normal(keys[8], (C,), jnp.float32) * 0.05
    params = (w1, b1, w2, b2, wa1, ba1, wa2, ba2)

    out = jax.block_until_ready(rcab_forward(x, params, tile_h=8))
    ref = rcab_reference(x, params)
    max_err = float(jnp.max(jnp.abs(out - ref)))
    assert out.shape == x.shape and out.dtype == x.dtype
    # bf16 conv inputs/weights with f32 accumulation: looser tolerance than f32.
    assert jnp.allclose(out, ref, atol=6e-2, rtol=6e-2), f"max_err={max_err}"
    print("KERNEL_OK")
</pallas_src>

<mosaic_0001>
module attributes {stable_mosaic.version = 11 : i64} {
  func.func @rcab_kernel(%arg0: i32, %arg1: i32, %arg2: memref<1x256x64xf32, #tpu.memory_space<vmem>>, %arg3: memref<3x192x64xbf16, #tpu.memory_space<vmem>>, %arg4: memref<1x64xf32, #tpu.memory_space<vmem>>, %arg5: memref<3x192x64xbf16, #tpu.memory_space<vmem>>, %arg6: memref<1x64xf32, #tpu.memory_space<vmem>>, %arg7: memref<64x4xf32, #tpu.memory_space<vmem>>, %arg8: memref<1x4xf32, #tpu.memory_space<vmem>>, %arg9: memref<4x64xf32, #tpu.memory_space<vmem>>, %arg10: memref<1x64xf32, #tpu.memory_space<vmem>>, %arg11: memref<1x256x64xf32, #tpu.memory_space<vmem>>, %arg12: memref<12x18x64xf32, #tpu.memory_space<vmem>>, %arg13: memref<10x18x64xf32, #tpu.memory_space<vmem>>, %arg14: memref<160x192xbf16, #tpu.memory_space<vmem>>, %arg15: memref<160x64xf32, #tpu.memory_space<vmem>>, %arg16: memref<1x64xf32, #tpu.memory_space<vmem>>) attributes {dimension_semantics = [#tpu.dimension_semantics<parallel>, #tpu.dimension_semantics<arbitrary>], iteration_bounds = array<i64: 2, 2>, scalar_prefetch = 0 : i64, scratch_operands = 5 : i64, tpu.core_type = #tpu.core_type<tc>, window_params = [{transform_indices = @transform_0, window_bounds = array<i64: 1, 256, 64>}, {pipeline_mode = #tpu.pipeline_mode<synchronous>, transform_indices = @transform_1, window_bounds = array<i64: 3, 192, 64>}, {pipeline_mode = #tpu.pipeline_mode<synchronous>, transform_indices = @transform_2, window_bounds = array<i64: 1, 64>}, {pipeline_mode = #tpu.pipeline_mode<synchronous>, transform_indices = @transform_3, window_bounds = array<i64: 3, 192, 64>}, {pipeline_mode = #tpu.pipeline_mode<synchronous>, transform_indices = @transform_4, window_bounds = array<i64: 1, 64>}, {pipeline_mode = #tpu.pipeline_mode<synchronous>, transform_indices = @transform_5, window_bounds = array<i64: 64, 4>}, {pipeline_mode = #tpu.pipeline_mode<synchronous>, transform_indices = @transform_6, window_bounds = array<i64: 1, 4>}, {pipeline_mode = #tpu.pipeline_mode<synchronous>, transform_indices = @transform_7, window_bounds = array<i64: 4, 64>}, {pipeline_mode = #tpu.pipeline_mode<synchronous>, transform_indices = @transform_8, window_bounds = array<i64: 1, 64>}, {transform_indices = @transform_9, window_bounds = array<i64: 1, 256, 64>}]} {
    %c8_i32 = arith.constant 8 : i32
    %0 = arith.muli %arg1, %c8_i32 : i32
    %c16_i32 = arith.constant 16 : i32
    %1 = arith.muli %0, %c16_i32 : i32
    %2 = tpu.assume_multiple %1, 128 : i32
    %cst = arith.constant 0.000000e+00 : f32
    %3 = vector.broadcast %cst : f32 to vector<12x1x64xf32>
    %c0 = arith.constant 0 : index
    %c0_0 = arith.constant 0 : index
    %c0_1 = arith.constant 0 : index
    %4 = vector.load %arg12[%c0, %c0_0, %c0_1] : memref<12x18x64xf32, #tpu.memory_space<vmem>>, vector<12x1x64xf32>
    tpu.vector_store %arg12[%c0, %c0_0, %c0_1], %3 {strides = array<i32>} : memref<12x18x64xf32, #tpu.memory_space<vmem>>, vector<12x1x64xf32>,
    %c0_2 = arith.constant 0 : index
    %c17 = arith.constant 17 : index
    %c0_3 = arith.constant 0 : index
    %5 = vector.load %arg12[%c0_2, %c17, %c0_3] : memref<12x18x64xf32, #tpu.memory_space<vmem>>, vector<12x1x64xf32>
    tpu.vector_store %arg12[%c0_2, %c17, %c0_3], %3 {strides = array<i32>} : memref<12x18x64xf32, #tpu.memory_space<vmem>>, vector<12x1x64xf32>,
    %c0_4 = arith.constant 0 : index
    %6 = arith.index_cast %2 : i32 to index
    %c0_5 = arith.constant 0 : index
    %7 = vector.load %arg2[%c0_4, %6, %c0_5] : memref<1x256x64xf32, #tpu.memory_space<vmem>>, vector<1x128x64xf32>
    %8 = vector.shape_cast %7 : vector<1x128x64xf32> to vector<128x64xf32>
    %9 = vector.shape_cast %8 : vector<128x64xf32> to vector<8x16x64xf32>
    %c2 = arith.constant 2 : index
    %c1 = arith.constant 1 : index
    %c0_6 = arith.constant 0 : index
    %10 = vector.load %arg12[%c2, %c1, %c0_6] : memref<12x18x64xf32, #tpu.memory_space<vmem>>, vector<8x16x64xf32>
    tpu.vector_store %arg12[%c2, %c1, %c0_6], %9 {strides = array<i32>} : memref<12x18x64xf32, #tpu.memory_space<vmem>>, vector<8x16x64xf32>,
    %c-2_i32 = arith.constant -2 : i32
    %11 = arith.addi %0, %c-2_i32 : i32
    %c0_i32 = arith.constant 0 : i32
    %12 = arith.cmpi sge, %11, %c0_i32 : i32
    %c16_i32_7 = arith.constant 16 : i32
    %13 = arith.cmpi slt, %11, %c16_i32_7 : i32
    %14 = arith.andi %12, %13 : i1
    %c0_i32_8 = arith.constant 0 : i32
    %c15_i32 = arith.constant 15 : i32
    %15 = arith.maxsi %c0_i32_8, %11 : i32
    %16 = arith.minsi %c15_i32, %15 : i32
    %c16_i32_9 = arith.constant 16 : i32
    %17 = arith.muli %16, %c16_i32_9 : i32
    %18 = tpu.assume_multiple %17, 16 : i32
    %c0_10 = arith.constant 0 : index
    %19 = arith.index_cast %18 : i32 to index
    %c0_11 = arith.constant 0 : index
    %20 = vector.load %arg2[%c0_10, %19, %c0_11] : memref<1x256x64xf32, #tpu.memory_space<vmem>>, vector<1x16x64xf32>
    %21 = vector.shape_cast %20 : vector<1x16x64xf32> to vector<16x64xf32>
    %cst_12 = arith.constant 0.000000e+00 : f32
    %22 = vector.broadcast %cst_12 : f32 to vector<16x64xf32>
    %23 = arith.select %14, %21, %22 : vector<16x64xf32>
    %c0_13 = arith.constant 0 : index
    %c1_14 = arith.constant 1 : index
    %c0_15 = arith.constant 0 : index
    %24 = vector.load %arg12[%c0_13, %c1_14, %c0_15] : memref<12x18x64xf32, #tpu.memory_space<vmem>>, vector<1x16x64xf32>
    %25 = vector.shape_cast %24 : vector<1x16x64xf32> to vector<16x64xf32>
    %26 = vector.shape_cast %23 : vector<16x64xf32> to vector<1x16x64xf32>
    tpu.vector_store %arg12[%c0_13, %c1_14, %c0_15], %26 {strides = array<i32>} : memref<12x18x64xf32, #tpu.memory_space<vmem>>, vector<1x16x64xf32>,
    %c-1_i32 = arith.constant -1 : i32
    %27 = arith.addi %0, %c-1_i32 : i32
    %c0_i32_16 = arith.constant 0 : i32
    %28 = arith.cmpi sge, %27, %c0_i32_16 : i32
    %c16_i32_17 = arith.constant 16 : i32
    %29 = arith.cmpi slt, %27, %c16_i32_17 : i32
    %30 = arith.andi %28, %29 : i1
    %c0_i32_18 = arith.constant 0 : i32
    %c15_i32_19 = arith.constant 15 : i32
    %31 = arith.maxsi %c0_i32_18, %27 : i32
    %32 = arith.minsi %c15_i32_19, %31 : i32
    %c16_i32_20 = arith.constant 16 : i32
    %33 = arith.muli %32, %c16_i32_20 : i32
    %34 = tpu.assume_multiple %33, 16 : i32
    %c0_21 = arith.constant 0 : index
    %35 = arith.index_cast %34 : i32 to index
    %c0_22 = arith.constant 0 : index
    %36 = vector.load %arg2[%c0_21, %35, %c0_22] : memref<1x256x64xf32, #tpu.memory_space<vmem>>, vector<1x16x64xf32>
    %37 = vector.shape_cast %36 : vector<1x16x64xf32> to vector<16x64xf32>
    %cst_23 = arith.constant 0.000000e+00 : f32
    %38 = vector.broadcast %cst_23 : f32 to vector<16x64xf32>
    %39 = arith.select %30, %37, %38 : vector<16x64xf32>
    %c1_24 = arith.constant 1 : index
    %c1_25 = arith.constant 1 : index
    %c0_26 = arith.constant 0 : index
    %40 = vector.load %arg12[%c1_24, %c1_25, %c0_26] : memref<12x18x64xf32, #tpu.memory_space<vmem>>, vector<1x16x64xf32>
    %41 = vector.shape_cast %40 : vector<1x16x64xf32> to vector<16x64xf32>
    %42 = vector.shape_cast %39 : vector<16x64xf32> to vector<1x16x64xf32>
    tpu.vector_store %arg12[%c1_24, %c1_25, %c0_26], %42 {strides = array<i32>} : memref<12x18x64xf32, #tpu.memory_space<vmem>>, vector<1x16x64xf32>,
    %c8_i32_27 = arith.constant 8 : i32
    %43 = arith.addi %0, %c8_i32_27 : i32
    %c0_i32_28 = arith.constant 0 : i32
    %44 = arith.cmpi sge, %43, %c0_i32_28 : i32
    %c16_i32_29 = arith.constant 16 : i32
    %45 = arith.cmpi slt, %43, %c16_i32_29 : i32
    %46 = arith.andi %44, %45 : i1
    %c0_i32_30 = arith.constant 0 : i32
    %c15_i32_31 = arith.constant 15 : i32
    %47 = arith.maxsi %c0_i32_30, %43 : i32
    %48 = arith.minsi %c15_i32_31, %47 : i32
    %c16_i32_32 = arith.constant 16 : i32
    %49 = arith.muli %48, %c16_i32_32 : i32
    %50 = tpu.assume_multiple %49, 16 : i32
    %c0_33 = arith.constant 0 : index
    %51 = arith.index_cast %50 : i32 to index
    %c0_34 = arith.constant 0 : index
    %52 = vector.load %arg2[%c0_33, %51, %c0_34] : memref<1x256x64xf32, #tpu.memory_space<vmem>>, vector<1x16x64xf32>
    %53 = vector.shape_cast %52 : vector<1x16x64xf32> to vector<16x64xf32>
    %cst_35 = arith.constant 0.000000e+00 : f32
    %54 = vector.broadcast %cst_35 : f32 to vector<16x64xf32>
    %55 = arith.select %46, %53, %54 : vector<16x64xf32>
    %c10 = arith.constant 10 : index
    %c1_36 = arith.constant 1 : index
    %c0_37 = arith.constant 0 : index
    %56 = vector.load %arg12[%c10, %c1_36, %c0_37] : memref<12x18x64xf32, #tpu.memory_space<vmem>>, vector<1x16x64xf32>
    %57 = vector.shape_cast %56 : vector<1x16x64xf32> to vector<16x64xf32>
    %58 = vector.shape_cast %55 : vector<16x64xf32> to vector<1x16x64xf32>
    tpu.vector_store %arg12[%c10, %c1_36, %c0_37], %58 {strides = array<i32>} : memref<12x18x64xf32, #tpu.memory_space<vmem>>, vector<1x16x64xf32>,
    %c9_i32 = arith.constant 9 : i32
    %59 = arith.addi %0, %c9_i32 : i32
    %c0_i32_38 = arith.constant 0 : i32
    %60 = arith.cmpi sge, %59, %c0_i32_38 : i32
    %c16_i32_39 = arith.constant 16 : i32
    %61 = arith.cmpi slt, %59, %c16_i32_39 : i32
    %62 = arith.andi %60, %61 : i1
    %c0_i32_40 = arith.constant 0 : i32
    %c15_i32_41 = arith.constant 15 : i32
    %63 = arith.maxsi %c0_i32_40, %59 : i32
    %64 = arith.minsi %c15_i32_41, %63 : i32
    %c16_i32_42 = arith.constant 16 : i32
    %65 = arith.muli %64, %c16_i32_42 : i32
    %66 = tpu.assume_multiple %65, 16 : i32
    %c0_43 = arith.constant 0 : index
    %67 = arith.index_cast %66 : i32 to index
    %c0_44 = arith.constant 0 : index
    %68 = vector.load %arg2[%c0_43, %67, %c0_44] : memref<1x256x64xf32, #tpu.memory_space<vmem>>, vector<1x16x64xf32>
    %69 = vector.shape_cast %68 : vector<1x16x64xf32> to vector<16x64xf32>
    %cst_45 = arith.constant 0.000000e+00 : f32
    %70 = vector.broadcast %cst_45 : f32 to vector<16x64xf32>
    %71 = arith.select %62, %69, %70 : vector<16x64xf32>
    %c11 = arith.constant 11 : index
    %c1_46 = arith.constant 1 : index
    %c0_47 = arith.constant 0 : index
    %72 = vector.load %arg12[%c11, %c1_46, %c0_47] : memref<12x18x64xf32, #tpu.memory_space<vmem>>, vector<1x16x64xf32>
    %73 = vector.shape_cast %72 : vector<1x16x64xf32> to vector<16x64xf32>
    %74 = vector.shape_cast %71 : vector<16x64xf32> to vector<1x16x64xf32>
    tpu.vector_store %arg12[%c11, %c1_46, %c0_47], %74 {strides = array<i32>} : memref<12x18x64xf32, #tpu.memory_space<vmem>>, vector<1x16x64xf32>,
    %c0_48 = arith.constant 0 : index
    %c0_49 = arith.constant 0 : index
    %c0_50 = arith.constant 0 : index
    %75 = vector.load %arg12[%c0_48, %c0_49, %c0_50] : memref<12x18x64xf32, #tpu.memory_space<vmem>>, vector<10x16x64xf32>
    %76 = vector.shape_cast %75 : vector<10x16x64xf32> to vector<160x64xf32>
    %77 = arith.truncf %76 : vector<160x64xf32> to vector<160x64xbf16>
    %c0_51 = arith.constant 0 : index
    %c0_52 = arith.constant 0 : index
    %78 = vector.load %arg14[%c0_51, %c0_52] : memref<160x192xbf16, #tpu.memory_space<vmem>>, vector<160x64xbf16>
    tpu.vector_store %arg14[%c0_51, %c0_52], %77 {strides = array<i32>} : memref<160x192xbf16, #tpu.memory_space<vmem>>, vector<160x64xbf16>,
    %c0_53 = arith.constant 0 : index
    %c1_54 = arith.constant 1 : index
    %c0_55 = arith.constant 0 : index
    %79 = vector.load %arg12[%c0_53, %c1_54, %c0_55] : memref<12x18x64xf32, #tpu.memory_space<vmem>>, vector<10x16x64xf32>
    %80 = vector.shape_cast %79 : vector<10x16x64xf32> to vector<160x64xf32>
    %81 = arith.truncf %80 : vector<160x64xf32> to vector<160x64xbf16>
    %c0_56 = arith.constant 0 : index
    %c64 = arith.constant 64 : index
    %82 = vector.load %arg14[%c0_56, %c64] : memref<160x192xbf16, #tpu.memory_space<vmem>>, vector<160x64xbf16>
    tpu.vector_store %arg14[%c0_56, %c64], %81 {strides = array<i32>} : memref<160x192xbf16, #tpu.memory_space<vmem>>, vector<160x64xbf16>,
    %c0_57 = arith.constant 0 : index
    %c2_58 = arith.constant 2 : index
    %c0_59 = arith.constant 0 : index
    %83 = vector.load %arg12[%c0_57, %c2_58, %c0_59] : memref<12x18x64xf32, #tpu.memory_space<vmem>>, vector<10x16x64xf32>
    %84 = vector.shape_cast %83 : vector<10x16x64xf32> to vector<160x64xf32>
    %85 = arith.truncf %84 : vector<160x64xf32> to vector<160x64xbf16>
    %c0_60 = arith.constant 0 : index
    %c128 = arith.constant 128 : index
    %86 = vector.load %arg14[%c0_60, %c128] : memref<160x192xbf16, #tpu.memory_space<vmem>>, vector<160x64xbf16>
    tpu.vector_store %arg14[%c0_60, %c128], %85 {strides = array<i32>} : memref<160x192xbf16, #tpu.memory_space<vmem>>, vector<160x64xbf16>,
    %c0_61 = arith.constant 0 : index
    %c0_62 = arith.constant 0 : index
    %87 = vector.load %arg14[%c0_61, %c0_62] : memref<160x192xbf16, #tpu.memory_space<vmem>>, vector<160x192xbf16>
    %c0_63 = arith.constant 0 : index
    %c0_64 = arith.constant 0 : index
    %c0_65 = arith.constant 0 : index
    %88 = vector.load %arg3[%c0_63, %c0_64, %c0_65] : memref<3x192x64xbf16, #tpu.memory_space<vmem>>, vector<1x192x64xbf16>
    %89 = vector.shape_cast %88 : vector<1x192x64xbf16> to vector<192x64xbf16>
    %cst_66 = arith.constant dense<0.000000e+00> : vector<160x64xf32>
    %90 = tpu.matmul %87, %89, %cst_66 {dimension_numbers = #tpu.dot_dimension_numbers<[1], [0], [0], [1], [0, 0, 1, 1], [], []>} : vector<160x192xbf16>, vector<192x64xbf16>, vector<160x64xf32> -> vector<160x64xf32>
    %c0_67 = arith.constant 0 : index
    %c0_68 = arith.constant 0 : index
    %91 = vector.load %arg15[%c0_67, %c0_68] : memref<160x64xf32, #tpu.memory_space<vmem>>, vector<160x64xf32>
    tpu.vector_store %arg15[%c0_67, %c0_68], %90 {strides = array<i32>} : memref<160x64xf32, #tpu.memory_space<vmem>>, vector<160x64xf32>,
    %c1_69 = arith.constant 1 : index
    %c0_70 = arith.constant 0 : index
    %c0_71 = arith.constant 0 : index
    %92 = vector.load %arg12[%c1_69, %c0_70, %c0_71] : memref<12x18x64xf32, #tpu.memory_space<vmem>>, vector<10x16x64xf32>
    %93 = vector.shape_cast %92 : vector<10x16x64xf32> to vector<160x64xf32>
    %94 = arith.truncf %93 : vector<160x64xf32> to vector<160x64xbf16>
    %c0_72 = arith.constant 0 : index
    %c0_73 = arith.constant 0 : index
    %95 = vector.load %arg14[%c0_72, %c0_73] : memref<160x192xbf16, #tpu.memory_space<vmem>>, vector<160x64xbf16>
    tpu.vector_store %arg14[%c0_72, %c0_73], %94 {strides = array<i32>} : memref<160x192xbf16, #tpu.memory_space<vmem>>, vector<160x64xbf16>,
    %c1_74 = arith.constant 1 : index
    %c1_75 = arith.constant 1 : index
    %c0_76 = arith.constant 0 : index
    %96 = vector.load %arg12[%c1_74, %c1_75, %c0_76] : memref<12x18x64xf32, #tpu.memory_space<vmem>>, vector<10x16x64xf32>
    %97 = vector.shape_cast %96 : vector<10x16x64xf32> to vector<160x64xf32>
    %98 = arith.truncf %97 : vector<160x64xf32> to vector<160x64xbf16>
    %c0_77 = arith.constant 0 : index
    %c64_78 = arith.constant 64 : index
    %99 = vector.load %arg14[%c0_77, %c64_78] : memref<160x192xbf16, #tpu.memory_space<vmem>>, vector<160x64xbf16>
    tpu.vector_store %arg14[%c0_77, %c64_78], %98 {strides = array<i32>} : memref<160x192xbf16, #tpu.memory_space<vmem>>, vector<160x64xbf16>,
    %c1_79 = arith.constant 1 : index
    %c2_80 = arith.constant 2 : index
    %c0_81 = arith.constant 0 : index
    %100 = vector.load %arg12[%c1_79, %c2_80, %c0_81] : memref<12x18x64xf32, #tpu.memory_space<vmem>>, vector<10x16x64xf32>
    %101 = vector.shape_cast %100 : vector<10x16x64xf32> to vector<160x64xf32>
    %102 = arith.truncf %101 : vector<160x64xf32> to vector<160x64xbf16>
    %c0_82 = arith.constant 0 : index
    %c128_83 = arith.constant 128 : index
    %103 = vector.load %arg14[%c0_82, %c128_83] : memref<160x192xbf16, #tpu.memory_space<vmem>>, vector<160x64xbf16>
    tpu.vector_store %arg14[%c0_82, %c128_83], %102 {strides = array<i32>} : memref<160x192xbf16, #tpu.memory_space<vmem>>, vector<160x64xbf16>,
    %c0_84 = arith.constant 0 : index
    %c0_85 = arith.constant 0 : index
    %104 = vector.load %arg14[%c0_84, %c0_85] : memref<160x192xbf16, #tpu.memory_space<vmem>>, vector<160x192xbf16>
    %c1_86 = arith.constant 1 : index
    %c0_87 = arith.constant 0 : index
    %c0_88 = arith.constant 0 : index
    %105 = vector.load %arg3[%c1_86, %c0_87, %c0_88] : memref<3x192x64xbf16, #tpu.memory_space<vmem>>, vector<1x192x64xbf16>
    %106 = vector.shape_cast %105 : vector<1x192x64xbf16> to vector<192x64xbf16>
    %cst_89 = arith.constant dense<0.000000e+00> : vector<160x64xf32>
    %107 = tpu.matmul %104, %106, %cst_89 {dimension_numbers = #tpu.dot_dimension_numbers<[1], [0], [0], [1], [0, 0, 1, 1], [], []>} : vector<160x192xbf16>, vector<192x64xbf16>, vector<160x64xf32> -> vector<160x64xf32>
    %c0_90 = arith.constant 0 : index
    %c0_91 = arith.constant 0 : index
    %108 = vector.load %arg15[%c0_90, %c0_91] : memref<160x64xf32, #tpu.memory_space<vmem>>, vector<160x64xf32>
    %109 = arith.addf %108, %107 : vector<160x64xf32>
    %c0_92 = arith.constant 0 : index
    %c0_93 = arith.constant 0 : index
    %110 = vector.load %arg15[%c0_92, %c0_93] : memref<160x64xf32, #tpu.memory_space<vmem>>, vector<160x64xf32>
    tpu.vector_store %arg15[%c0_92, %c0_93], %109 {strides = array<i32>} : memref<160x64xf32, #tpu.memory_space<vmem>>, vector<160x64xf32>,
    %c2_94 = arith.constant 2 : index
    %c0_95 = arith.constant 0 : index
    %c0_96 = arith.constant 0 : index
    %111 = vector.load %arg12[%c2_94, %c0_95, %c0_96] : memref<12x18x64xf32, #tpu.memory_space<vmem>>, vector<10x16x64xf32>
    %112 = vector.shape_cast %111 : vector<10x16x64xf32> to vector<160x64xf32>
    %113 = arith.truncf %112 : vector<160x64xf32> to vector<160x64xbf16>
    %c0_97 = arith.constant 0 : index
    %c0_98 = arith.constant 0 : index
    %114 = vector.load %arg14[%c0_97, %c0_98] : memref<160x192xbf16, #tpu.memory_space<vmem>>, vector<160x64xbf16>
    tpu.vector_store %arg14[%c0_97, %c0_98], %113 {strides = array<i32>} : memref<160x192xbf16, #tpu.memory_space<vmem>>, vector<160x64xbf16>,
    %c2_99 = arith.constant 2 : index
    %c1_100 = arith.constant 1 : index
    %c0_101 = arith.constant 0 : index
    %115 = vector.load %arg12[%c2_99, %c1_100, %c0_101] : memref<12x18x64xf32, #tpu.memory_space<vmem>>, vector<10x16x64xf32>
    %116 = vector.shape_cast %115 : vector<10x16x64xf32> to vector<160x64xf32>
    %117 = arith.truncf %116 : vector<160x64xf32> to vector<160x64xbf16>
    %c0_102 = arith.constant 0 : index
    %c64_103 = arith.constant 64 : index
    %118 = vector.load %arg14[%c0_102, %c64_103] : memref<160x192xbf16, #tpu.memory_space<vmem>>, vector<160x64xbf16>
    tpu.vector_store %arg14[%c0_102, %c64_103], %117 {strides = array<i32>} : memref<160x192xbf16, #tpu.memory_space<vmem>>, vector<160x64xbf16>,
    %c2_104 = arith.constant 2 : index
    %c2_105 = arith.constant 2 : index
    %c0_106 = arith.constant 0 : index
    %119 = vector.load %arg12[%c2_104, %c2_105, %c0_106] : memref<12x18x64xf32, #tpu.memory_space<vmem>>, vector<10x16x64xf32>
    %120 = vector.shape_cast %119 : vector<10x16x64xf32> to vector<160x64xf32>
    %121 = arith.truncf %120 : vector<160x64xf32> to vector<160x64xbf16>
    %c0_107 = arith.constant 0 : index
    %c128_108 = arith.constant 128 : index
    %122 = vector.load %arg14[%c0_107, %c128_108] : memref<160x192xbf16, #tpu.memory_space<vmem>>, vector<160x64xbf16>
    tpu.vector_store %arg14[%c0_107, %c128_108], %121 {strides = array<i32>} : memref<160x192xbf16, #tpu.memory_space<vmem>>, vector<160x64xbf16>,
    %c0_109 = arith.constant 0 : index
    %c0_110 = arith.constant 0 : index
    %123 = vector.load %arg14[%c0_109, %c0_110] : memref<160x192xbf16, #tpu.memory_space<vmem>>, vector<160x192xbf16>
    %c2_111 = arith.constant 2 : index
    %c0_112 = arith.constant 0 : index
    %c0_113 = arith.constant 0 : index
    %124 = vector.load %arg3[%c2_111, %c0_112, %c0_113] : memref<3x192x64xbf16, #tpu.memory_space<vmem>>, vector<1x192x64xbf16>
    %125 = vector.shape_cast %124 : vector<1x192x64xbf16> to vector<192x64xbf16>
    %cst_114 = arith.constant dense<0.000000e+00> : vector<160x64xf32>
    %126 = tpu.matmul %123, %125, %cst_114 {dimension_numbers = #tpu.dot_dimension_numbers<[1], [0], [0], [1], [0, 0, 1, 1], [], []>} : vector<160x192xbf16>, vector<192x64xbf16>, vector<160x64xf32> -> vector<160x64xf32>
    %c0_115 = arith.constant 0 : index
    %c0_116 = arith.constant 0 : index
    %127 = vector.load %arg15[%c0_115, %c0_116] : memref<160x64xf32, #tpu.memory_space<vmem>>, vector<160x64xf32>
    %128 = arith.addf %127, %126 : vector<160x64xf32>
    %c0_117 = arith.constant 0 : index
    %c0_118 = arith.constant 0 : index
    %129 = vector.load %arg15[%c0_117, %c0_118] : memref<160x64xf32, #tpu.memory_space<vmem>>, vector<160x64xf32>
    tpu.vector_store %arg15[%c0_117, %c0_118], %128 {strides = array<i32>} : memref<160x64xf32, #tpu.memory_space<vmem>>, vector<160x64xf32>,
    %c0_119 = arith.constant 0 : index
    %c0_120 = arith.constant 0 : index
    %130 = vector.load %arg15[%c0_119, %c0_120] : memref<160x64xf32, #tpu.memory_space<vmem>>, vector<160x64xf32>
    %c0_121 = arith.constant 0 : index
    %c0_122 = arith.constant 0 : index
    %131 = vector.load %arg4[%c0_121, %c0_122] : memref<1x64xf32, #tpu.memory_space<vmem>>, vector<1x64xf32>
    %132 = vector.broadcast %131 : vector<1x64xf32> to vector<160x64xf32>
    %133 = arith.addf %130, %132 : vector<160x64xf32>
    %cst_123 = arith.constant 0.000000e+00 : f32
    %134 = vector.broadcast %cst_123 : f32 to vector<160x64xf32>
    %135 = arith.maximumf %133, %134 : vector<160x64xf32>
    %136 = vector.shape_cast %135 : vector<160x64xf32> to vector<10x16x64xf32>
    %c0_124 = arith.constant 0 : index
    %c1_125 = arith.constant 1 : index
    %c0_126 = arith.constant 0 : index
    %137 = vector.load %arg13[%c0_124, %c1_125, %c0_126] : memref<10x18x64xf32, #tpu.memory_space<vmem>>, vector<10x16x64xf32>
    tpu.vector_store %arg13[%c0_124, %c1_125, %c0_126], %136 {strides = array<i32>} : memref<10x18x64xf32, #tpu.memory_space<vmem>>, vector<10x16x64xf32>,
    %cst_127 = arith.constant 0.000000e+00 : f32
    %138 = vector.broadcast %cst_127 : f32 to vector<10x1x64xf32>
    %c0_128 = arith.constant 0 : index
    %c0_129 = arith.constant 0 : index
    %c0_130 = arith.constant 0 : index
    %139 = vector.load %arg13[%c0_128, %c0_129, %c0_130] : memref<10x18x64xf32, #tpu.memory_space<vmem>>, vector<10x1x64xf32>
    tpu.vector_store %arg13[%c0_128, %c0_129, %c0_130], %138 {strides = array<i32>} : memref<10x18x64xf32, #tpu.memory_space<vmem>>, vector<10x1x64xf32>,
    %c0_131 = arith.constant 0 : index
    %c17_132 = arith.constant 17 : index
    %c0_133 = arith.constant 0 : index
    %140 = vector.load %arg13[%c0_131, %c17_132, %c0_133] : memref<10x18x64xf32, #tpu.memory_space<vmem>>, vector<10x1x64xf32>
    tpu.vector_store %arg13[%c0_131, %c17_132, %c0_133], %138 {strides = array<i32>} : memref<10x18x64xf32, #tpu.memory_space<vmem>>, vector<10x1x64xf32>,
    %c0_i32_134 = arith.constant 0 : i32
    %141 = arith.cmpi eq, %0, %c0_i32_134 : i32
    %142 = arith.extui %141 : i1 to i32
    %c0_i32_135 = arith.constant 0 : i32
    %143 = arith.cmpi ne, %142, %c0_i32_135 : i32
    scf.if %143 {
      %cst_226 = arith.constant 0.000000e+00 : f32
      %222 = vector.broadcast %cst_226 : f32 to vector<18x64xf32>
      %c0_227 = arith.constant 0 : index
      %c0_228 = arith.constant 0 : index
      %c0_229 = arith.constant 0 : index
      %223 = vector.load %arg13[%c0_227, %c0_228, %c0_229] : memref<10x18x64xf32, #tpu.memory_space<vmem>>, vector<1x18x64xf32>
      %224 = vector.shape_cast %223 : vector<1x18x64xf32> to vector<18x64xf32>
      %225 = vector.shape_cast %222 : vector<18x64xf32> to vector<1x18x64xf32>
      tpu.vector_store %arg13[%c0_227, %c0_228, %c0_229], %225 {strides = array<i32>} : memref<10x18x64xf32, #tpu.memory_space<vmem>>, vector<1x18x64xf32>,
    } else {
    }
    %c8_i32_136 = arith.constant 8 : i32
    %144 = arith.addi %0, %c8_i32_136 : i32
    %c16_i32_137 = arith.constant 16 : i32
    %145 = arith.cmpi eq, %144, %c16_i32_137 : i32
    %146 = arith.extui %145 : i1 to i32
    %c0_i32_138 = arith.constant 0 : i32
    %147 = arith.cmpi ne, %146, %c0_i32_138 : i32
    scf.if %147 {
      %cst_226 = arith.constant 0.000000e+00 : f32
      %222 = vector.broadcast %cst_226 : f32 to vector<18x64xf32>
      %c9 = arith.constant 9 : index
      %c0_227 = arith.constant 0 : index
      %c0_228 = arith.constant 0 : index
      %223 = vector.load %arg13[%c9, %c0_227, %c0_228] : memref<10x18x64xf32, #tpu.memory_space<vmem>>, vector<1x18x64xf32>
      %224 = vector.shape_cast %223 : vector<1x18x64xf32> to vector<18x64xf32>
      %225 = vector.shape_cast %222 : vector<18x64xf32> to vector<1x18x64xf32>
      tpu.vector_store %arg13[%c9, %c0_227, %c0_228], %225 {strides = array<i32>} : memref<10x18x64xf32, #tpu.memory_space<vmem>>, vector<1x18x64xf32>,
    } else {
    }
    %c0_139 = arith.constant 0 : index
    %c0_140 = arith.constant 0 : index
    %c0_141 = arith.constant 0 : index
    %148 = vector.load %arg13[%c0_139, %c0_140, %c0_141] : memref<10x18x64xf32, #tpu.memory_space<vmem>>, vector<8x16x64xf32>
    %149 = vector.shape_cast %148 : vector<8x16x64xf32> to vector<128x64xf32>
    %150 = arith.truncf %149 : vector<128x64xf32> to vector<128x64xbf16>
    %c0_142 = arith.constant 0 : index
    %c0_143 = arith.constant 0 : index
    %151 = vector.load %arg14[%c0_142, %c0_143] : memref<160x192xbf16, #tpu.memory_space<vmem>>, vector<128x64xbf16>
    tpu.vector_store %arg14[%c0_142, %c0_143], %150 {strides = array<i32>} : memref<160x192xbf16, #tpu.memory_space<vmem>>, vector<128x64xbf16>,
    %c0_144 = arith.constant 0 : index
    %c1_145 = arith.constant 1 : index
    %c0_146 = arith.constant 0 : index
    %152 = vector.load %arg13[%c0_144, %c1_145, %c0_146] : memref<10x18x64xf32, #tpu.memory_space<vmem>>, vector<8x16x64xf32>
    %153 = vector.shape_cast %152 : vector<8x16x64xf32> to vector<128x64xf32>
    %154 = arith.truncf %153 : vector<128x64xf32> to vector<128x64xbf16>
    %c0_147 = arith.constant 0 : index
    %c64_148 = arith.constant 64 : index
    %155 = vector.load %arg14[%c0_147, %c64_148] : memref<160x192xbf16, #tpu.memory_space<vmem>>, vector<128x64xbf16>
    tpu.vector_store %arg14[%c0_147, %c64_148], %154 {strides = array<i32>} : memref<160x192xbf16, #tpu.memory_space<vmem>>, vector<128x64xbf16>,
    %c0_149 = arith.constant 0 : index
    %c2_150 = arith.constant 2 : index
    %c0_151 = arith.constant 0 : index
    %156 = vector.load %arg13[%c0_149, %c2_150, %c0_151] : memref<10x18x64xf32, #tpu.memory_space<vmem>>, vector<8x16x64xf32>
    %157 = vector.shape_cast %156 : vector<8x16x64xf32> to vector<128x64xf32>
    %158 = arith.truncf %157 : vector<128x64xf32> to vector<128x64xbf16>
    %c0_152 = arith.constant 0 : index
    %c128_153 = arith.constant 128 : index
    %159 = vector.load %arg14[%c0_152, %c128_153] : memref<160x192xbf16, #tpu.memory_space<vmem>>, vector<128x64xbf16>
    tpu.vector_store %arg14[%c0_152, %c128_153], %158 {strides = array<i32>} : memref<160x192xbf16, #tpu.memory_space<vmem>>, vector<128x64xbf16>,
    %c0_154 = arith.constant 0 : index
    %c0_155 = arith.constant 0 : index
    %160 = vector.load %arg14[%c0_154, %c0_155] : memref<160x192xbf16, #tpu.memory_space<vmem>>, vector<128x192xbf16>
    %c0_156 = arith.constant 0 : index
    %c0_157 = arith.constant 0 : index
    %c0_158 = arith.constant 0 : index
    %161 = vector.load %arg5[%c0_156, %c0_157, %c0_158] : memref<3x192x64xbf16, #tpu.memory_space<vmem>>, vector<1x192x64xbf16>
    %162 = vector.shape_cast %161 : vector<1x192x64xbf16> to vector<192x64xbf16>
    %cst_159 = arith.constant dense<0.000000e+00> : vector<128x64xf32>
    %163 = tpu.matmul %160, %162, %cst_159 {dimension_numbers = #tpu.dot_dimension_numbers<[1], [0], [0], [1], [0, 0, 1, 1], [], []>} : vector<128x192xbf16>, vector<192x64xbf16>, vector<128x64xf32> -> vector<128x64xf32>
    %c0_160 = arith.constant 0 : index
    %c0_161 = arith.constant 0 : index
    %164 = vector.load %arg15[%c0_160, %c0_161] : memref<160x64xf32, #tpu.memory_space<vmem>>, vector<128x64xf32>
    tpu.vector_store %arg15[%c0_160, %c0_161], %163 {strides = array<i32>} : memref<160x64xf32, #tpu.memory_space<vmem>>, vector<128x64xf32>,
    %c1_162 = arith.constant 1 : index
    %c0_163 = arith.constant 0 : index
    %c0_164 = arith.constant 0 : index
    %165 = vector.load %arg13[%c1_162, %c0_163, %c0_164] : memref<10x18x64xf32, #tpu.memory_space<vmem>>, vector<8x16x64xf32>
    %166 = vector.shape_cast %165 : vector<8x16x64xf32> to vector<128x64xf32>
    %167 = arith.truncf %166 : vector<128x64xf32> to vector<128x64xbf16>
    %c0_165 = arith.constant 0 : index
    %c0_166 = arith.constant 0 : index
    %168 = vector.load %arg14[%c0_165, %c0_166] : memref<160x192xbf16, #tpu.memory_space<vmem>>, vector<128x64xbf16>
    tpu.vector_store %arg14[%c0_165, %c0_166], %167 {strides = array<i32>} : memref<160x192xbf16, #tpu.memory_space<vmem>>, vector<128x64xbf16>,
    %c1_167 = arith.constant 1 : index
    %c1_168 = arith.constant 1 : index
    %c0_169 = arith.constant 0 : index
    %169 = vector.load %arg13[%c1_167, %c1_168, %c0_169] : memref<10x18x64xf32, #tpu.memory_space<vmem>>, vector<8x16x64xf32>
    %170 = vector.shape_cast %169 : vector<8x16x64xf32> to vector<128x64xf32>
    %171 = arith.truncf %170 : vector<128x64xf32> to vector<128x64xbf16>
    %c0_170 = arith.constant 0 : index
    %c64_171 = arith.constant 64 : index
    %172 = vector.load %arg14[%c0_170, %c64_171] : memref<160x192xbf16, #tpu.memory_space<vmem>>, vector<128x64xbf16>
    tpu.vector_store %arg14[%c0_170, %c64_171], %171 {strides = array<i32>} : memref<160x192xbf16, #tpu.memory_space<vmem>>, vector<128x64xbf16>,
    %c1_172 = arith.constant 1 : index
    %c2_173 = arith.constant 2 : index
    %c0_174 = arith.constant 0 : index
    %173 = vector.load %arg13[%c1_172, %c2_173, %c0_174] : memref<10x18x64xf32, #tpu.memory_space<vmem>>, vector<8x16x64xf32>
    %174 = vector.shape_cast %173 : vector<8x16x64xf32> to vector<128x64xf32>
    %175 = arith.truncf %174 : vector<128x64xf32> to vector<128x64xbf16>
    %c0_175 = arith.constant 0 : index
    %c128_176 = arith.constant 128 : index
    %176 = vector.load %arg14[%c0_175, %c128_176] : memref<160x192xbf16, #tpu.memory_space<vmem>>, vector<128x64xbf16>
    tpu.vector_store %arg14[%c0_175, %c128_176], %175 {strides = array<i32>} : memref<160x192xbf16, #tpu.memory_space<vmem>>, vector<128x64xbf16>,
    %c0_177 = arith.constant 0 : index
    %c0_178 = arith.constant 0 : index
    %177 = vector.load %arg14[%c0_177, %c0_178] : memref<160x192xbf16, #tpu.memory_space<vmem>>, vector<128x192xbf16>
    %c1_179 = arith.constant 1 : index
    %c0_180 = arith.constant 0 : index
    %c0_181 = arith.constant 0 : index
    %178 = vector.load %arg5[%c1_179, %c0_180, %c0_181] : memref<3x192x64xbf16, #tpu.memory_space<vmem>>, vector<1x192x64xbf16>
    %179 = vector.shape_cast %178 : vector<1x192x64xbf16> to vector<192x64xbf16>
    %cst_182 = arith.constant dense<0.000000e+00> : vector<128x64xf32>
    %180 = tpu.matmul %177, %179, %cst_182 {dimension_numbers = #tpu.dot_dimension_numbers<[1], [0], [0], [1], [0, 0, 1, 1], [], []>} : vector<128x192xbf16>, vector<192x64xbf16>, vector<128x64xf32> -> vector<128x64xf32>
    %c0_183 = arith.constant 0 : index
    %c0_184 = arith.constant 0 : index
    %181 = vector.load %arg15[%c0_183, %c0_184] : memref<160x64xf32, #tpu.memory_space<vmem>>, vector<128x64xf32>
    %182 = arith.addf %181, %180 : vector<128x64xf32>
    %c0_185 = arith.constant 0 : index
    %c0_186 = arith.constant 0 : index
    %183 = vector.load %arg15[%c0_185, %c0_186] : memref<160x64xf32, #tpu.memory_space<vmem>>, vector<128x64xf32>
    tpu.vector_store %arg15[%c0_185, %c0_186], %182 {strides = array<i32>} : memref<160x64xf32, #tpu.memory_space<vmem>>, vector<128x64xf32>,
    %c2_187 = arith.constant 2 : index
    %c0_188 = arith.constant 0 : index
    %c0_189 = arith.constant 0 : index
    %184 = vector.load %arg13[%c2_187, %c0_188, %c0_189] : memref<10x18x64xf32, #tpu.memory_space<vmem>>, vector<8x16x64xf32>
    %185 = vector.shape_cast %184 : vector<8x16x64xf32> to vector<128x64xf32>
    %186 = arith.truncf %185 : vector<128x64xf32> to vector<128x64xbf16>
    %c0_190 = arith.constant 0 : index
    %c0_191 = arith.constant 0 : index
    %187 = vector.load %arg14[%c0_190, %c0_191] : memref<160x192xbf16, #tpu.memory_space<vmem>>, vector<128x64xbf16>
    tpu.vector_store %arg14[%c0_190, %c0_191], %186 {strides = array<i32>} : memref<160x192xbf16, #tpu.memory_space<vmem>>, vector<128x64xbf16>,
    %c2_192 = arith.constant 2 : index
    %c1_193 = arith.constant 1 : index
    %c0_194 = arith.constant 0 : index
    %188 = vector.load %arg13[%c2_192, %c1_193, %c0_194] : memref<10x18x64xf32, #tpu.memory_space<vmem>>, vector<8x16x64xf32>
    %189 = vector.shape_cast %188 : vector<8x16x64xf32> to vector<128x64xf32>
    %190 = arith.truncf %189 : vector<128x64xf32> to vector<128x64xbf16>
    %c0_195 = arith.constant 0 : index
    %c64_196 = arith.constant 64 : index
    %191 = vector.load %arg14[%c0_195, %c64_196] : memref<160x192xbf16, #tpu.memory_space<vmem>>, vector<128x64xbf16>
    tpu.vector_store %arg14[%c0_195, %c64_196], %190 {strides = array<i32>} : memref<160x192xbf16, #tpu.memory_space<vmem>>, vector<128x64xbf16>,
    %c2_197 = arith.constant 2 : index
    %c2_198 = arith.constant 2 : index
    %c0_199 = arith.constant 0 : index
    %192 = vector.load %arg13[%c2_197, %c2_198, %c0_199] : memref<10x18x64xf32, #tpu.memory_space<vmem>>, vector<8x16x64xf32>
    %193 = vector.shape_cast %192 : vector<8x16x64xf32> to vector<128x64xf32>
    %194 = arith.truncf %193 : vector<128x64xf32> to vector<128x64xbf16>
    %c0_200 = arith.constant 0 : index
    %c128_201 = arith.constant 128 : index
    %195 = vector.load %arg14[%c0_200, %c128_201] : memref<160x192xbf16, #tpu.memory_space<vmem>>, vector<128x64xbf16>
    tpu.vector_store %arg14[%c0_200, %c128_201], %194 {strides = array<i32>} : memref<160x192xbf16, #tpu.memory_space<vmem>>, vector<128x64xbf16>,
    %c0_202 = arith.constant 0 : index
    %c0_203 = arith.constant 0 : index
    %196 = vector.load %arg14[%c0_202, %c0_203] : memref<160x192xbf16, #tpu.memory_space<vmem>>, vector<128x192xbf16>
    %c2_204 = arith.constant 2 : index
    %c0_205 = arith.constant 0 : index
    %c0_206 = arith.constant 0 : index
    %197 = vector.load %arg5[%c2_204, %c0_205, %c0_206] : memref<3x192x64xbf16, #tpu.memory_space<vmem>>, vector<1x192x64xbf16>
    %198 = vector.shape_cast %197 : vector<1x192x64xbf16> to vector<192x64xbf16>
    %cst_207 = arith.constant dense<0.000000e+00> : vector<128x64xf32>
    %199 = tpu.matmul %196, %198, %cst_207 {dimension_numbers = #tpu.dot_dimension_numbers<[1], [0], [0], [1], [0, 0, 1, 1], [], []>} : vector<128x192xbf16>, vector<192x64xbf16>, vector<128x64xf32> -> vector<128x64xf32>
    %c0_208 = arith.constant 0 : index
    %c0_209 = arith.constant 0 : index
    %200 = vector.load %arg15[%c0_208, %c0_209] : memref<160x64xf32, #tpu.memory_space<vmem>>, vector<128x64xf32>
    %201 = arith.addf %200, %199 : vector<128x64xf32>
    %c0_210 = arith.constant 0 : index
    %c0_211 = arith.constant 0 : index
    %202 = vector.load %arg15[%c0_210, %c0_211] : memref<160x64xf32, #tpu.memory_space<vmem>>, vector<128x64xf32>
    tpu.vector_store %arg15[%c0_210, %c0_211], %201 {strides = array<i32>} : memref<160x64xf32, #tpu.memory_space<vmem>>, vector<128x64xf32>,
    %c0_212 = arith.constant 0 : index
    %c0_213 = arith.constant 0 : index
    %203 = vector.load %arg15[%c0_212, %c0_213] : memref<160x64xf32, #tpu.memory_space<vmem>>, vector<128x64xf32>
    %c0_214 = arith.constant 0 : index
    %c0_215 = arith.constant 0 : index
    %204 = vector.load %arg6[%c0_214, %c0_215] : memref<1x64xf32, #tpu.memory_space<vmem>>, vector<1x64xf32>
    %205 = vector.broadcast %204 : vector<1x64xf32> to vector<128x64xf32>
    %206 = arith.addf %203, %205 : vector<128x64xf32>
    %c0_216 = arith.constant 0 : index
    %207 = arith.index_cast %2 : i32 to index
    %c0_217 = arith.constant 0 : index
    %208 = vector.load %arg11[%c0_216, %207, %c0_217] : memref<1x256x64xf32, #tpu.memory_space<vmem>>, vector<1x128x64xf32>
    %209 = vector.shape_cast %208 : vector<1x128x64xf32> to vector<128x64xf32>
    %210 = vector.shape_cast %206 : vector<128x64xf32> to vector<1x128x64xf32>
    tpu.vector_store %arg11[%c0_216, %207, %c0_217], %210 {strides = array<i32>} : memref<1x256x64xf32, #tpu.memory_space<vmem>>, vector<1x128x64xf32>,
    %c0_i32_218 = arith.constant 0 : i32
    %211 = arith.cmpi eq, %arg1, %c0_i32_218 : i32
    %212 = arith.extui %211 : i1 to i32
    %c0_i32_219 = arith.constant 0 : i32
    %213 = arith.cmpi ne, %212, %c0_i32_219 : i32
    scf.if %213 {
      %cst_226 = arith.constant 0.000000e+00 : f32
      %222 = vector.broadcast %cst_226 : f32 to vector<1x64xf32>
      %c0_227 = arith.constant 0 : index
      %c0_228 = arith.constant 0 : index
      %223 = vector.load %arg16[%c0_227, %c0_228] : memref<1x64xf32, #tpu.memory_space<vmem>>, vector<1x64xf32>
      tpu.vector_store %arg16[%c0_227, %c0_228], %222 {strides = array<i32>} : memref<1x64xf32, #tpu.memory_space<vmem>>, vector<1x64xf32>,
    } else {
    }
    %c0_220 = arith.constant 0 : index
    %c0_221 = arith.constant 0 : index
    %214 = vector.load %arg16[%c0_220, %c0_221] : memref<1x64xf32, #tpu.memory_space<vmem>>, vector<1x64xf32>
    %cst_222 = arith.constant dense<0.000000e+00> : vector<64xf32>
    %215 = vector.multi_reduction <add>, %206, %cst_222 [0] : vector<128x64xf32> to vector<64xf32>
    %216 = vector.shape_cast %215 : vector<64xf32> to vector<1x64xf32>
    %217 = arith.addf %214, %216 : vector<1x64xf32>
    %c0_223 = arith.constant 0 : index
    %c0_224 = arith.constant 0 : index
    %218 = vector.load %arg16[%c0_223, %c0_224] : memref<1x64xf32, #tpu.memory_space<vmem>>, vector<1x64xf32>
    tpu.vector_store %arg16[%c0_223, %c0_224], %217 {strides = array<i32>} : memref<1x64xf32, #tpu.memory_space<vmem>>, vector<1x64xf32>,
    %c1_i32 = arith.constant 1 : i32
    %219 = arith.cmpi eq, %arg1, %c1_i32 : i32
    %220 = arith.extui %219 : i1 to i32
    %c0_i32_225 = arith.constant 0 : i32
    %221 = arith.cmpi ne, %220, %c0_i32_225 : i32
    scf.if %221 {
      %c0_226 = arith.constant 0 : index
      %c0_227 = arith.constant 0 : index
      %222 = vector.load %arg16[%c0_226, %c0_227] : memref<1x64xf32, #tpu.memory_space<vmem>>, vector<1x64xf32>
      %cst_228 = arith.constant 3.906250e-03 : f32
      %223 = vector.broadcast %cst_228 : f32 to vector<1x64xf32>
      %224 = arith.mulf %222, %223 : vector<1x64xf32>
      %c0_229 = arith.constant 0 : index
      %c0_230 = arith.constant 0 : index
      %225 = vector.load %arg7[%c0_229, %c0_230] : memref<64x4xf32, #tpu.memory_space<vmem>>, vector<64x4xf32>
      %cst_231 = arith.constant dense<0.000000e+00> : vector<1x4xf32>
      %226 = tpu.matmul %224, %225, %cst_231 {dimension_numbers = #tpu.dot_dimension_numbers<[1], [0], [0], [1], [0, 0, 1, 1], [], []>} : vector<1x64xf32>, vector<64x4xf32>, vector<1x4xf32> -> vector<1x4xf32>
      %c0_232 = arith.constant 0 : index
      %c0_233 = arith.constant 0 : index
      %227 = vector.load %arg8[%c0_232, %c0_233] : memref<1x4xf32, #tpu.memory_space<vmem>>, vector<1x4xf32>
      %228 = arith.addf %226, %227 : vector<1x4xf32>
      %cst_234 = arith.constant 0.000000e+00 : f32
      %229 = vector.broadcast %cst_234 : f32 to vector<1x4xf32>
      %230 = arith.maximumf %228, %229 : vector<1x4xf32>
      %c0_235 = arith.constant 0 : index
      %c0_236 = arith.constant 0 : index
      %231 = vector.load %arg9[%c0_235, %c0_236] : memref<4x64xf32, #tpu.memory_space<vmem>>, vector<4x64xf32>
      %cst_237 = arith.constant dense<0.000000e+00> : vector<1x64xf32>
      %232 = tpu.matmul %230, %231, %cst_237 {dimension_numbers = #tpu.dot_dimension_numbers<[1], [0], [0], [1], [0, 0, 1, 1], [], []>} : vector<1x4xf32>, vector<4x64xf32>, vector<1x64xf32> -> vector<1x64xf32>
      %c0_238 = arith.constant 0 : index
      %c0_239 = arith.constant 0 : index
      %233 = vector.load %arg10[%c0_238, %c0_239] : memref<1x64xf32, #tpu.memory_space<vmem>>, vector<1x64xf32>
      %234 = arith.addf %232, %233 : vector<1x64xf32>
      %235 = arith.negf %234 : vector<1x64xf32>
      %236 = math.exp %235 : vector<1x64xf32>
      %cst_240 = arith.constant 1.000000e+00 : f32
      %237 = vector.broadcast %cst_240 : f32 to vector<1x64xf32>
      %238 = arith.addf %237, %236 : vector<1x64xf32>
      %239 = arith.divf %237, %238 : vector<1x64xf32>
      %c0_241 = arith.constant 0 : index
      %c0_242 = arith.constant 0 : index
      %c0_243 = arith.constant 0 : index
      %240 = vector.load %arg2[%c0_241, %c0_242, %c0_243] : memref<1x256x64xf32, #tpu.memory_space<vmem>>, vector<1x256x64xf32>
      %241 = vector.shape_cast %240 : vector<1x256x64xf32> to vector<256x64xf32>
      %c0_244 = arith.constant 0 : index
      %c0_245 = arith.constant 0 : index
      %c0_246 = arith.constant 0 : index
      %242 = vector.load %arg11[%c0_244, %c0_245, %c0_246] : memref<1x256x64xf32, #tpu.memory_space<vmem>>, vector<1x256x64xf32>
      %243 = vector.shape_cast %242 : vector<1x256x64xf32> to vector<256x64xf32>
      %244 = vector.broadcast %239 : vector<1x64xf32> to vector<256x64xf32>
      %245 = arith.mulf %243, %244 : vector<256x64xf32>
      %246 = arith.addf %241, %245 : vector<256x64xf32>
      %c0_247 = arith.constant 0 : index
      %c0_248 = arith.constant 0 : index
      %c0_249 = arith.constant 0 : index
      %247 = vector.load %arg11[%c0_247, %c0_248, %c0_249] : memref<1x256x64xf32, #tpu.memory_space<vmem>>, vector<1x256x64xf32>
      %248 = vector.shape_cast %247 : vector<1x256x64xf32> to vector<256x64xf32>
      %249 = vector.shape_cast %246 : vector<256x64xf32> to vector<1x256x64xf32>
      tpu.vector_store %arg11[%c0_247, %c0_248, %c0_249], %249 {strides = array<i32>} : memref<1x256x64xf32, #tpu.memory_space<vmem>>, vector<1x256x64xf32>,
    } else {
    }
    return
  }
  func.func @transform_0(%arg0: i32, %arg1: i32) -> (i32, i32, i32) {
    %c0_i32 = arith.constant 0 : i32
    %c0_i32_0 = arith.constant 0 : i32
    %c0_i32_1 = arith.constant 0 : i32
    return %arg0, %c0_i32, %c0_i32_0 : i32, i32, i32
  }
  func.func @transform_1(%arg0: i32, %arg1: i32) -> (i32, i32, i32) {
    %c0_i32 = arith.constant 0 : i32
    %c0_i32_0 = arith.constant 0 : i32
    %c0_i32_1 = arith.constant 0 : i32
    %c0_i32_2 = arith.constant 0 : i32
    return %c0_i32, %c0_i32_0, %c0_i32_1 : i32, i32, i32
  }
  func.func @transform_2(%arg0: i32, %arg1: i32) -> (i32, i32) {
    %c0_i32 = arith.constant 0 : i32
    %c0_i32_0 = arith.constant 0 : i32
    %c0_i32_1 = arith.constant 0 : i32
    return %c0_i32, %c0_i32_0 : i32, i32
  }
  func.func @transform_3(%arg0: i32, %arg1: i32) -> (i32, i32, i32) {
    %c0_i32 = arith.constant 0 : i32
    %c0_i32_0 = arith.constant 0 : i32
    %c0_i32_1 = arith.constant 0 : i32
    %c0_i32_2 = arith.constant 0 : i32
    return %c0_i32, %c0_i32_0, %c0_i32_1 : i32, i32, i32
  }
  func.func @transform_4(%arg0: i32, %arg1: i32) -> (i32, i32) {
    %c0_i32 = arith.constant 0 : i32
    %c0_i32_0 = arith.constant 0 : i32
    %c0_i32_1 = arith.constant 0 : i32
    return %c0_i32, %c0_i32_0 : i32, i32
  }
  func.func @transform_5(%arg0: i32, %arg1: i32) -> (i32, i32) {
    %c0_i32 = arith.constant 0 : i32
    %c0_i32_0 = arith.constant 0 : i32
    %c0_i32_1 = arith.constant 0 : i32
    return %c0_i32, %c0_i32_0 : i32, i32
  }
  func.func @transform_6(%arg0: i32, %arg1: i32) -> (i32, i32) {
    %c0_i32 = arith.constant 0 : i32
    %c0_i32_0 = arith.constant 0 : i32
    %c0_i32_1 = arith.constant 0 : i32
    return %c0_i32, %c0_i32_0 : i32, i32
  }
  func.func @transform_7(%arg0: i32, %arg1: i32) -> (i32, i32) {
    %c0_i32 = arith.constant 0 : i32
    %c0_i32_0 = arith.constant 0 : i32
    %c0_i32_1 = arith.constant 0 : i32
    return %c0_i32, %c0_i32_0 : i32, i32
  }
  func.func @transform_8(%arg0: i32, %arg1: i32) -> (i32, i32) {
    %c0_i32 = arith.constant 0 : i32
    %c0_i32_0 = arith.constant 0 : i32
    %c0_i32_1 = arith.constant 0 : i32
    return %c0_i32, %c0_i32_0 : i32, i32
  }
  func.func @transform_9(%arg0: i32, %arg1: i32) -> (i32, i32, i32) {
    %c0_i32 = arith.constant 0 : i32
    %c0_i32_0 = arith.constant 0 : i32
    %c0_i32_1 = arith.constant 0 : i32
    return %arg0, %c0_i32, %c0_i32_0 : i32, i32, i32
  }
}

</mosaic_0001>

<llo_original>
// kernel: tpu_custom_call.1
$region0: #{tpu_custom_call.1}
  #allocation0 [shape = 'u32[]', space=smem, size = 0x4, offset = 0x4, fixed_abs, tag = 'smem constant byte address 0x4 - core index']
  #allocation1 [shape = 'u32[144,128]{1,0:T(1,128)}', space=vmem, size = 0x12000, scoped, tag = 'internal scratch']
  #allocation2 [shape = 'f32[12,18,64]{2,1,0:T(8,128)}', space=vmem, size = 0x24000, scoped, tag = 'scratch operand']
  #allocation3 [shape = 'f32[10,18,64]{2,1,0:T(8,128)}', space=vmem, size = 0x1e000, scoped, tag = 'scratch operand']
  #allocation4 [shape = 'bf16[160,192]{1,0:T(16,128)(2,1)}', space=vmem, size = 0x14000, scoped, tag = 'scratch operand']
  #allocation5 [shape = 'f32[160,64]{1,0:T(8,128)}', space=vmem, size = 0x14000, scoped, tag = 'scratch operand']
  #allocation6 [shape = 'f32[1,64]{1,0:T(1,128)}', space=vmem, size = 0x200, scoped, tag = 'scratch operand']
  %s0 = inlined_call_operand.vmem [shape: f32[2,256,64], index: 0, kind: input, shape index: {}]
  %s1 = inlined_call_operand.vmem [shape: bf16[3,192,64], index: 1, kind: input, shape index: {}]
  %s2 = inlined_call_operand.vmem [shape: f32[1,64], index: 2, kind: input, shape index: {}]
  %s3 = inlined_call_operand.vmem [shape: bf16[3,192,64], index: 3, kind: input, shape index: {}]
  %s4 = inlined_call_operand.vmem [shape: f32[1,64], index: 4, kind: input, shape index: {}]
  %s5 = inlined_call_operand.vmem [shape: f32[64,4], index: 5, kind: input, shape index: {}]
  %s6 = inlined_call_operand.vmem [shape: f32[1,4], index: 6, kind: input, shape index: {}]
  %s7 = inlined_call_operand.vmem [shape: f32[4,64], index: 7, kind: input, shape index: {}]
  %s8 = inlined_call_operand.vmem [shape: f32[1,64], index: 8, kind: input, shape index: {}]
  %s9 = inlined_call_operand.vmem [shape: f32[2,256,64], index: 9, kind: output, shape index: {}]
  %s10 = sld [smem:[#allocation0]]
  $region85: #{tpu_custom_call.1} parent=0
    _
  %s12 = ssub.s32 1, %s10
  %s13 = scalar_select 0, %s12, %s10
  loop: start=0, step=1, limit=6
  $region2: #{tpu_custom_call.1} parent=0 // loop_pre_header
    _
  $region3: #{tpu_custom_call.1} parent=0 // loop_header
    %s15 = sphi 0, %s19
    %p16 = scmp.ge.s32.totalorder %s15, 6
    %s22 = sphi 0, %s34
    %s23 = sphi 0, %s30
    %s24 = sphi 0, %s22
    %s25 = sphi 0, %s23
    %s26 = sphi 0, %s24
    %s27 = sphi 0, %s25
    %s37 = sphi 0, %s39
    %s40 = sphi 0, %s37
    %s41 = sphi 0, %s40
    %s57 = sphi 0, %s41
    %s61 = sphi 0, %s61
    %s63 = sphi 0, %s61
    %s64 = sphi 0, %s63
    %s78 = sphi 0, %s64
    %s82 = sphi 0, %s82
    %s84 = sphi 0, %s82
    %s85 = sphi 0, %s84
    %s99 = sphi 0, %s85
    %s103 = sphi 0, %s103
    %s105 = sphi 0, %s103
    %s106 = sphi 0, %s105
    %s120 = sphi 0, %s106
    %s124 = sphi 0, %s124
    %s126 = sphi 0, %s124
    %s127 = sphi 0, %s126
    %s141 = sphi 0, %s127
    %s145 = sphi 0, %s145
    %s147 = sphi 0, %s145
    %s148 = sphi 0, %s147
    %s162 = sphi 0, %s148
    %s166 = sphi 0, %s166
    %s168 = sphi 0, %s166
    %s169 = sphi 0, %s168
    %s183 = sphi 0, %s169
    %s187 = sphi 0, %s187
    %s189 = sphi 0, %s187
    %s190 = sphi 0, %s189
    %s204 = sphi 0, %s190
    %s208 = sphi 0, %s208
    %s210 = sphi 0, %s208
    %s211 = sphi 0, %s210
    %s225 = sphi 0, %s211
    %s231 = sphi 0, %s233
    %s234 = sphi 0, %s231
    %s235 = sphi 0, %s234
    %s251 = sphi 0, %s235
  $region4: #{tpu_custom_call.1} parent=0 // loop_header_branch
    %18 = sbr.rel (%p16) target = $region8
  $region5: #{tpu_custom_call.1} parent=0 // loop_body
    %s20 = ssub.s32 %s15, 1
    %s21 = ssub.s32 %s15, 2
    %s28 = sadd.s32 1, %s23
    %p29 = scmp.ge.s32.totalorder %s28, 2
    %s30 = scalar_select %p29, 0, %s28
    %s31 = sadd.s32 1, %s22
    %s32 = scalar_select %p29, %s31, %s22
    %p33 = scmp.ge.s32.totalorder %s32, 2
    %s34 = scalar_select %p33, 0, %s32
    %s35 = ssub.s32 %s22, %s34
    %p36 = scmp.eq.s32.totalorder %s35, 0
    %s38 = sadd.s32 %s37, 1
    %s39 = scalar_select %p36, %s37, %s38
    %p42 = pneg %p36
    %p43 = scmp.eq.s32.totalorder %s15, 3
    %p44 = por %p42, %p43
    %p45 = scmp.ne.s32.totalorder %s37, %s40
    %p46 = scmp.eq.s32.totalorder %s15, 0
    %p47 = por %p45, %p46
    %p48 = scmp.ne.s32.totalorder %s37, %s40
    %p49 = scmp.eq.s32.totalorder %s20, 3
    %p50 = por %p48, %p49
    %p51 = scmp.ne.s32.totalorder %s40, %s41
    %p52 = scmp.eq.s32.totalorder %s20, 0
    %p53 = por %p51, %p52
    %p54 = scmp.ne.s32.totalorder %s40, %s41
    %p55 = scmp.eq.s32.totalorder %s21, 3
    %p56 = por %p54, %p55
    %p58 = scmp.ne.s32.totalorder %s41, %s57
    %p59 = scmp.eq.s32.totalorder %s21, 0
    %p60 = por %p58, %p59
    %s62 = sadd.s32 %s61, 1
    %p65 = scmp.eq.s32.totalorder %s15, 3
    %p66 = scmp.ne.s32.totalorder %s61, %s63
    %p67 = scmp.eq.s32.totalorder %s15, 0
    %p68 = por %p66, %p67
    %p69 = scmp.ne.s32.totalorder %s61, %s63
    %p70 = scmp.eq.s32.totalorder %s20, 3
    %p71 = por %p69, %p70
    %p72 = scmp.ne.s32.totalorder %s63, %s64
    %p73 = scmp.eq.s32.totalorder %s20, 0
    %p74 = por %p72, %p73
    %p75 = scmp.ne.s32.totalorder %s63, %s64
    %p76 = scmp.eq.s32.totalorder %s21, 3
    %p77 = por %p75, %p76
    %p79 = scmp.ne.s32.totalorder %s64, %s78
    %p80 = scmp.eq.s32.totalorder %s21, 0
    %p81 = por %p79, %p80
    %s83 = sadd.s32 %s82, 1
    %p86 = scmp.eq.s32.totalorder %s15, 3
    %p87 = scmp.ne.s32.totalorder %s82, %s84
    %p88 = scmp.eq.s32.totalorder %s15, 0
    %p89 = por %p87, %p88
    %p90 = scmp.ne.s32.totalorder %s82, %s84
    %p91 = scmp.eq.s32.totalorder %s20, 3
    %p92 = por %p90, %p91
    %p93 = scmp.ne.s32.totalorder %s84, %s85
    %p94 = scmp.eq.s32.totalorder %s20, 0
    %p95 = por %p93, %p94
    %p96 = scmp.ne.s32.totalorder %s84, %s85
    %p97 = scmp.eq.s32.totalorder %s21, 3
    %p98 = por %p96, %p97
    %p100 = scmp.ne.s32.totalorder %s85, %s99
    %p101 = scmp.eq.s32.totalorder %s21, 0
    %p102 = por %p100, %p101
    %s104 = sadd.s32 %s103, 1
    %p107 = scmp.eq.s32.totalorder %s15, 3
    %p108 = scmp.ne.s32.totalorder %s103, %s105
    %p109 = scmp.eq.s32.totalorder %s15, 0
    %p110 = por %p108, %p109
    %p111 = scmp.ne.s32.totalorder %s103, %s105
    %p112 = scmp.eq.s32.totalorder %s20, 3
    %p113 = por %p111, %p112
    %p114 = scmp.ne.s32.totalorder %s105, %s106
    %p115 = scmp.eq.s32.totalorder %s20, 0
    %p116 = por %p114, %p115
    %p117 = scmp.ne.s32.totalorder %s105, %s106
    %p118 = scmp.eq.s32.totalorder %s21, 3
    %p119 = por %p117, %p118
    %p121 = scmp.ne.s32.totalorder %s106, %s120
    %p122 = scmp.eq.s32.totalorder %s21, 0
    %p123 = por %p121, %p122
    %s125 = sadd.s32 %s124, 1
    %p128 = scmp.eq.s32.totalorder %s15, 3
    %p129 = scmp.ne.s32.totalorder %s124, %s126
    %p130 = scmp.eq.s32.totalorder %s15, 0
    %p131 = por %p129, %p130
    %p132 = scmp.ne.s32.totalorder %s124, %s126
    %p133 = scmp.eq.s32.totalorder %s20, 3
    %p134 = por %p132, %p133
    %p135 = scmp.ne.s32.totalorder %s126, %s127
    %p136 = scmp.eq.s32.totalorder %s20, 0
    %p137 = por %p135, %p136
    %p138 = scmp.ne.s32.totalorder %s126, %s127
    %p139 = scmp.eq.s32.totalorder %s21, 3
    %p140 = por %p138, %p139
    %p142 = scmp.ne.s32.totalorder %s127, %s141
    %p143 = scmp.eq.s32.totalorder %s21, 0
    %p144 = por %p142, %p143
    %s146 = sadd.s32 %s145, 1
    %p149 = scmp.eq.s32.totalorder %s15, 3
    %p150 = scmp.ne.s32.totalorder %s145, %s147
    %p151 = scmp.eq.s32.totalorder %s15, 0
    %p152 = por %p150, %p151
    %p153 = scmp.ne.s32.totalorder %s145, %s147
    %p154 = scmp.eq.s32.totalorder %s20, 3
    %p155 = por %p153, %p154
    %p156 = scmp.ne.s32.totalorder %s147, %s148
    %p157 = scmp.eq.s32.totalorder %s20, 0
    %p158 = por %p156, %p157
    %p159 = scmp.ne.s32.totalorder %s147, %s148
    %p160 = scmp.eq.s32.totalorder %s21, 3
    %p161 = por %p159, %p160
    %p163 = scmp.ne.s32.totalorder %s148, %s162
    %p164 = scmp.eq.s32.totalorder %s21, 0
    %p165 = por %p163, %p164
    %s167 = sadd.s32 %s166, 1
    %p170 = scmp.eq.s32.totalorder %s15, 3
    %p171 = scmp.ne.s32.totalorder %s166, %s168
    %p172 = scmp.eq.s32.totalorder %s15, 0
    %p173 = por %p171, %p172
    %p174 = scmp.ne.s32.totalorder %s166, %s168
    %p175 = scmp.eq.s32.totalorder %s20, 3
    %p176 = por %p174, %p175
    %p177 = scmp.ne.s32.totalorder %s168, %s169
    %p178 = scmp.eq.s32.totalorder %s20, 0
    %p179 = por %p177, %p178
    %p180 = scmp.ne.s32.totalorder %s168, %s169
    %p181 = scmp.eq.s32.totalorder %s21, 3
    %p182 = por %p180, %p181
    %p184 = scmp.ne.s32.totalorder %s169, %s183
    %p185 = scmp.eq.s32.totalorder %s21, 0
    %p186 = por %p184, %p185
    %s188 = sadd.s32 %s187, 1
    %p191 = scmp.eq.s32.totalorder %s15, 3
    %p192 = scmp.ne.s32.totalorder %s187, %s189
    %p193 = scmp.eq.s32.totalorder %s15, 0
    %p194 = por %p192, %p193
    %p195 = scmp.ne.s32.totalorder %s187, %s189
    %p196 = scmp.eq.s32.totalorder %s20, 3
    %p197 = por %p195, %p196
    %p198 = scmp.ne.s32.totalorder %s189, %s190
    %p199 = scmp.eq.s32.totalorder %s20, 0
    %p200 = por %p198, %p199
    %p201 = scmp.ne.s32.totalorder %s189, %s190
    %p202 = scmp.eq.s32.totalorder %s21, 3
    %p203 = por %p201, %p202
    %p205 = scmp.ne.s32.totalorder %s190, %s204
    %p206 = scmp.eq.s32.totalorder %s21, 0
    %p207 = por %p205, %p206
    %s209 = sadd.s32 %s208, 1
    %p212 = scmp.eq.s32.totalorder %s15, 3
    %p213 = scmp.ne.s32.totalorder %s208, %s210
    %p214 = scmp.eq.s32.totalorder %s15, 0
    %p215 = por %p213, %p214
    %p216 = scmp.ne.s32.totalorder %s208, %s210
    %p217 = scmp.eq.s32.totalorder %s20, 3
    %p218 = por %p216, %p217
    %p219 = scmp.ne.s32.totalorder %s210, %s211
    %p220 = scmp.eq.s32.totalorder %s20, 0
    %p221 = por %p219, %p220
    %p222 = scmp.ne.s32.totalorder %s210, %s211
    %p223 = scmp.eq.s32.totalorder %s21, 3
    %p224 = por %p222, %p223
    %p226 = scmp.ne.s32.totalorder %s211, %s225
    %p227 = scmp.eq.s32.totalorder %s21, 0
    %p228 = por %p226, %p227
    %s229 = ssub.s32 %s22, %s34
    %p230 = scmp.eq.s32.totalorder %s229, 0
    %s232 = sadd.s32 %s231, 1
    %s233 = scalar_select %p230, %s231, %s232
    %p236 = pneg %p230
    %p237 = scmp.eq.s32.totalorder %s15, 3
    %p238 = por %p236, %p237
    %p239 = scmp.ne.s32.totalorder %s231, %s234
    %p240 = scmp.eq.s32.totalorder %s15, 0
    %p241 = por %p239, %p240
    %p242 = scmp.ne.s32.totalorder %s231, %s234
    %p243 = scmp.eq.s32.totalorder %s20, 3
    %p244 = por %p242, %p243
    %p245 = scmp.ne.s32.totalorder %s234, %s235
    %p246 = scmp.eq.s32.totalorder %s20, 0
    %p247 = por %p245, %p246
    %p248 = scmp.ne.s32.totalorder %s234, %s235
    %p249 = scmp.eq.s32.totalorder %s21, 3
    %p250 = por %p248, %p249
    %p252 = scmp.ne.s32.totalorder %s235, %s251
    %p253 = scmp.eq.s32.totalorder %s21, 0
    %p254 = por %p252, %p253
    %p255 = scmp.le.s32.totalorder 1, %s15
    %p256 = scmp.lt.s32.totalorder %s15, 5
    %p257 = pnand %p255, %p256
    %p258 = pneg %p257
    // Predicated region
    $region9: #{tpu_custom_call.1} parent=5 // pred_check
      _
    $region10: #{tpu_custom_call.1} parent=5 // pred_check_branch
      %260 = sbr.rel (%p257) target = $region12
    $region11: #{tpu_custom_call.1} parent=5 // pred_region
      %s261 = ssub.s32 %s15, 1
      // Predicated region
      $region13: #{tpu_custom_call.1} parent=11 // pred_check
        %p262 = pneg %p74
      $region14: #{tpu_custom_call.1} parent=11 // pred_check_branch
        %264 = sbr.rel (%p262) target = $region16
      $region15: #{tpu_custom_call.1} parent=11 // pred_region
        _
      $region16: #{tpu_custom_call.1} parent=11 // pred_fallthru
        _
      // Predicated region
      $region17: #{tpu_custom_call.1} parent=11 // pred_check
        %p265 = pneg %p95
      $region18: #{tpu_custom_call.1} parent=11 // pred_check_branch
        %267 = sbr.rel (%p265) target = $region20
      $region19: #{tpu_custom_call.1} parent=11 // pred_region
        _
      $region20: #{tpu_custom_call.1} parent=11 // pred_fallthru
        _
      // Predicated region
      $region21: #{tpu_custom_call.1} parent=11 // pred_check
        %p268 = pneg %p116
      $region22: #{tpu_custom_call.1} parent=11 // pred_check_branch
        %270 = sbr.rel (%p268) target = $region24
      $region23: #{tpu_custom_call.1} parent=11 // pred_region
        _
      $region24: #{tpu_custom_call.1} parent=11 // pred_fallthru
        _
      // Predicated region
      $region25: #{tpu_custom_call.1} parent=11 // pred_check
        %p271 = pneg %p137
      $region26: #{tpu_custom_call.1} parent=11 // pred_check_branch
        %273 = sbr.rel (%p271) target = $region28
      $region27: #{tpu_custom_call.1} parent=11 // pred_region
        _
      $region28: #{tpu_custom_call.1} parent=11 // pred_fallthru
        _
      // Predicated region
      $region29: #{tpu_custom_call.1} parent=11 // pred_check
        %p274 = pneg %p158
      $region30: #{tpu_custom_call.1} parent=11 // pred_check_branch
        %276 = sbr.rel (%p274) target = $region32
      $region31: #{tpu_custom_call.1} parent=11 // pred_region
        _
      $region32: #{tpu_custom_call.1} parent=11 // pred_fallthru
        _
      // Predicated region
      $region33: #{tpu_custom_call.1} parent=11 // pred_check
        %p277 = pneg %p179
      $region34: #{tpu_custom_call.1} parent=11 // pred_check_branch
        %279 = sbr.rel (%p277) target = $region36
      $region35: #{tpu_custom_call.1} parent=11 // pred_region
        _
      $region36: #{tpu_custom_call.1} parent=11 // pred_fallthru
        _
      // Predicated region
      $region37: #{tpu_custom_call.1} parent=11 // pred_check
        %p280 = pneg %p200
      $region38: #{tpu_custom_call.1} parent=11 // pred_check_branch
        %282 = sbr.rel (%p280) target = $region40
      $region39: #{tpu_custom_call.1} parent=11 // pred_region
        _
      $region40: #{tpu_custom_call.1} parent=11 // pred_fallthru
        _
      // Predicated region
      $region41: #{tpu_custom_call.1} parent=11 // pred_check
        %p283 = pneg %p221
      $region42: #{tpu_custom_call.1} parent=11 // pred_check_branch
        %285 = sbr.rel (%p283) target = $region44
      $region43: #{tpu_custom_call.1} parent=11 // pred_region
        _
      $region44: #{tpu_custom_call.1} parent=11 // pred_fallthru
        _
    $region12: #{tpu_custom_call.1} parent=5 // pred_fallthru
      _
    %p286 = scmp.lt.s32.totalorder %s15, 4
    // Predicated region
    $region45: #{tpu_custom_call.1} parent=5 // pred_check
      %p287 = pneg %p286
    $region46: #{tpu_custom_call.1} parent=5 // pred_check_branch
      %289 = sbr.rel (%p287) target = $region48
    $region47: #{tpu_custom_call.1} parent=5 // pred_region
      // Predicated region
      $region49: #{tpu_custom_call.1} parent=47 // pred_check
        %p290 = pneg %p47
      $region50: #{tpu_custom_call.1} parent=47 // pred_check_branch
        %292 = sbr.rel (%p290) target = $region52
      $region51: #{tpu_custom_call.1} parent=47 // pred_region
        %p293 = scmp.lt.s32.totalorder %s22, 1
        %s294 = scalar_select %p293, %s22, 1
        %s295 = smul.addr %s294, 32
        %s296 = smul.addr %s295, 8
        %s297 = scalar_lea.vmem %s0, %s296
      $region52: #{tpu_custom_call.1} parent=47 // pred_fallthru
        _
    $region48: #{tpu_custom_call.1} parent=5 // pred_fallthru
      _
    %p298 = scmp.le.s32.totalorder 1, %s15
    %p299 = scmp.lt.s32.totalorder %s15, 5
    %p300 = pnand %p298, %p299
    %p301 = pneg %p300
    // Predicated region
    $region53: #{tpu_custom_call.1} parent=5 // pred_check
      _
    $region54: #{tpu_custom_call.1} parent=5 // pred_check_branch
      %303 = sbr.rel (%p300) target = $region56
    $region55: #{tpu_custom_call.1} parent=5 // pred_region
      %s304 = ssub.s32 %s15, 1
      %p305 = scmp.lt.s32.totalorder %s24, 1
      %s306 = scalar_select %p305, %s24, 1
      %s307 = smul.addr %s306, 32
      %s308 = smul.addr %s307, 8
      %s309 = scalar_lea.vmem %s0, %s308
      %p310 = pneg %p53
      %p311 = pneg %p50
      %p312 = pneg %p74
      %p313 = pneg %p71
      %p314 = pneg %p95
      %p315 = pneg %p92
      %p316 = pneg %p116
      %p317 = pneg %p113
      %p318 = pneg %p137
      %p319 = pneg %p134
      %p320 = pneg %p158
      %p321 = pneg %p155
      %p322 = pneg %p179
      %p323 = pneg %p176
      %p324 = pneg %p200
      %p325 = pneg %p197
      %p326 = pneg %p221
      %p327 = pneg %p218
      %p328 = pneg %p247
      %p329 = pneg %p244
      %p330 = scmp.lt.s32.totalorder %s24, 1
      %s331 = scalar_select %p330, %s24, 1
      %s332 = smul.addr %s331, 32
      %s333 = smul.addr %s332, 8
      %s334 = scalar_lea.vmem %s9, %s333
      %p335 = scmp.lt.s32.totalorder %s24, 1
      %s336 = scalar_select %p335, %s24, 1
      %s337 = smul.addr %s336, 32
      %s338 = smul.addr %s337, 8
      %s339 = scalar_lea.vmem %s0, %s338
      %p340 = scmp.lt.s32.totalorder %s24, 1
      %s341 = scalar_select %p340, %s24, 1
      %s342 = smul.addr %s341, 32
      %s343 = smul.addr %s342, 8
      %s344 = scalar_lea.vmem %s9, %s343
      %s346 = smul.u32 %s25, 8
      %s347 = smul.u32 %s25, 128
      %vm348 = vcmask 516096
      %349 = vst.msk [vmem:[#allocation2] sm:$0x1] %vm348, 0.0
      %350 = vst.msk [vmem:[#allocation2 + $0x18] sm:$0x1] %vm348, 0.0
      %351 = vst.msk [vmem:[#allocation2 + $0x30] sm:$0x1] %vm348, 0.0
      %352 = vst.msk [vmem:[#allocation2 + $0x48] sm:$0x1] %vm348, 0.0
      %353 = vst.msk [vmem:[#allocation2 + $0x60] sm:$0x1] %vm348, 0.0
      %354 = vst.msk [vmem:[#allocation2 + $0x78] sm:$0x1] %vm348, 0.0
      %355 = vst.msk [vmem:[#allocation2 + $0x90] sm:$0x1] %vm348, 0.0
      %356 = vst.msk [vmem:[#allocation2 + $0xa8] sm:$0x1] %vm348, 0.0
      %357 = vst.msk [vmem:[#allocation2 + $0xc0] sm:$0x1] %vm348, 0.0
      %358 = vst.msk [vmem:[#allocation2 + $0xd8] sm:$0x1] %vm348, 0.0
      %359 = vst.msk [vmem:[#allocation2 + $0xf0] sm:$0x1] %vm348, 0.0
      %360 = vst.msk [vmem:[#allocation2 + $0x108] sm:$0x1] %vm348, 0.0
      %361 = vst.msk [vmem:[#allocation2 + $0x11] sm:$0x1] %vm348, 0.0
      %362 = vst.msk [vmem:[#allocation2 + $0x29] sm:$0x1] %vm348, 0.0
      %363 = vst.msk [vmem:[#allocation2 + $0x41] sm:$0x1] %vm348, 0.0
      %364 = vst.msk [vmem:[#allocation2 + $0x59] sm:$0x1] %vm348, 0.0
      %365 = vst.msk [vmem:[#allocation2 + $0x71] sm:$0x1] %vm348, 0.0
      %366 = vst.msk [vmem:[#allocation2 + $0x89] sm:$0x1] %vm348, 0.0
      %367 = vst.msk [vmem:[#allocation2 + $0xa1] sm:$0x1] %vm348, 0.0
      %368 = vst.msk [vmem:[#allocation2 + $0xb9] sm:$0x1] %vm348, 0.0
      %369 = vst.msk [vmem:[#allocation2 + $0xd1] sm:$0x1] %vm348, 0.0
      %370 = vst.msk [vmem:[#allocation2 + $0xe9] sm:$0x1] %vm348, 0.0
      %371 = vst.msk [vmem:[#allocation2 + $0x101] sm:$0x1] %vm348, 0.0
      %372 = vst.msk [vmem:[#allocation2 + $0x119] sm:$0x1] %vm348, 0.0
      %s373 = scalar_lea.vmem %s339, %s347
      %v374 = vld [vmem:[%s373] sm:$0xff]
      %v375 = vld [vmem:[%s373 + $0x8] sm:$0xff]
      %v376 = vld [vmem:[%s373 + $0x10] sm:$0xff]
      %v377 = vld [vmem:[%s373 + $0x18] sm:$0xff]
      %v378 = vld [vmem:[%s373 + $0x20] sm:$0xff]
      %v379 = vld [vmem:[%s373 + $0x28] sm:$0xff]
      %v380 = vld [vmem:[%s373 + $0x30] sm:$0xff]
      %v381 = vld [vmem:[%s373 + $0x38] sm:$0xff]
      %v382 = vld [vmem:[%s373 + $0x40] sm:$0xff]
      %v383 = vld [vmem:[%s373 + $0x48] sm:$0xff]
      %v384 = vld [vmem:[%s373 + $0x50] sm:$0xff]
      %v385 = vld [vmem:[%s373 + $0x58] sm:$0xff]
      %v386 = vld [vmem:[%s373 + $0x60] sm:$0xff]
      %v387 = vld [vmem:[%s373 + $0x68] sm:$0xff]
      %v388 = vld [vmem:[%s373 + $0x70] sm:$0xff]
      %v389 = vld [vmem:[%s373 + $0x78] sm:$0xff]
      %s390 = scalar_lea.vmem [#allocation2], 48
      %vm391 = vcmask 523264
      %392 = vst.msk [vmem:[%s390 + $0x1] sm:$0xff] %vm391, %v374
      %393 = vst.msk [vmem:[%s390 + $0x9] sm:$0xff] %vm391, %v375
      %394 = vst.msk [vmem:[%s390 + $0x19] sm:$0xff] %vm391, %v376
      %395 = vst.msk [vmem:[%s390 + $0x21] sm:$0xff] %vm391, %v377
      %396 = vst.msk [vmem:[%s390 + $0x31] sm:$0xff] %vm391, %v378
      %397 = vst.msk [vmem:[%s390 + $0x39] sm:$0xff] %vm391, %v379
      %398 = vst.msk [vmem:[%s390 + $0x49] sm:$0xff] %vm391, %v380
      %399 = vst.msk [vmem:[%s390 + $0x51] sm:$0xff] %vm391, %v381
      %400 = vst.msk [vmem:[%s390 + $0x61] sm:$0xff] %vm391, %v382
      %401 = vst.msk [vmem:[%s390 + $0x69] sm:$0xff] %vm391, %v383
      %402 = vst.msk [vmem:[%s390 + $0x79] sm:$0xff] %vm391, %v384
      %403 = vst.msk [vmem:[%s390 + $0x81] sm:$0xff] %vm391, %v385
      %404 = vst.msk [vmem:[%s390 + $0x91] sm:$0xff] %vm391, %v386
      %405 = vst.msk [vmem:[%s390 + $0x99] sm:$0xff] %vm391, %v387
      %406 = vst.msk [vmem:[%s390 + $0xa9] sm:$0xff] %vm391, %v388
      %407 = vst.msk [vmem:[%s390 + $0xb1] sm:$0xff] %vm391, %v389
      %s408 = sadd.s32 %s346, 4294967294
      %p409 = scmp.ge.s32.totalorder %s408, 0
      %p410 = scmp.lt.s32.totalorder %s408, 16
      %p411 = pnand %p409, %p410
      %p412 = pneg %p411
      %p413 = scmp.gt.s32.totalorder %s408, 0
      %s414 = scalar_select %p413, %s408, 0
      %p415 = scmp.lt.s32.totalorder %s414, 15
      %s416 = scalar_select %p415, %s414, 15
      %s417 = smul.u32 %s416, 16
      %s418 = scalar_lea.vmem %s339, %s417
      %v419 = vld [vmem:[%s418] sm:$0xff]
      %v420 = vld [vmem:[%s418 + $0x8] sm:$0xff]
      %s421 = scalar_select %p412, 1, 0
      %v422 = vstv %s421
      %vm423 = vcmp.eq.s32.totalorder %v422, 1
      %v424 = vsel %vm423, %v419, 0.0
      %v425 = vsel %vm423, %v420, 0.0
      %426 = vst.msk [vmem:[#allocation2 + $0x1] sm:$0xff] %vm391, %v424
      %427 = vst.msk [vmem:[#allocation2 + $0x9] sm:$0xff] %vm391, %v425
      %s428 = sadd.s32 %s346, 4294967295
      %p429 = scmp.ge.s32.totalorder %s428, 0
      %p430 = scmp.lt.s32.totalorder %s428, 16
      %p431 = pnand %p429, %p430
      %p432 = pneg %p431
      %p433 = scmp.gt.s32.totalorder %s428, 0
      %s434 = scalar_select %p433, %s428, 0
      %p435 = scmp.lt.s32.totalorder %s434, 15
      %s436 = scalar_select %p435, %s434, 15
      %s437 = smul.u32 %s436, 16
      %s438 = scalar_lea.vmem %s339, %s437
      %v439 = vld [vmem:[%s438] sm:$0xff]
      %v440 = vld [vmem:[%s438 + $0x8] sm:$0xff]
      %s441 = scalar_select %p432, 1, 0
      %v442 = vstv %s441
      %vm443 = vcmp.eq.s32.totalorder %v442, 1
      %v444 = vsel %vm443, %v439, 0.0
      %v445 = vsel %vm443, %v440, 0.0
      %s446 = scalar_lea.vmem [#allocation2], 24
      %447 = vst.msk [vmem:[%s446 + $0x1] sm:$0xff] %vm391, %v444
      %448 = vst.msk [vmem:[%s446 + $0x9] sm:$0xff] %vm391, %v445
      %s449 = sadd.s32 %s346, 8
      %p450 = scmp.ge.s32.totalorder %s449, 0
      %p451 = scmp.lt.s32.totalorder %s449, 16
      %p452 = pnand %p450, %p451
      %p453 = pneg %p452
      %p454 = scmp.gt.s32.totalorder %s449, 0
      %s455 = scalar_select %p454, %s449, 0
      %p456 = scmp.lt.s32.totalorder %s455, 15
      %s457 = scalar_select %p456, %s455, 15
      %s458 = smul.u32 %s457, 16
      %s459 = scalar_lea.vmem %s339, %s458
      %v460 = vld [vmem:[%s459] sm:$0xff]
      %v461 = vld [vmem:[%s459 + $0x8] sm:$0xff]
      %s462 = scalar_select %p453, 1, 0
      %v463 = vstv %s462
      %vm464 = vcmp.eq.s32.totalorder %v463, 1
      %v465 = vsel %vm464, %v460, 0.0
      %v466 = vsel %vm464, %v461, 0.0
      %s467 = scalar_lea.vmem [#allocation2], 240
      %468 = vst.msk [vmem:[%s467 + $0x1] sm:$0xff] %vm391, %v465
      %469 = vst.msk [vmem:[%s467 + $0x9] sm:$0xff] %vm391, %v466
      %s470 = sadd.s32 %s346, 9
      %p471 = scmp.ge.s32.totalorder %s470, 0
      %p472 = scmp.lt.s32.totalorder %s470, 16
      %p473 = pnand %p471, %p472
      %p474 = pneg %p473
      %p475 = scmp.gt.s32.totalorder %s470, 0
      %s476 = scalar_select %p475, %s470, 0
      %p477 = scmp.lt.s32.totalorder %s476, 15
      %s478 = scalar_select %p477, %s476, 15
      %s479 = smul.u32 %s478, 16
      %s480 = scalar_lea.vmem %s339, %s479
      %v481 = vld [vmem:[%s480] sm:$0xff]
      %v482 = vld [vmem:[%s480 + $0x8] sm:$0xff]
      %s483 = scalar_select %p474, 1, 0
      %v484 = vstv %s483
      %vm485 = vcmp.eq.s32.totalorder %v484, 1
      %v486 = vsel %vm485, %v481, 0.0
      %v487 = vsel %vm485, %v482, 0.0
      %s488 = scalar_lea.vmem [#allocation2], 264
      %489 = vst.msk [vmem:[%s488 + $0x1] sm:$0xff] %vm391, %v486
      %490 = vst.msk [vmem:[%s488 + $0x9] sm:$0xff] %vm391, %v487
      %v491 = vld [vmem:[#allocation2] sm:$0xff]
      %v492 = vld [vmem:[#allocation2 + $0x8] sm:$0xff]
      %v493 = vld [vmem:[#allocation2 + $0x18] sm:$0xff]
      %v494 = vld [vmem:[#allocation2 + $0x20] sm:$0xff]
      %v495 = vld [vmem:[#allocation2 + $0x30] sm:$0xff]
      %v496 = vld [vmem:[#allocation2 + $0x38] sm:$0xff]
      %v497 = vld [vmem:[#allocation2 + $0x48] sm:$0xff]
      %v498 = vld [vmem:[#allocation2 + $0x50] sm:$0xff]
      %v499 = vld [vmem:[#allocation2 + $0x60] sm:$0xff]
      %v500 = vld [vmem:[#allocation2 + $0x68] sm:$0xff]
      %v501 = vld [vmem:[#allocation2 + $0x78] sm:$0xff]
      %v502 = vld [vmem:[#allocation2 + $0x80] sm:$0xff]
      %v503 = vld [vmem:[#allocation2 + $0x90] sm:$0xff]
      %v504 = vld [vmem:[#allocation2 + $0x98] sm:$0xff]
      %v505 = vld [vmem:[#allocation2 + $0xa8] sm:$0xff]
      %v506 = vld [vmem:[#allocation2 + $0xb0] sm:$0xff]
      %v507 = vld [vmem:[#allocation2 + $0xc0] sm:$0xff]
      %v508 = vld [vmem:[#allocation2 + $0xc8] sm:$0xff]
      %v509 = vld [vmem:[#allocation2 + $0xd8] sm:$0xff]
      %v510 = vld [vmem:[#allocation2 + $0xe0] sm:$0xff]
      %v511 = vpack.c.bf16 %v492, %v491
      %v512 = vpack.c.bf16 %v494, %v493
      %v513 = vpack.c.bf16 %v496, %v495
      %v514 = vpack.c.bf16 %v498, %v497
      %v515 = vpack.c.bf16 %v500, %v499
      %v516 = vpack.c.bf16 %v502, %v501
      %v517 = vpack.c.bf16 %v504, %v503
      %v518 = vpack.c.bf16 %v506, %v505
      %v519 = vpack.c.bf16 %v508, %v507
      %v520 = vpack.c.bf16 %v510, %v509
      %521 = vst.msk [vmem:[#allocation4] sm:$0xff] %vm391, %v511
      %522 = vst.msk [vmem:[#allocation4 + $0x10] sm:$0xff] %vm391, %v512
      %523 = vst.msk [vmem:[#allocation4 + $0x20] sm:$0xff] %vm391, %v513
      %524 = vst.msk [vmem:[#allocation4 + $0x30] sm:$0xff] %vm391, %v514
      %525 = vst.msk [vmem:[#allocation4 + $0x40] sm:$0xff] %vm391, %v515
      %526 = vst.msk [vmem:[#allocation4 + $0x50] sm:$0xff] %vm391, %v516
      %527 = vst.msk [vmem:[#allocation4 + $0x60] sm:$0xff] %vm391, %v517
      %528 = vst.msk [vmem:[#allocation4 + $0x70] sm:$0xff] %vm391, %v518
      %529 = vst.msk [vmem:[#allocation4 + $0x80] sm:$0xff] %vm391, %v519
      %530 = vst.msk [vmem:[#allocation4 + $0x90] sm:$0xff] %vm391, %v520
      %v531 = vld [vmem:[#allocation2 + $0x1] sm:$0xff]
      %v532 = vld [vmem:[#allocation2 + $0x9] sm:$0xff]
      %v533 = vld [vmem:[#allocation2 + $0x19] sm:$0xff]
      %v534 = vld [vmem:[#allocation2 + $0x21] sm:$0xff]
      %v535 = vld [vmem:[#allocation2 + $0x31] sm:$0xff]
      %v536 = vld [vmem:[#allocation2 + $0x39] sm:$0xff]
      %v537 = vld [vmem:[#allocation2 + $0x49] sm:$0xff]
      %v538 = vld [vmem:[#allocation2 + $0x51] sm:$0xff]
      %v539 = vld [vmem:[#allocation2 + $0x61] sm:$0xff]
      %v540 = vld [vmem:[#allocation2 + $0x69] sm:$0xff]
      %v541 = vld [vmem:[#allocation2 + $0x79] sm:$0xff]
      %v542 = vld [vmem:[#allocation2 + $0x81] sm:$0xff]
      %v543 = vld [vmem:[#allocation2 + $0x91] sm:$0xff]
      %v544 = vld [vmem:[#allocation2 + $0x99] sm:$0xff]
      %v545 = vld [vmem:[#allocation2 + $0xa9] sm:$0xff]
      %v546 = vld [vmem:[#allocation2 + $0xb1] sm:$0xff]
      %v547 = vld [vmem:[#allocation2 + $0xc1] sm:$0xff]
      %v548 = vld [vmem:[#allocation2 + $0xc9] sm:$0xff]
      %v549 = vld [vmem:[#allocation2 + $0xd9] sm:$0xff]
      %v550 = vld [vmem:[#allocation2 + $0xe1] sm:$0xff]
      %v551 = vpack.c.bf16 %v532, %v531
      %v552 = vpack.c.bf16 %v534, %v533
      %v553 = vpack.c.bf16 %v536, %v535
      %v554 = vpack.c.bf16 %v538, %v537
      %v555 = vpack.c.bf16 %v540, %v539
      %v556 = vpack.c.bf16 %v542, %v541
      %v557 = vpack.c.bf16 %v544, %v543
      %v558 = vpack.c.bf16 %v546, %v545
      %v559 = vpack.c.bf16 %v548, %v547
      %v560 = vpack.c.bf16 %v550, %v549
      %571 = vrot.lane.b32.xlu0 %v551, 64
      %v572 = vpop.permute.xlu0 %571
      %573 = vrot.lane.b32.xlu0 %v552, 64
      %v574 = vpop.permute.xlu0 %573
      %575 = vrot.lane.b32.xlu0 %v553, 64
      %v576 = vpop.permute.xlu0 %575
      %577 = vrot.lane.b32.xlu0 %v554, 64
      %v578 = vpop.permute.xlu0 %577
      %579 = vrot.lane.b32.xlu0 %v555, 64
      %v580 = vpop.permute.xlu0 %579
      %581 = vrot.lane.b32.xlu0 %v556, 64
      %v582 = vpop.permute.xlu0 %581
      %583 = vrot.lane.b32.xlu0 %v557, 64
      %v584 = vpop.permute.xlu0 %583
      %585 = vrot.lane.b32.xlu0 %v558, 64
      %v586 = vpop.permute.xlu0 %585
      %587 = vrot.lane.b32.xlu0 %v559, 64
      %v588 = vpop.permute.xlu0 %587
      %589 = vrot.lane.b32.xlu0 %v560, 64
      %v590 = vpop.permute.xlu0 %589
      %vm601 = vcmask 1048064
      %602 = vst.msk [vmem:[#allocation4] sm:$0xff] %vm601, %v572
      %603 = vst.msk [vmem:[#allocation4 + $0x10] sm:$0xff] %vm601, %v574
      %604 = vst.msk [vmem:[#allocation4 + $0x20] sm:$0xff] %vm601, %v576
      %605 = vst.msk [vmem:[#allocation4 + $0x30] sm:$0xff] %vm601, %v578
      %606 = vst.msk [vmem:[#allocation4 + $0x40] sm:$0xff] %vm601, %v580
      %607 = vst.msk [vmem:[#allocation4 + $0x50] sm:$0xff] %vm601, %v582
      %608 = vst.msk [vmem:[#allocation4 + $0x60] sm:$0xff] %vm601, %v584
      %609 = vst.msk [vmem:[#allocation4 + $0x70] sm:$0xff] %vm601, %v586
      %610 = vst.msk [vmem:[#allocation4 + $0x80] sm:$0xff] %vm601, %v588
      %611 = vst.msk [vmem:[#allocation4 + $0x90] sm:$0xff] %vm601, %v590
      %v612 = vld [vmem:[#allocation2 + $0x2] sm:$0xff]
      %v613 = vld [vmem:[#allocation2 + $0xa] sm:$0xff]
      %v614 = vld [vmem:[#allocation2 + $0x1a] sm:$0xff]
      %v615 = vld [vmem:[#allocation2 + $0x22] sm:$0xff]
      %v616 = vld [vmem:[#allocation2 + $0x32] sm:$0xff]
      %v617 = vld [vmem:[#allocation2 + $0x3a] sm:$0xff]
      %v618 = vld [vmem:[#allocation2 + $0x4a] sm:$0xff]
      %v619 = vld [vmem:[#allocation2 + $0x52] sm:$0xff]
      %v620 = vld [vmem:[#allocation2 + $0x62] sm:$0xff]
      %v621 = vld [vmem:[#allocation2 + $0x6a] sm:$0xff]
      %v622 = vld [vmem:[#allocation2 + $0x7a] sm:$0xff]
      %v623 = vld [vmem:[#allocation2 + $0x82] sm:$0xff]
      %v624 = vld [vmem:[#allocation2 + $0x92] sm:$0xff]
      %v625 = vld [vmem:[#allocation2 + $0x9a] sm:$0xff]
      %v626 = vld [vmem:[#allocation2 + $0xaa] sm:$0xff]
      %v627 = vld [vmem:[#allocation2 + $0xb2] sm:$0xff]
      %v628 = vld [vmem:[#allocation2 + $0xc2] sm:$0xff]
      %v629 = vld [vmem:[#allocation2 + $0xca] sm:$0xff]
      %v630 = vld [vmem:[#allocation2 + $0xda] sm:$0xff]
      %v631 = vld [vmem:[#allocation2 + $0xe2] sm:$0xff]
      %v632 = vpack.c.bf16 %v613, %v612
      %v633 = vpack.c.bf16 %v615, %v614
      %v634 = vpack.c.bf16 %v617, %v616
      %v635 = vpack.c.bf16 %v619, %v618
      %v636 = vpack.c.bf16 %v621, %v620
      %v637 = vpack.c.bf16 %v623, %v622
      %v638 = vpack.c.bf16 %v625, %v624
      %v639 = vpack.c.bf16 %v627, %v626
      %v640 = vpack.c.bf16 %v629, %v628
      %v641 = vpack.c.bf16 %v631, %v630
      %642 = vst.msk [vmem:[#allocation4 + $0x8] sm:$0xff] %vm391, %v632
      %643 = vst.msk [vmem:[#allocation4 + $0x18] sm:$0xff] %vm391, %v633
      %644 = vst.msk [vmem:[#allocation4 + $0x28] sm:$0xff] %vm391, %v634
      %645 = vst.msk [vmem:[#allocation4 + $0x38] sm:$0xff] %vm391, %v635
      %646 = vst.msk [vmem:[#allocation4 + $0x48] sm:$0xff] %vm391, %v636
      %647 = vst.msk [vmem:[#allocation4 + $0x58] sm:$0xff] %vm391, %v637
      %648 = vst.msk [vmem:[#allocation4 + $0x68] sm:$0xff] %vm391, %v638
      %649 = vst.msk [vmem:[#allocation4 + $0x78] sm:$0xff] %vm391, %v639
      %650 = vst.msk [vmem:[#allocation4 + $0x88] sm:$0xff] %vm391, %v640
      %651 = vst.msk [vmem:[#allocation4 + $0x98] sm:$0xff] %vm391, %v641
      %v652 = vld [vmem:[#allocation4] sm:$0xff]
      %v653 = vld [vmem:[#allocation4 + $0x8] sm:$0xff]
      %v654 = vld [vmem:[#allocation4 + $0x10] sm:$0xff]
      %v655 = vld [vmem:[#allocation4 + $0x18] sm:$0xff]
      %v656 = vld [vmem:[#allocation4 + $0x20] sm:$0xff]
      %v657 = vld [vmem:[#allocation4 + $0x28] sm:$0xff]
      %v658 = vld [vmem:[#allocation4 + $0x30] sm:$0xff]
      %v659 = vld [vmem:[#allocation4 + $0x38] sm:$0xff]
      %v660 = vld [vmem:[#allocation4 + $0x40] sm:$0xff]
      %v661 = vld [vmem:[#allocation4 + $0x48] sm:$0xff]
      %v662 = vld [vmem:[#allocation4 + $0x50] sm:$0xff]
      %v663 = vld [vmem:[#allocation4 + $0x58] sm:$0xff]
      %v664 = vld [vmem:[#allocation4 + $0x60] sm:$0xff]
      %v665 = vld [vmem:[#allocation4 + $0x68] sm:$0xff]
      %v666 = vld [vmem:[#allocation4 + $0x70] sm:$0xff]
      %v667 = vld [vmem:[#allocation4 + $0x78] sm:$0xff]
      %v668 = vld [vmem:[#allocation4 + $0x80] sm:$0xff]
      %v669 = vld [vmem:[#allocation4 + $0x88] sm:$0xff]
      %v670 = vld [vmem:[#allocation4 + $0x90] sm:$0xff]
      %v671 = vld [vmem:[#allocation4 + $0x98] sm:$0xff]
      %v672 = vld [vmem:[%s1] sm:$0xf]
      %v673 = vld [vmem:[%s1 + $0x4] sm:$0xf]
      %v674 = vld [vmem:[%s1 + $0x8] sm:$0xf]
      %v675 = vld [vmem:[%s1 + $0xc] sm:$0xf]
      %v676 = vld [vmem:[%s1 + $0x10] sm:$0xf]
      %v677 = vld [vmem:[%s1 + $0x14] sm:$0xf]
      %v678 = vld [vmem:[%s1 + $0x18] sm:$0xf]
      %v679 = vld [vmem:[%s1 + $0x1c] sm:$0xf]
      %v680 = vld [vmem:[%s1 + $0x20] sm:$0xf]
      %v681 = vld [vmem:[%s1 + $0x24] sm:$0xf]
      %v682 = vld [vmem:[%s1 + $0x28] sm:$0xf]
      %v683 = vld [vmem:[%s1 + $0x2c] sm:$0xf]
      %v684 = vld [vmem:[%s1 + $0x30] sm:$0xf]
      %v685 = vld [vmem:[%s1 + $0x34] sm:$0xf]
      %v686 = vld [vmem:[%s1 + $0x38] sm:$0xf]
      %v687 = vld [vmem:[%s1 + $0x3c] sm:$0xf]
      %v688 = vld [vmem:[%s1 + $0x40] sm:$0xf]
      %v689 = vld [vmem:[%s1 + $0x44] sm:$0xf]
      %v690 = vld [vmem:[%s1 + $0x48] sm:$0xf]
      %v691 = vld [vmem:[%s1 + $0x4c] sm:$0xf]
      %v692 = vld [vmem:[%s1 + $0x50] sm:$0xf]
      %v693 = vld [vmem:[%s1 + $0x54] sm:$0xf]
      %v694 = vld [vmem:[%s1 + $0x58] sm:$0xf]
      %v695 = vld [vmem:[%s1 + $0x5c] sm:$0xf]
      %v720 = vunpack.c.l.b16 %v672
      %v721 = vunpack.c.l.b16 %v673
      %v722 = vunpack.c.l.b16 %v674
      %v723 = vunpack.c.l.b16 %v675
      %v724 = vunpack.c.l.b16 %v676
      %v725 = vunpack.c.l.b16 %v677
      %v726 = vunpack.c.l.b16 %v678
      %v727 = vunpack.c.l.b16 %v679
      %v728 = vunpack.c.l.b16 %v680
      %v729 = vunpack.c.l.b16 %v681
      %v730 = vunpack.c.l.b16 %v682
      %v731 = vunpack.c.l.b16 %v683
      %v732 = vunpack.c.l.b16 %v684
      %v733 = vunpack.c.l.b16 %v685
      %v734 = vunpack.c.l.b16 %v686
      %v735 = vunpack.c.l.b16 %v687
      %v736 = vunpack.c.l.b16 %v688
      %v737 = vunpack.c.l.b16 %v689
      %v738 = vunpack.c.l.b16 %v690
      %v739 = vunpack.c.l.b16 %v691
      %v740 = vunpack.c.l.b16 %v692
      %v741 = vunpack.c.l.b16 %v693
      %v742 = vunpack.c.l.b16 %v694
      %v743 = vunpack.c.l.b16 %v695
      %v744 = vpack.c.b16 %v721, %v720
      %v745 = vpack.c.b16 %v723, %v722
      %v746 = vpack.c.b16 %v725, %v724
      %v747 = vpack.c.b16 %v727, %v726
      %v748 = vpack.c.b16 %v729, %v728
      %v749 = vpack.c.b16 %v731, %v730
      %v750 = vpack.c.b16 %v733, %v732
      %v751 = vpack.c.b16 %v735, %v734
      %v752 = vpack.c.b16 %v737, %v736
      %v753 = vpack.c.b16 %v739, %v738
      %v754 = vpack.c.b16 %v741, %v740
      %v755 = vpack.c.b16 %v743, %v742
      %v769 = vsel %vm391, %v653, 0
      %v772 = vsel %vm391, %v655, 0
      %v775 = vsel %vm391, %v657, 0
      %v778 = vsel %vm391, %v659, 0
      %v781 = vsel %vm391, %v661, 0
      %v784 = vsel %vm391, %v663, 0
      %v787 = vsel %vm391, %v665, 0
      %v790 = vsel %vm391, %v667, 0
      %v793 = vsel %vm391, %v669, 0
      %v796 = vsel %vm391, %v671, 0
      %798 = vmatprep.subr.bf16.mxu0 0
      %799 = vmatpush1.bf16.msra.mxu0 %v744
      %800 = vmatprep.subr.bf16.mxu0 0
      %801 = vmatpush1.bf16.msra.mxu0 %v745
      %802 = vmatprep.subr.bf16.mxu0 0
      %803 = vmatpush1.bf16.msra.mxu0 %v746
      %804 = vmatprep.subr.bf16.mxu0 0
      %805 = vmatpush1.bf16.msra.mxu0 %v747
      %806 = vmatprep.subr.bf16.mxu0 0
      %807 = vmatpush1.bf16.msra.mxu0 %v748
      %808 = vmatprep.subr.bf16.mxu0 0
      %809 = vmatpush1.bf16.msra.mxu0 %v749
      %810 = vmatprep.subr.bf16.mxu0 0
      %811 = vmatpush1.bf16.msra.mxu0 %v750
      %812 = vmatprep.subr.bf16.mxu0 0
      %813 = vmatpush1.bf16.msra.mxu0 %v751
      %814 = vmatprep.subr.bf16.mxu0 0
      %815 = vmatpush1.bf16.msra.mxu0 %v752
      %816 = vmatprep.subr.bf16.mxu0 0
      %817 = vmatpush1.bf16.msra.mxu0 %v753
      %818 = vmatprep.subr.bf16.mxu0 0
      %819 = vmatpush1.bf16.msra.mxu0 %v754
      %820 = vmatprep.subr.bf16.mxu0 0
      %821 = vmatpush1.bf16.msra.mxu0 %v755
      %822 = vmatprep.subr.bf16.mxu0 0
      %823 = vmatpush1.bf16.msra.mxu0 0
      %824 = vmatprep.subr.bf16.mxu0 0
      %825 = vmatpush1.bf16.msra.mxu0 0
      %826 = vmatprep.subr.bf16.mxu0 0
      %827 = vmatpush1.bf16.msra.mxu0 0
      %828 = vmatprep.subr.bf16.mxu0 0
      %829 = vmatpush1.bf16.msra.mxu0 0
      %830 = vmatprep.mubr.bf16.mxu0 %v769
      %831 = vmatmul.mubr.bf16.gmra.mrb[0].mxu0 %v652
      %v832 = vpop.f32.mrb[0].mxu0
      %v833 = vadd.f32 0.0, %v832
      %v834 = vpop.f32.mrb[0].mxu0
      %v835 = vpop.f32.mrb[0].mxu0
      %v836 = vadd.f32 0.0, %v835
      %v837 = vpop.f32.mrb[0].mxu0
      %838 = vmatprep.mubr.bf16.mxu0 %v772
      %839 = vmatmul.mubr.bf16.gmra.mrb[0].mxu0 %v654
      %v840 = vpop.f32.mrb[0].mxu0
      %v841 = vadd.f32 0.0, %v840
      %v842 = vpop.f32.mrb[0].mxu0
      %v843 = vpop.f32.mrb[0].mxu0
      %v844 = vadd.f32 0.0, %v843
      %v845 = vpop.f32.mrb[0].mxu0
      %846 = vmatprep.mubr.bf16.mxu0 %v775
      %847 = vmatmul.mubr.bf16.gmra.mrb[0].mxu0 %v656
      %v848 = vpop.f32.mrb[0].mxu0
      %v849 = vadd.f32 0.0, %v848
      %v850 = vpop.f32.mrb[0].mxu0
      %v851 = vpop.f32.mrb[0].mxu0
      %v852 = vadd.f32 0.0, %v851
      %v853 = vpop.f32.mrb[0].mxu0
      %854 = vmatprep.mubr.bf16.mxu0 %v778
      %855 = vmatmul.mubr.bf16.gmra.mrb[0].mxu0 %v658
      %v856 = vpop.f32.mrb[0].mxu0
      %v857 = vadd.f32 0.0, %v856
      %v858 = vpop.f32.mrb[0].mxu0
      %v859 = vpop.f32.mrb[0].mxu0
      %v860 = vadd.f32 0.0, %v859
      %v861 = vpop.f32.mrb[0].mxu0
      %862 = vmatprep.mubr.bf16.mxu0 %v781
      %863 = vmatmul.mubr.bf16.gmra.mrb[0].mxu0 %v660
      %v864 = vpop.f32.mrb[0].mxu0
      %v865 = vadd.f32 0.0, %v864
      %v866 = vpop.f32.mrb[0].mxu0
      %v867 = vpop.f32.mrb[0].mxu0
      %v868 = vadd.f32 0.0, %v867
      %v869 = vpop.f32.mrb[0].mxu0
      %870 = vmatprep.mubr.bf16.mxu0 %v784
      %871 = vmatmul.mubr.bf16.gmra.mrb[0].mxu0 %v662
      %v872 = vpop.f32.mrb[0].mxu0
      %v873 = vadd.f32 0.0, %v872
      %v874 = vpop.f32.mrb[0].mxu0
      %v875 = vpop.f32.mrb[0].mxu0
      %v876 = vadd.f32 0.0, %v875
      %v877 = vpop.f32.mrb[0].mxu0
      %878 = vmatprep.mubr.bf16.mxu0 %v787
      %879 = vmatmul.mubr.bf16.gmra.mrb[0].mxu0 %v664
      %v880 = vpop.f32.mrb[0].mxu0
      %v881 = vadd.f32 0.0, %v880
      %v882 = vpop.f32.mrb[0].mxu0
      %v883 = vpop.f32.mrb[0].mxu0
      %v884 = vadd.f32 0.0, %v883
      %v885 = vpop.f32.mrb[0].mxu0
      %886 = vmatprep.mubr.bf16.mxu0 %v790
      %887 = vmatmul.mubr.bf16.gmra.mrb[0].mxu0 %v666
      %v888 = vpop.f32.mrb[0].mxu0
      %v889 = vadd.f32 0.0, %v888
      %v890 = vpop.f32.mrb[0].mxu0
      %v891 = vpop.f32.mrb[0].mxu0
      %v892 = vadd.f32 0.0, %v891
      %v893 = vpop.f32.mrb[0].mxu0
      %894 = vmatprep.mubr.bf16.mxu0 %v793
      %895 = vmatmul.mubr.bf16.gmra.mrb[0].mxu0 %v668
      %v896 = vpop.f32.mrb[0].mxu0
      %v897 = vadd.f32 0.0, %v896
      %v898 = vpop.f32.mrb[0].mxu0
      %v899 = vpop.f32.mrb[0].mxu0
      %v900 = vadd.f32 0.0, %v899
      %v901 = vpop.f32.mrb[0].mxu0
      %902 = vmatprep.mubr.bf16.mxu0 %v796
      %903 = vmatmul.mubr.bf16.gmra.mrb[0].mxu0 %v670
      %v904 = vpop.f32.mrb[0].mxu0
      %v905 = vadd.f32 0.0, %v904
      %v906 = vpop.f32.mrb[0].mxu0
      %v907 = vpop.f32.mrb[0].mxu0
      %v908 = vadd.f32 0.0, %v907
      %v909 = vpop.f32.mrb[0].mxu0
      %910 = vdwg.mxu0
      %911 = vst.msk [vmem:[#allocation5] sm:$0xff] %vm391, %v833
      %912 = vst.msk [vmem:[#allocation5 + $0x8] sm:$0xff] %vm391, %v836
      %913 = vst.msk [vmem:[#allocation5 + $0x10] sm:$0xff] %vm391, %v841
      %914 = vst.msk [vmem:[#allocation5 + $0x18] sm:$0xff] %vm391, %v844
      %915 = vst.msk [vmem:[#allocation5 + $0x20] sm:$0xff] %vm391, %v849
      %916 = vst.msk [vmem:[#allocation5 + $0x28] sm:$0xff] %vm391, %v852
      %917 = vst.msk [vmem:[#allocation5 + $0x30] sm:$0xff] %vm391, %v857
      %918 = vst.msk [vmem:[#allocation5 + $0x38] sm:$0xff] %vm391, %v860
      %919 = vst.msk [vmem:[#allocation5 + $0x40] sm:$0xff] %vm391, %v865
      %920 = vst.msk [vmem:[#allocation5 + $0x48] sm:$0xff] %vm391, %v868
      %921 = vst.msk [vmem:[#allocation5 + $0x50] sm:$0xff] %vm391, %v873
      %922 = vst.msk [vmem:[#allocation5 + $0x58] sm:$0xff] %vm391, %v876
      %923 = vst.msk [vmem:[#allocation5 + $0x60] sm:$0xff] %vm391, %v881
      %924 = vst.msk [vmem:[#allocation5 + $0x68] sm:$0xff] %vm391, %v884
      %925 = vst.msk [vmem:[#allocation5 + $0x70] sm:$0xff] %vm391, %v889
      %926 = vst.msk [vmem:[#allocation5 + $0x78] sm:$0xff] %vm391, %v892
      %927 = vst.msk [vmem:[#allocation5 + $0x80] sm:$0xff] %vm391, %v897
      %928 = vst.msk [vmem:[#allocation5 + $0x88] sm:$0xff] %vm391, %v900
      %929 = vst.msk [vmem:[#allocation5 + $0x90] sm:$0xff] %vm391, %v905
      %930 = vst.msk [vmem:[#allocation5 + $0x98] sm:$0xff] %vm391, %v908
      %v931 = vld [vmem:[%s446] sm:$0xff]
      %v932 = vld [vmem:[%s446 + $0x8] sm:$0xff]
      %v933 = vld [vmem:[%s446 + $0x18] sm:$0xff]
      %v934 = vld [vmem:[%s446 + $0x20] sm:$0xff]
      %v935 = vld [vmem:[%s446 + $0x30] sm:$0xff]
      %v936 = vld [vmem:[%s446 + $0x38] sm:$0xff]
      %v937 = vld [vmem:[%s446 + $0x48] sm:$0xff]
      %v938 = vld [vmem:[%s446 + $0x50] sm:$0xff]
      %v939 = vld [vmem:[%s446 + $0x60] sm:$0xff]
      %v940 = vld [vmem:[%s446 + $0x68] sm:$0xff]
      %v941 = vld [vmem:[%s446 + $0x78] sm:$0xff]
      %v942 = vld [vmem:[%s446 + $0x80] sm:$0xff]
      %v943 = vld [vmem:[%s446 + $0x90] sm:$0xff]
      %v944 = vld [vmem:[%s446 + $0x98] sm:$0xff]
      %v945 = vld [vmem:[%s446 + $0xa8] sm:$0xff]
      %v946 = vld [vmem:[%s446 + $0xb0] sm:$0xff]
      %v947 = vld [vmem:[%s446 + $0xc0] sm:$0xff]
      %v948 = vld [vmem:[%s446 + $0xc8] sm:$0xff]
      %v949 = vld [vmem:[%s446 + $0xd8] sm:$0xff]
      %v950 = vld [vmem:[%s446 + $0xe0] sm:$0xff]
      %v951 = vpack.c.bf16 %v932, %v931
      %v952 = vpack.c.bf16 %v934, %v933
      %v953 = vpack.c.bf16 %v936, %v935
      %v954 = vpack.c.bf16 %v938, %v937
      %v955 = vpack.c.bf16 %v940, %v939
      %v956 = vpack.c.bf16 %v942, %v941
      %v957 = vpack.c.bf16 %v944, %v943
      %v958 = vpack.c.bf16 %v946, %v945
      %v959 = vpack.c.bf16 %v948, %v947
      %v960 = vpack.c.bf16 %v950, %v949
      %961 = vst.msk [vmem:[#allocation4] sm:$0xff] %vm391, %v951
      %962 = vst.msk [vmem:[#allocation4 + $0x10] sm:$0xff] %vm391, %v952
      %963 = vst.msk [vmem:[#allocation4 + $0x20] sm:$0xff] %vm391, %v953
      %964 = vst.msk [vmem:[#allocation4 + $0x30] sm:$0xff] %vm391, %v954
      %965 = vst.msk [vmem:[#allocation4 + $0x40] sm:$0xff] %vm391, %v955
      %966 = vst.msk [vmem:[#allocation4 + $0x50] sm:$0xff] %vm391, %v956
      %967 = vst.msk [vmem:[#allocation4 + $0x60] sm:$0xff] %vm391, %v957
      %968 = vst.msk [vmem:[#allocation4 + $0x70] sm:$0xff] %vm391, %v958
      %969 = vst.msk [vmem:[#allocation4 + $0x80] sm:$0xff] %vm391, %v959
      %970 = vst.msk [vmem:[#allocation4 + $0x90] sm:$0xff] %vm391, %v960
      %v971 = vld [vmem:[%s446 + $0x1] sm:$0xff]
      %v972 = vld [vmem:[%s446 + $0x9] sm:$0xff]
      %v973 = vld [vmem:[%s446 + $0x19] sm:$0xff]
      %v974 = vld [vmem:[%s446 + $0x21] sm:$0xff]
      %v975 = vld [vmem:[%s446 + $0x31] sm:$0xff]
      %v976 = vld [vmem:[%s446 + $0x39] sm:$0xff]
      %v977 = vld [vmem:[%s446 + $0x49] sm:$0xff]
      %v978 = vld [vmem:[%s446 + $0x51] sm:$0xff]
      %v979 = vld [vmem:[%s446 + $0x61] sm:$0xff]
      %v980 = vld [vmem:[%s446 + $0x69] sm:$0xff]
      %v981 = vld [vmem:[%s446 + $0x79] sm:$0xff]
      %v982 = vld [vmem:[%s446 + $0x81] sm:$0xff]
      %v983 = vld [vmem:[%s446 + $0x91] sm:$0xff]
      %v984 = vld [vmem:[%s446 + $0x99] sm:$0xff]
      %v985 = vld [vmem:[%s446 + $0xa9] sm:$0xff]
      %v986 = vld [vmem:[%s446 + $0xb1] sm:$0xff]
      %v987 = vld [vmem:[%s446 + $0xc1] sm:$0xff]
      %v988 = vld [vmem:[%s446 + $0xc9] sm:$0xff]
      %v989 = vld [vmem:[%s446 + $0xd9] sm:$0xff]
      %v990 = vld [vmem:[%s446 + $0xe1] sm:$0xff]
      %v991 = vpack.c.bf16 %v972, %v971
      %v992 = vpack.c.bf16 %v974, %v973
      %v993 = vpack.c.bf16 %v976, %v975
      %v994 = vpack.c.bf16 %v978, %v977
      %v995 = vpack.c.bf16 %v980, %v979
      %v996 = vpack.c.bf16 %v982, %v981
      %v997 = vpack.c.bf16 %v984, %v983
      %v998 = vpack.c.bf16 %v986, %v985
      %v999 = vpack.c.bf16 %v988, %v987
      %v1000 = vpack.c.bf16 %v990, %v989
      %1011 = vrot.lane.b32.xlu0 %v991, 64
      %v1012 = vpop.permute.xlu0 %1011
      %1013 = vrot.lane.b32.xlu0 %v992, 64
      %v1014 = vpop.permute.xlu0 %1013
      %1015 = vrot.lane.b32.xlu0 %v993, 64
      %v1016 = vpop.permute.xlu0 %1015
      %1017 = vrot.lane.b32.xlu0 %v994, 64
      %v1018 = vpop.permute.xlu0 %1017
      %1019 = vrot.lane.b32.xlu0 %v995, 64
      %v1020 = vpop.permute.xlu0 %1019
      %1021 = vrot.lane.b32.xlu0 %v996, 64
      %v1022 = vpop.permute.xlu0 %1021
      %1023 = vrot.lane.b32.xlu0 %v997, 64
      %v1024 = vpop.permute.xlu0 %1023
      %1025 = vrot.lane.b32.xlu0 %v998, 64
      %v1026 = vpop.permute.xlu0 %1025
      %1027 = vrot.lane.b32.xlu0 %v999, 64
      %v1028 = vpop.permute.xlu0 %1027
      %1029 = vrot.lane.b32.xlu0 %v1000, 64
      %v1030 = vpop.permute.xlu0 %1029
      %1041 = vst.msk [vmem:[#allocation4] sm:$0xff] %vm601, %v1012
      %1042 = vst.msk [vmem:[#allocation4 + $0x10] sm:$0xff] %vm601, %v1014
      %1043 = vst.msk [vmem:[#allocation4 + $0x20] sm:$0xff] %vm601, %v1016
      %1044 = vst.msk [vmem:[#allocation4 + $0x30] sm:$0xff] %vm601, %v1018
      %1045 = vst.msk [vmem:[#allocation4 + $0x40] sm:$0xff] %vm601, %v1020
      %1046 = vst.msk [vmem:[#allocation4 + $0x50] sm:$0xff] %vm601, %v1022
      %1047 = vst.msk [vmem:[#allocation4 + $0x60] sm:$0xff] %vm601, %v1024
      %1048 = vst.msk [vmem:[#allocation4 + $0x70] sm:$0xff] %vm601, %v1026
      %1049 = vst.msk [vmem:[#allocation4 + $0x80] sm:$0xff] %vm601, %v1028
      %1050 = vst.msk [vmem:[#allocation4 + $0x90] sm:$0xff] %vm601, %v1030
      %v1051 = vld [vmem:[%s446 + $0x2] sm:$0xff]
      %v1052 = vld [vmem:[%s446 + $0xa] sm:$0xff]
      %v1053 = vld [vmem:[%s446 + $0x1a] sm:$0xff]
      %v1054 = vld [vmem:[%s446 + $0x22] sm:$0xff]
      %v1055 = vld [vmem:[%s446 + $0x32] sm:$0xff]
      %v1056 = vld [vmem:[%s446 + $0x3a] sm:$0xff]
      %v1057 = vld [vmem:[%s446 + $0x4a] sm:$0xff]
      %v1058 = vld [vmem:[%s446 + $0x52] sm:$0xff]
      %v1059 = vld [vmem:[%s446 + $0x62] sm:$0xff]
      %v1060 = vld [vmem:[%s446 + $0x6a] sm:$0xff]
      %v1061 = vld [vmem:[%s446 + $0x7a] sm:$0xff]
      %v1062 = vld [vmem:[%s446 + $0x82] sm:$0xff]
      %v1063 = vld [vmem:[%s446 + $0x92] sm:$0xff]
      %v1064 = vld [vmem:[%s446 + $0x9a] sm:$0xff]
      %v1065 = vld [vmem:[%s446 + $0xaa] sm:$0xff]
      %v1066 = vld [vmem:[%s446 + $0xb2] sm:$0xff]
      %v1067 = vld [vmem:[%s446 + $0xc2] sm:$0xff]
      %v1068 = vld [vmem:[%s446 + $0xca] sm:$0xff]
      %v1069 = vld [vmem:[%s446 + $0xda] sm:$0xff]
      %v1070 = vld [vmem:[%s446 + $0xe2] sm:$0xff]
      %v1071 = vpack.c.bf16 %v1052, %v1051
      %v1072 = vpack.c.bf16 %v1054, %v1053
      %v1073 = vpack.c.bf16 %v1056, %v1055
      %v1074 = vpack.c.bf16 %v1058, %v1057
      %v1075 = vpack.c.bf16 %v1060, %v1059
      %v1076 = vpack.c.bf16 %v1062, %v1061
      %v1077 = vpack.c.bf16 %v1064, %v1063
      %v1078 = vpack.c.bf16 %v1066, %v1065
      %v1079 = vpack.c.bf16 %v1068, %v1067
      %v1080 = vpack.c.bf16 %v1070, %v1069
      %1081 = vst.msk [vmem:[#allocation4 + $0x8] sm:$0xff] %vm391, %v1071
      %1082 = vst.msk [vmem:[#allocation4 + $0x18] sm:$0xff] %vm391, %v1072
      %1083 = vst.msk [vmem:[#allocation4 + $0x28] sm:$0xff] %vm391, %v1073
      %1084 = vst.msk [vmem:[#allocation4 + $0x38] sm:$0xff] %vm391, %v1074
      %1085 = vst.msk [vmem:[#allocation4 + $0x48] sm:$0xff] %vm391, %v1075
      %1086 = vst.msk [vmem:[#allocation4 + $0x58] sm:$0xff] %vm391, %v1076
      %1087 = vst.msk [vmem:[#allocation4 + $0x68] sm:$0xff] %vm391, %v1077
      %1088 = vst.msk [vmem:[#allocation4 + $0x78] sm:$0xff] %vm391, %v1078
      %1089 = vst.msk [vmem:[#allocation4 + $0x88] sm:$0xff] %vm391, %v1079
      %1090 = vst.msk [vmem:[#allocation4 + $0x98] sm:$0xff] %vm391, %v1080
      %v1091 = vld [vmem:[#allocation4] sm:$0xff]
      %v1092 = vld [vmem:[#allocation4 + $0x8] sm:$0xff]
      %v1093 = vld [vmem:[#allocation4 + $0x10] sm:$0xff]
      %v1094 = vld [vmem:[#allocation4 + $0x18] sm:$0xff]
      %v1095 = vld [vmem:[#allocation4 + $0x20] sm:$0xff]
      %v1096 = vld [vmem:[#allocation4 + $0x28] sm:$0xff]
      %v1097 = vld [vmem:[#allocation4 + $0x30] sm:$0xff]
      %v1098 = vld [vmem:[#allocation4 + $0x38] sm:$0xff]
      %v1099 = vld [vmem:[#allocation4 + $0x40] sm:$0xff]
      %v1100 = vld [vmem:[#allocation4 + $0x48] sm:$0xff]
      %v1101 = vld [vmem:[#allocation4 + $0x50] sm:$0xff]
      %v1102 = vld [vmem:[#allocation4 + $0x58] sm:$0xff]
      %v1103 = vld [vmem:[#allocation4 + $0x60] sm:$0xff]
      %v1104 = vld [vmem:[#allocation4 + $0x68] sm:$0xff]
      %v1105 = vld [vmem:[#allocation4 + $0x70] sm:$0xff]
      %v1106 = vld [vmem:[#allocation4 + $0x78] sm:$0xff]
      %v1107 = vld [vmem:[#allocation4 + $0x80] sm:$0xff]
      %v1108 = vld [vmem:[#allocation4 + $0x88] sm:$0xff]
      %v1109 = vld [vmem:[#allocation4 + $0x90] sm:$0xff]
      %v1110 = vld [vmem:[#allocation4 + $0x98] sm:$0xff]
      %s1111 = scalar_lea.vmem %s1, 96
      %v1112 = vld [vmem:[%s1111] sm:$0xf]
      %v1113 = vld [vmem:[%s1111 + $0x4] sm:$0xf]
      %v1114 = vld [vmem:[%s1111 + $0x8] sm:$0xf]
      %v1115 = vld [vmem:[%s1111 + $0xc] sm:$0xf]
      %v1116 = vld [vmem:[%s1111 + $0x10] sm:$0xf]
      %v1117 = vld [vmem:[%s1111 + $0x14] sm:$0xf]
      %v1118 = vld [vmem:[%s1111 + $0x18] sm:$0xf]
      %v1119 = vld [vmem:[%s1111 + $0x1c] sm:$0xf]
      %v1120 = vld [vmem:[%s1111 + $0x20] sm:$0xf]
      %v1121 = vld [vmem:[%s1111 + $0x24] sm:$0xf]
      %v1122 = vld [vmem:[%s1111 + $0x28] sm:$0xf]
      %v1123 = vld [vmem:[%s1111 + $0x2c] sm:$0xf]
      %v1124 = vld [vmem:[%s1111 + $0x30] sm:$0xf]
      %v1125 = vld [vmem:[%s1111 + $0x34] sm:$0xf]
      %v1126 = vld [vmem:[%s1111 + $0x38] sm:$0xf]
      %v1127 = vld [vmem:[%s1111 + $0x3c] sm:$0xf]
      %v1128 = vld [vmem:[%s1111 + $0x40] sm:$0xf]
      %v1129 = vld [vmem:[%s1111 + $0x44] sm:$0xf]
      %v1130 = vld [vmem:[%s1111 + $0x48] sm:$0xf]
      %v1131 = vld [vmem:[%s1111 + $0x4c] sm:$0xf]
      %v1132 = vld [vmem:[%s1111 + $0x50] sm:$0xf]
      %v1133 = vld [vmem:[%s1111 + $0x54] sm:$0xf]
      %v1134 = vld [vmem:[%s1111 + $0x58] sm:$0xf]
      %v1135 = vld [vmem:[%s1111 + $0x5c] sm:$0xf]
      %v1160 = vunpack.c.l.b16 %v1112
      %v1161 = vunpack.c.l.b16 %v1113
      %v1162 = vunpack.c.l.b16 %v1114
      %v1163 = vunpack.c.l.b16 %v1115
      %v1164 = vunpack.c.l.b16 %v1116
      %v1165 = vunpack.c.l.b16 %v1117
      %v1166 = vunpack.c.l.b16 %v1118
      %v1167 = vunpack.c.l.b16 %v1119
      %v1168 = vunpack.c.l.b16 %v1120
      %v1169 = vunpack.c.l.b16 %v1121
      %v1170 = vunpack.c.l.b16 %v1122
      %v1171 = vunpack.c.l.b16 %v1123
      %v1172 = vunpack.c.l.b16 %v1124
      %v1173 = vunpack.c.l.b16 %v1125
      %v1174 = vunpack.c.l.b16 %v1126
      %v1175 = vunpack.c.l.b16 %v1127
      %v1176 = vunpack.c.l.b16 %v1128
      %v1177 = vunpack.c.l.b16 %v1129
      %v1178 = vunpack.c.l.b16 %v1130
      %v1179 = vunpack.c.l.b16 %v1131
      %v1180 = vunpack.c.l.b16 %v1132
      %v1181 = vunpack.c.l.b16 %v1133
      %v1182 = vunpack.c.l.b16 %v1134
      %v1183 = vunpack.c.l.b16 %v1135
      %v1184 = vpack.c.b16 %v1161, %v1160
      %v1185 = vpack.c.b16 %v1163, %v1162
      %v1186 = vpack.c.b16 %v1165, %v1164
      %v1187 = vpack.c.b16 %v1167, %v1166
      %v1188 = vpack.c.b16 %v1169, %v1168
      %v1189 = vpack.c.b16 %v1171, %v1170
      %v1190 = vpack.c.b16 %v1173, %v1172
      %v1191 = vpack.c.b16 %v1175, %v1174
      %v1192 = vpack.c.b16 %v1177, %v1176
      %v1193 = vpack.c.b16 %v1179, %v1178
      %v1194 = vpack.c.b16 %v1181, %v1180
      %v1195 = vpack.c.b16 %v1183, %v1182
      %v1209 = vsel %vm391, %v1092, 0
      %v1212 = vsel %vm391, %v1094, 0
      %v1215 = vsel %vm391, %v1096, 0
      %v1218 = vsel %vm391, %v1098, 0
      %v1221 = vsel %vm391, %v1100, 0
      %v1224 = vsel %vm391, %v1102, 0
      %v1227 = vsel %vm391, %v1104, 0
      %v1230 = vsel %vm391, %v1106, 0
      %v1233 = vsel %vm391, %v1108, 0
      %v1236 = vsel %vm391, %v1110, 0
      %1238 = vmatprep.subr.bf16.mxu0 0
      %1239 = vmatpush1.bf16.msra.mxu0 %v1184
      %1240 = vmatprep.subr.bf16.mxu0 0
      %1241 = vmatpush1.bf16.msra.mxu0 %v1185
      %1242 = vmatprep.subr.bf16.mxu0 0
      %1243 = vmatpush1.bf16.msra.mxu0 %v1186
      %1244 = vmatprep.subr.bf16.mxu0 0
      %1245 = vmatpush1.bf16.msra.mxu0 %v1187
      %1246 = vmatprep.subr.bf16.mxu0 0
      %1247 = vmatpush1.bf16.msra.mxu0 %v1188
      %1248 = vmatprep.subr.bf16.mxu0 0
      %1249 = vmatpush1.bf16.msra.mxu0 %v1189
      %1250 = vmatprep.subr.bf16.mxu0 0
      %1251 = vmatpush1.bf16.msra.mxu0 %v1190
      %1252 = vmatprep.subr.bf16.mxu0 0
      %1253 = vmatpush1.bf16.msra.mxu0 %v1191
      %1254 = vmatprep.subr.bf16.mxu0 0
      %1255 = vmatpush1.bf16.msra.mxu0 %v1192
      %1256 = vmatprep.subr.bf16.mxu0 0
      %1257 = vmatpush1.bf16.msra.mxu0 %v1193
      %1258 = vmatprep.subr.bf16.mxu0 0
      %1259 = vmatpush1.bf16.msra.mxu0 %v1194
      %1260 = vmatprep.subr.bf16.mxu0 0
      %1261 = vmatpush1.bf16.msra.mxu0 %v1195
      %1262 = vmatprep.subr.bf16.mxu0 0
      %1263 = vmatpush1.bf16.msra.mxu0 0
      %1264 = vmatprep.subr.bf16.mxu0 0
      %1265 = vmatpush1.bf16.msra.mxu0 0
      %1266 = vmatprep.subr.bf16.mxu0 0
      %1267 = vmatpush1.bf16.msra.mxu0 0
      %1268 = vmatprep.subr.bf16.mxu0 0
      %1269 = vmatpush1.bf16.msra.mxu0 0
      %1270 = vmatprep.mubr.bf16.mxu0 %v1209
      %1271 = vmatmul.mubr.bf16.gmra.mrb[0].mxu0 %v1091
      %v1272 = vpop.f32.mrb[0].mxu0
      %v1273 = vadd.f32 0.0, %v1272
      %v1274 = vpop.f32.mrb[0].mxu0
      %v1275 = vpop.f32.mrb[0].mxu0
      %v1276 = vadd.f32 0.0, %v1275
      %v1277 = vpop.f32.mrb[0].mxu0
      %1278 = vmatprep.mubr.bf16.mxu0 %v1212
      %1279 = vmatmul.mubr.bf16.gmra.mrb[0].mxu0 %v1093
      %v1280 = vpop.f32.mrb[0].mxu0
      %v1281 = vadd.f32 0.0, %v1280
      %v1282 = vpop.f32.mrb[0].mxu0
      %v1283 = vpop.f32.mrb[0].mxu0
      %v1284 = vadd.f32 0.0, %v1283
      %v1285 = vpop.f32.mrb[0].mxu0
      %1286 = vmatprep.mubr.bf16.mxu0 %v1215
      %1287 = vmatmul.mubr.bf16.gmra.mrb[0].mxu0 %v1095
      %v1288 = vpop.f32.mrb[0].mxu0
      %v1289 = vadd.f32 0.0, %v1288
      %v1290 = vpop.f32.mrb[0].mxu0
      %v1291 = vpop.f32.mrb[0].mxu0
      %v1292 = vadd.f32 0.0, %v1291
      %v1293 = vpop.f32.mrb[0].mxu0
      %1294 = vmatprep.mubr.bf16.mxu0 %v1218
      %1295 = vmatmul.mubr.bf16.gmra.mrb[0].mxu0 %v1097
      %v1296 = vpop.f32.mrb[0].mxu0
      %v1297 = vadd.f32 0.0, %v1296
      %v1298 = vpop.f32.mrb[0].mxu0
      %v1299 = vpop.f32.mrb[0].mxu0
      %v1300 = vadd.f32 0.0, %v1299
      %v1301 = vpop.f32.mrb[0].mxu0
      %1302 = vmatprep.mubr.bf16.mxu0 %v1221
      %1303 = vmatmul.mubr.bf16.gmra.mrb[0].mxu0 %v1099
      %v1304 = vpop.f32.mrb[0].mxu0
      %v1305 = vadd.f32 0.0, %v1304
      %v1306 = vpop.f32.mrb[0].mxu0
      %v1307 = vpop.f32.mrb[0].mxu0
      %v1308 = vadd.f32 0.0, %v1307
      %v1309 = vpop.f32.mrb[0].mxu0
      %1310 = vmatprep.mubr.bf16.mxu0 %v1224
      %1311 = vmatmul.mubr.bf16.gmra.mrb[0].mxu0 %v1101
      %v1312 = vpop.f32.mrb[0].mxu0
      %v1313 = vadd.f32 0.0, %v1312
      %v1314 = vpop.f32.mrb[0].mxu0
      %v1315 = vpop.f32.mrb[0].mxu0
      %v1316 = vadd.f32 0.0, %v1315
      %v1317 = vpop.f32.mrb[0].mxu0
      %1318 = vmatprep.mubr.bf16.mxu0 %v1227
      %1319 = vmatmul.mubr.bf16.gmra.mrb[0].mxu0 %v1103
      %v1320 = vpop.f32.mrb[0].mxu0
      %v1321 = vadd.f32 0.0, %v1320
      %v1322 = vpop.f32.mrb[0].mxu0
      %v1323 = vpop.f32.mrb[0].mxu0
      %v1324 = vadd.f32 0.0, %v1323
      %v1325 = vpop.f32.mrb[0].mxu0
      %1326 = vmatprep.mubr.bf16.mxu0 %v1230
      %1327 = vmatmul.mubr.bf16.gmra.mrb[0].mxu0 %v1105
      %v1328 = vpop.f32.mrb[0].mxu0
      %v1329 = vadd.f32 0.0, %v1328
      %v1330 = vpop.f32.mrb[0].mxu0
      %v1331 = vpop.f32.mrb[0].mxu0
      %v1332 = vadd.f32 0.0, %v1331
      %v1333 = vpop.f32.mrb[0].mxu0
      %1334 = vmatprep.mubr.bf16.mxu0 %v1233
      %1335 = vmatmul.mubr.bf16.gmra.mrb[0].mxu0 %v1107
      %v1336 = vpop.f32.mrb[0].mxu0
      %v1337 = vadd.f32 0.0, %v1336
      %v1338 = vpop.f32.mrb[0].mxu0
      %v1339 = vpop.f32.mrb[0].mxu0
      %v1340 = vadd.f32 0.0, %v1339
      %v1341 = vpop.f32.mrb[0].mxu0
      %1342 = vmatprep.mubr.bf16.mxu0 %v1236
      %1343 = vmatmul.mubr.bf16.gmra.mrb[0].mxu0 %v1109
      %v1344 = vpop.f32.mrb[0].mxu0
      %v1345 = vadd.f32 0.0, %v1344
      %v1346 = vpop.f32.mrb[0].mxu0
      %v1347 = vpop.f32.mrb[0].mxu0
      %v1348 = vadd.f32 0.0, %v1347
      %v1349 = vpop.f32.mrb[0].mxu0
      %1350 = vdwg.mxu0
      %v1351 = vld [vmem:[#allocation5] sm:$0xff]
      %v1352 = vld [vmem:[#allocation5 + $0x8] sm:$0xff]
      %v1353 = vld [vmem:[#allocation5 + $0x10] sm:$0xff]
      %v1354 = vld [vmem:[#allocation5 + $0x18] sm:$0xff]
      %v1355 = vld [vmem:[#allocation5 + $0x20] sm:$0xff]
      %v1356 = vld [vmem:[#allocation5 + $0x28] sm:$0xff]
      %v1357 = vld [vmem:[#allocation5 + $0x30] sm:$0xff]
      %v1358 = vld [vmem:[#allocation5 + $0x38] sm:$0xff]
      %v1359 = vld [vmem:[#allocation5 + $0x40] sm:$0xff]
      %v1360 = vld [vmem:[#allocation5 + $0x48] sm:$0xff]
      %v1361 = vld [vmem:[#allocation5 + $0x50] sm:$0xff]
      %v1362 = vld [vmem:[#allocation5 + $0x58] sm:$0xff]
      %v1363 = vld [vmem:[#allocation5 + $0x60] sm:$0xff]
      %v1364 = vld [vmem:[#allocation5 + $0x68] sm:$0xff]
      %v1365 = vld [vmem:[#allocation5 + $0x70] sm:$0xff]
      %v1366 = vld [vmem:[#allocation5 + $0x78] sm:$0xff]
      %v1367 = vld [vmem:[#allocation5 + $0x80] sm:$0xff]
      %v1368 = vld [vmem:[#allocation5 + $0x88] sm:$0xff]
      %v1369 = vld [vmem:[#allocation5 + $0x90] sm:$0xff]
      %v1370 = vld [vmem:[#allocation5 + $0x98] sm:$0xff]
      %v1371 = vadd.f32 %v1351, %v1273
      %v1372 = vadd.f32 %v1352, %v1276
      %v1373 = vadd.f32 %v1353, %v1281
      %v1374 = vadd.f32 %v1354, %v1284
      %v1375 = vadd.f32 %v1355, %v1289
      %v1376 = vadd.f32 %v1356, %v1292
      %v1377 = vadd.f32 %v1357, %v1297
      %v1378 = vadd.f32 %v1358, %v1300
      %v1379 = vadd.f32 %v1359, %v1305
      %v1380 = vadd.f32 %v1360, %v1308
      %v1381 = vadd.f32 %v1361, %v1313
      %v1382 = vadd.f32 %v1362, %v1316
      %v1383 = vadd.f32 %v1363, %v1321
      %v1384 = vadd.f32 %v1364, %v1324
      %v1385 = vadd.f32 %v1365, %v1329
      %v1386 = vadd.f32 %v1366, %v1332
      %v1387 = vadd.f32 %v1367, %v1337
      %v1388 = vadd.f32 %v1368, %v1340
      %v1389 = vadd.f32 %v1369, %v1345
      %v1390 = vadd.f32 %v1370, %v1348
      %1391 = vst.msk [vmem:[#allocation5] sm:$0xff] %vm391, %v1371
      %1392 = vst.msk [vmem:[#allocation5 + $0x8] sm:$0xff] %vm391, %v1372
      %1393 = vst.msk [vmem:[#allocation5 + $0x10] sm:$0xff] %vm391, %v1373
      %1394 = vst.msk [vmem:[#allocation5 + $0x18] sm:$0xff] %vm391, %v1374
      %1395 = vst.msk [vmem:[#allocation5 + $0x20] sm:$0xff] %vm391, %v1375
      %1396 = vst.msk [vmem:[#allocation5 + $0x28] sm:$0xff] %vm391, %v1376
      %1397 = vst.msk [vmem:[#allocation5 + $0x30] sm:$0xff] %vm391, %v1377
      %1398 = vst.msk [vmem:[#allocation5 + $0x38] sm:$0xff] %vm391, %v1378
      %1399 = vst.msk [vmem:[#allocation5 + $0x40] sm:$0xff] %vm391, %v1379
      %1400 = vst.msk [vmem:[#allocation5 + $0x48] sm:$0xff] %vm391, %v1380
      %1401 = vst.msk [vmem:[#allocation5 + $0x50] sm:$0xff] %vm391, %v1381
      %1402 = vst.msk [vmem:[#allocation5 + $0x58] sm:$0xff] %vm391, %v1382
      %1403 = vst.msk [vmem:[#allocation5 + $0x60] sm:$0xff] %vm391, %v1383
      %1404 = vst.msk [vmem:[#allocation5 + $0x68] sm:$0xff] %vm391, %v1384
      %1405 = vst.msk [vmem:[#allocation5 + $0x70] sm:$0xff] %vm391, %v1385
      %1406 = vst.msk [vmem:[#allocation5 + $0x78] sm:$0xff] %vm391, %v1386
      %1407 = vst.msk [vmem:[#allocation5 + $0x80] sm:$0xff] %vm391, %v1387
      %1408 = vst.msk [vmem:[#allocation5 + $0x88] sm:$0xff] %vm391, %v1388
      %1409 = vst.msk [vmem:[#allocation5 + $0x90] sm:$0xff] %vm391, %v1389
      %1410 = vst.msk [vmem:[#allocation5 + $0x98] sm:$0xff] %vm391, %v1390
      %v1411 = vld [vmem:[%s390] sm:$0xff]
      %v1412 = vld [vmem:[%s390 + $0x8] sm:$0xff]
      %v1413 = vld [vmem:[%s390 + $0x18] sm:$0xff]
      %v1414 = vld [vmem:[%s390 + $0x20] sm:$0xff]
      %v1415 = vld [vmem:[%s390 + $0x30] sm:$0xff]
      %v1416 = vld [vmem:[%s390 + $0x38] sm:$0xff]
      %v1417 = vld [vmem:[%s390 + $0x48] sm:$0xff]
      %v1418 = vld [vmem:[%s390 + $0x50] sm:$0xff]
      %v1419 = vld [vmem:[%s390 + $0x60] sm:$0xff]
      %v1420 = vld [vmem:[%s390 + $0x68] sm:$0xff]
      %v1421 = vld [vmem:[%s390 + $0x78] sm:$0xff]
      %v1422 = vld [vmem:[%s390 + $0x80] sm:$0xff]
      %v1423 = vld [vmem:[%s390 + $0x90] sm:$0xff]
      %v1424 = vld [vmem:[%s390 + $0x98] sm:$0xff]
      %v1425 = vld [vmem:[%s390 + $0xa8] sm:$0xff]
      %v1426 = vld [vmem:[%s390 + $0xb0] sm:$0xff]
      %v1427 = vld [vmem:[%s390 + $0xc0] sm:$0xff]
      %v1428 = vld [vmem:[%s390 + $0xc8] sm:$0xff]
      %v1429 = vld [vmem:[%s390 + $0xd8] sm:$0xff]
      %v1430 = vld [vmem:[%s390 + $0xe0] sm:$0xff]
      %v1431 = vpack.c.bf16 %v1412, %v1411
      %v1432 = vpack.c.bf16 %v1414, %v1413
      %v1433 = vpack.c.bf16 %v1416, %v1415
      %v1434 = vpack.c.bf16 %v1418, %v1417
      %v1435 = vpack.c.bf16 %v1420, %v1419
      %v1436 = vpack.c.bf16 %v1422, %v1421
      %v1437 = vpack.c.bf16 %v1424, %v1423
      %v1438 = vpack.c.bf16 %v1426, %v1425
      %v1439 = vpack.c.bf16 %v1428, %v1427
      %v1440 = vpack.c.bf16 %v1430, %v1429
      %1441 = vst.msk [vmem:[#allocation4] sm:$0xff] %vm391, %v1431
      %1442 = vst.msk [vmem:[#allocation4 + $0x10] sm:$0xff] %vm391, %v1432
      %1443 = vst.msk [vmem:[#allocation4 + $0x20] sm:$0xff] %vm391, %v1433
      %1444 = vst.msk [vmem:[#allocation4 + $0x30] sm:$0xff] %vm391, %v1434
      %1445 = vst.msk [vmem:[#allocation4 + $0x40] sm:$0xff] %vm391, %v1435
      %1446 = vst.msk [vmem:[#allocation4 + $0x50] sm:$0xff] %vm391, %v1436
      %1447 = vst.msk [vmem:[#allocation4 + $0x60] sm:$0xff] %vm391, %v1437
      %1448 = vst.msk [vmem:[#allocation4 + $0x70] sm:$0xff] %vm391, %v1438
      %1449 = vst.msk [vmem:[#allocation4 + $0x80] sm:$0xff] %vm391, %v1439
      %1450 = vst.msk [vmem:[#allocation4 + $0x90] sm:$0xff] %vm391, %v1440
      %v1451 = vld [vmem:[%s390 + $0x1] sm:$0xff]
      %v1452 = vld [vmem:[%s390 + $0x9] sm:$0xff]
      %v1453 = vld [vmem:[%s390 + $0x19] sm:$0xff]
      %v1454 = vld [vmem:[%s390 + $0x21] sm:$0xff]
      %v1455 = vld [vmem:[%s390 + $0x31] sm:$0xff]
      %v1456 = vld [vmem:[%s390 + $0x39] sm:$0xff]
      %v1457 = vld [vmem:[%s390 + $0x49] sm:$0xff]
      %v1458 = vld [vmem:[%s390 + $0x51] sm:$0xff]
      %v1459 = vld [vmem:[%s390 + $0x61] sm:$0xff]
      %v1460 = vld [vmem:[%s390 + $0x69] sm:$0xff]
      %v1461 = vld [vmem:[%s390 + $0x79] sm:$0xff]
      %v1462 = vld [vmem:[%s390 + $0x81] sm:$0xff]
      %v1463 = vld [vmem:[%s390 + $0x91] sm:$0xff]
      %v1464 = vld [vmem:[%s390 + $0x99] sm:$0xff]
      %v1465 = vld [vmem:[%s390 + $0xa9] sm:$0xff]
      %v1466 = vld [vmem:[%s390 + $0xb1] sm:$0xff]
      %v1467 = vld [vmem:[%s390 + $0xc1] sm:$0xff]
      %v1468 = vld [vmem:[%s390 + $0xc9] sm:$0xff]
      %v1469 = vld [vmem:[%s390 + $0xd9] sm:$0xff]
      %v1470 = vld [vmem:[%s390 + $0xe1] sm:$0xff]
      %v1471 = vpack.c.bf16 %v1452, %v1451
      %v1472 = vpack.c.bf16 %v1454, %v1453
      %v1473 = vpack.c.bf16 %v1456, %v1455
      %v1474 = vpack.c.bf16 %v1458, %v1457
      %v1475 = vpack.c.bf16 %v1460, %v1459
      %v1476 = vpack.c.bf16 %v1462, %v1461
      %v1477 = vpack.c.bf16 %v1464, %v1463
      %v1478 = vpack.c.bf16 %v1466, %v1465
      %v1479 = vpack.c.bf16 %v1468, %v1467
      %v1480 = vpack.c.bf16 %v1470, %v1469
      %1491 = vrot.lane.b32.xlu0 %v1471, 64
      %v1492 = vpop.permute.xlu0 %1491
      %1493 = vrot.lane.b32.xlu0 %v1472, 64
      %v1494 = vpop.permute.xlu0 %1493
      %1495 = vrot.lane.b32.xlu0 %v1473, 64
      %v1496 = vpop.permute.xlu0 %1495
      %1497 = vrot.lane.b32.xlu0 %v1474, 64
      %v1498 = vpop.permute.xlu0 %1497
      %1499 = vrot.lane.b32.xlu0 %v1475, 64
      %v1500 = vpop.permute.xlu0 %1499
      %1501 = vrot.lane.b32.xlu0 %v1476, 64
      %v1502 = vpop.permute.xlu0 %1501
      %1503 = vrot.lane.b32.xlu0 %v1477, 64
      %v1504 = vpop.permute.xlu0 %1503
      %1505 = vrot.lane.b32.xlu0 %v1478, 64
      %v1506 = vpop.permute.xlu0 %1505
      %1507 = vrot.lane.b32.xlu0 %v1479, 64
      %v1508 = vpop.permute.xlu0 %1507
      %1509 = vrot.lane.b32.xlu0 %v1480, 64
      %v1510 = vpop.permute.xlu0 %1509
      %1521 = vst.msk [vmem:[#allocation4] sm:$0xff] %vm601, %v1492
      %1522 = vst.msk [vmem:[#allocation4 + $0x10] sm:$0xff] %vm601, %v1494
      %1523 = vst.msk [vmem:[#allocation4 + $0x20] sm:$0xff] %vm601, %v1496
      %1524 = vst.msk [vmem:[#allocation4 + $0x30] sm:$0xff] %vm601, %v1498
      %1525 = vst.msk [vmem:[#allocation4 + $0x40] sm:$0xff] %vm601, %v1500
      %1526 = vst.msk [vmem:[#allocation4 + $0x50] sm:$0xff] %vm601, %v1502
      %1527 = vst.msk [vmem:[#allocation4 + $0x60] sm:$0xff] %vm601, %v1504
      %1528 = vst.msk [vmem:[#allocation4 + $0x70] sm:$0xff] %vm601, %v1506
      %1529 = vst.msk [vmem:[#allocation4 + $0x80] sm:$0xff] %vm601, %v1508
      %1530 = vst.msk [vmem:[#allocation4 + $0x90] sm:$0xff] %vm601, %v1510
      %v1531 = vld [vmem:[%s390 + $0x2] sm:$0xff]
      %v1532 = vld [vmem:[%s390 + $0xa] sm:$0xff]
      %v1533 = vld [vmem:[%s390 + $0x1a] sm:$0xff]
      %v1534 = vld [vmem:[%s390 + $0x22] sm:$0xff]
      %v1535 = vld [vmem:[%s390 + $0x32] sm:$0xff]
      %v1536 = vld [vmem:[%s390 + $0x3a] sm:$0xff]
      %v1537 = vld [vmem:[%s390 + $0x4a] sm:$0xff]
      %v1538 = vld [vmem:[%s390 + $0x52] sm:$0xff]
      %v1539 = vld [vmem:[%s390 + $0x62] sm:$0xff]
      %v1540 = vld [vmem:[%s390 + $0x6a] sm:$0xff]
      %v1541 = vld [vmem:[%s390 + $0x7a] sm:$0xff]
      %v1542 = vld [vmem:[%s390 + $0x82] sm:$0xff]
      %v1543 = vld [vmem:[%s390 + $0x92] sm:$0xff]
      %v1544 = vld [vmem:[%s390 + $0x9a] sm:$0xff]
      %v1545 = vld [vmem:[%s390 + $0xaa] sm:$0xff]
      %v1546 = vld [vmem:[%s390 + $0xb2] sm:$0xff]
      %v1547 = vld [vmem:[%s390 + $0xc2] sm:$0xff]
      %v1548 = vld [vmem:[%s390 + $0xca] sm:$0xff]
      %v1549 = vld [vmem:[%s390 + $0xda] sm:$0xff]
      %v1550 = vld [vmem:[%s390 + $0xe2] sm:$0xff]
      %v1551 = vpack.c.bf16 %v1532, %v1531
      %v1552 = vpack.c.bf16 %v1534, %v1533
      %v1553 = vpack.c.bf16 %v1536, %v1535
      %v1554 = vpack.c.bf16 %v1538, %v1537
      %v1555 = vpack.c.bf16 %v1540, %v1539
      %v1556 = vpack.c.bf16 %v1542, %v1541
      %v1557 = vpack.c.bf16 %v1544, %v1543
      %v1558 = vpack.c.bf16 %v1546, %v1545
      %v1559 = vpack.c.bf16 %v1548, %v1547
      %v1560 = vpack.c.bf16 %v1550, %v1549
      %1561 = vst.msk [vmem:[#allocation4 + $0x8] sm:$0xff] %vm391, %v1551
      %1562 = vst.msk [vmem:[#allocation4 + $0x18] sm:$0xff] %vm391, %v1552
      %1563 = vst.msk [vmem:[#allocation4 + $0x28] sm:$0xff] %vm391, %v1553
      %1564 = vst.msk [vmem:[#allocation4 + $0x38] sm:$0xff] %vm391, %v1554
      %1565 = vst.msk [vmem:[#allocation4 + $0x48] sm:$0xff] %vm391, %v1555
      %1566 = vst.msk [vmem:[#allocation4 + $0x58] sm:$0xff] %vm391, %v1556
      %1567 = vst.msk [vmem:[#allocation4 + $0x68] sm:$0xff] %vm391, %v1557
      %1568 = vst.msk [vmem:[#allocation4 + $0x78] sm:$0xff] %vm391, %v1558
      %1569 = vst.msk [vmem:[#allocation4 + $0x88] sm:$0xff] %vm391, %v1559
      %1570 = vst.msk [vmem:[#allocation4 + $0x98] sm:$0xff] %vm391, %v1560
      %v1571 = vld [vmem:[#allocation4] sm:$0xff]
      %v1572 = vld [vmem:[#allocation4 + $0x8] sm:$0xff]
      %v1573 = vld [vmem:[#allocation4 + $0x10] sm:$0xff]
      %v1574 = vld [vmem:[#allocation4 + $0x18] sm:$0xff]
      %v1575 = vld [vmem:[#allocation4 + $0x20] sm:$0xff]
      %v1576 = vld [vmem:[#allocation4 + $0x28] sm:$0xff]
      %v1577 = vld [vmem:[#allocation4 + $0x30] sm:$0xff]
      %v1578 = vld [vmem:[#allocation4 + $0x38] sm:$0xff]
      %v1579 = vld [vmem:[#allocation4 + $0x40] sm:$0xff]
      %v1580 = vld [vmem:[#allocation4 + $0x48] sm:$0xff]
      %v1581 = vld [vmem:[#allocation4 + $0x50] sm:$0xff]
      %v1582 = vld [vmem:[#allocation4 + $0x58] sm:$0xff]
      %v1583 = vld [vmem:[#allocation4 + $0x60] sm:$0xff]
      %v1584 = vld [vmem:[#allocation4 + $0x68] sm:$0xff]
      %v1585 = vld [vmem:[#allocation4 + $0x70] sm:$0xff]
      %v1586 = vld [vmem:[#allocation4 + $0x78] sm:$0xff]
      %v1587 = vld [vmem:[#allocation4 + $0x80] sm:$0xff]
      %v1588 = vld [vmem:[#allocation4 + $0x88] sm:$0xff]
      %v1589 = vld [vmem:[#allocation4 + $0x90] sm:$0xff]
      %v1590 = vld [vmem:[#allocation4 + $0x98] sm:$0xff]
      %s1591 = scalar_lea.vmem %s1, 192
      %v1592 = vld [vmem:[%s1591] sm:$0xf]
      %v1593 = vld [vmem:[%s1591 + $0x4] sm:$0xf]
      %v1594 = vld [vmem:[%s1591 + $0x8] sm:$0xf]
      %v1595 = vld [vmem:[%s1591 + $0xc] sm:$0xf]
      %v1596 = vld [vmem:[%s1591 + $0x10] sm:$0xf]
      %v1597 = vld [vmem:[%s1591 + $0x14] sm:$0xf]
      %v1598 = vld [vmem:[%s1591 + $0x18] sm:$0xf]
      %v1599 = vld [vmem:[%s1591 + $0x1c] sm:$0xf]
      %v1600 = vld [vmem:[%s1591 + $0x20] sm:$0xf]
      %v1601 = vld [vmem:[%s1591 + $0x24] sm:$0xf]
      %v1602 = vld [vmem:[%s1591 + $0x28] sm:$0xf]
      %v1603 = vld [vmem:[%s1591 + $0x2c] sm:$0xf]
      %v1604 = vld [vmem:[%s1591 + $0x30] sm:$0xf]
      %v1605 = vld [vmem:[%s1591 + $0x34] sm:$0xf]
      %v1606 = vld [vmem:[%s1591 + $0x38] sm:$0xf]
      %v1607 = vld [vmem:[%s1591 + $0x3c] sm:$0xf]
      %v1608 = vld [vmem:[%s1591 + $0x40] sm:$0xf]
      %v1609 = vld [vmem:[%s1591 + $0x44] sm:$0xf]
      %v1610 = vld [vmem:[%s1591 + $0x48] sm:$0xf]
      %v1611 = vld [vmem:[%s1591 + $0x4c] sm:$0xf]
      %v1612 = vld [vmem:[%s1591 + $0x50] sm:$0xf]
      %v1613 = vld [vmem:[%s1591 + $0x54] sm:$0xf]
      %v1614 = vld [vmem:[%s1591 + $0x58] sm:$0xf]
      %v1615 = vld [vmem:[%s1591 + $0x5c] sm:$0xf]
      %v1640 = vunpack.c.l.b16 %v1592
      %v1641 = vunpack.c.l.b16 %v1593
      %v1642 = vunpack.c.l.b16 %v1594
      %v1643 = vunpack.c.l.b16 %v1595
      %v1644 = vunpack.c.l.b16 %v1596
      %v1645 = vunpack.c.l.b16 %v1597
      %v1646 = vunpack.c.l.b16 %v1598
      %v1647 = vunpack.c.l.b16 %v1599
      %v1648 = vunpack.c.l.b16 %v1600
      %v1649 = vunpack.c.l.b16 %v1601
      %v1650 = vunpack.c.l.b16 %v1602
      %v1651 = vunpack.c.l.b16 %v1603
      %v1652 = vunpack.c.l.b16 %v1604
      %v1653 = vunpack.c.l.b16 %v1605
      %v1654 = vunpack.c.l.b16 %v1606
      %v1655 = vunpack.c.l.b16 %v1607
      %v1656 = vunpack.c.l.b16 %v1608
      %v1657 = vunpack.c.l.b16 %v1609
      %v1658 = vunpack.c.l.b16 %v1610
      %v1659 = vunpack.c.l.b16 %v1611
      %v1660 = vunpack.c.l.b16 %v1612
      %v1661 = vunpack.c.l.b16 %v1613
      %v1662 = vunpack.c.l.b16 %v1614
      %v1663 = vunpack.c.l.b16 %v1615
      %v1664 = vpack.c.b16 %v1641, %v1640
      %v1665 = vpack.c.b16 %v1643, %v1642
      %v1666 = vpack.c.b16 %v1645, %v1644
      %v1667 = vpack.c.b16 %v1647, %v1646
      %v1668 = vpack.c.b16 %v1649, %v1648
      %v1669 = vpack.c.b16 %v1651, %v1650
      %v1670 = vpack.c.b16 %v1653, %v1652
      %v1671 = vpack.c.b16 %v1655, %v1654
      %v1672 = vpack.c.b16 %v1657, %v1656
      %v1673 = vpack.c.b16 %v1659, %v1658
      %v1674 = vpack.c.b16 %v1661, %v1660
      %v1675 = vpack.c.b16 %v1663, %v1662
      %v1689 = vsel %vm391, %v1572, 0
      %v1692 = vsel %vm391, %v1574, 0
      %v1695 = vsel %vm391, %v1576, 0
      %v1698 = vsel %vm391, %v1578, 0
      %v1701 = vsel %vm391, %v1580, 0
      %v1704 = vsel %vm391, %v1582, 0
      %v1707 = vsel %vm391, %v1584, 0
      %v1710 = vsel %vm391, %v1586, 0
      %v1713 = vsel %vm391, %v1588, 0
      %v1716 = vsel %vm391, %v1590, 0
      %1718 = vmatprep.subr.bf16.mxu0 0
      %1719 = vmatpush1.bf16.msra.mxu0 %v1664
      %1720 = vmatprep.subr.bf16.mxu0 0
      %1721 = vmatpush1.bf16.msra.mxu0 %v1665
      %1722 = vmatprep.subr.bf16.mxu0 0
      %1723 = vmatpush1.bf16.msra.mxu0 %v1666
      %1724 = vmatprep.subr.bf16.mxu0 0
      %1725 = vmatpush1.bf16.msra.mxu0 %v1667
      %1726 = vmatprep.subr.bf16.mxu0 0
      %1727 = vmatpush1.bf16.msra.mxu0 %v1668
      %1728 = vmatprep.subr.bf16.mxu0 0
      %1729 = vmatpush1.bf16.msra.mxu0 %v1669
      %1730 = vmatprep.subr.bf16.mxu0 0
      %1731 = vmatpush1.bf16.msra.mxu0 %v1670
      %1732 = vmatprep.subr.bf16.mxu0 0
      %1733 = vmatpush1.bf16.msra.mxu0 %v1671
      %1734 = vmatprep.subr.bf16.mxu0 0
      %1735 = vmatpush1.bf16.msra.mxu0 %v1672
      %1736 = vmatprep.subr.bf16.mxu0 0
      %1737 = vmatpush1.bf16.msra.mxu0 %v1673
      %1738 = vmatprep.subr.bf16.mxu0 0
      %1739 = vmatpush1.bf16.msra.mxu0 %v1674
      %1740 = vmatprep.subr.bf16.mxu0 0
      %1741 = vmatpush1.bf16.msra.mxu0 %v1675
      %1742 = vmatprep.subr.bf16.mxu0 0
      %1743 = vmatpush1.bf16.msra.mxu0 0
      %1744 = vmatprep.subr.bf16.mxu0 0
      %1745 = vmatpush1.bf16.msra.mxu0 0
      %1746 = vmatprep.subr.bf16.mxu0 0
      %1747 = vmatpush1.bf16.msra.mxu0 0
      %1748 = vmatprep.subr.bf16.mxu0 0
      %1749 = vmatpush1.bf16.msra.mxu0 0
      %1750 = vmatprep.mubr.bf16.mxu0 %v1689
      %1751 = vmatmul.mubr.bf16.gmra.mrb[0].mxu0 %v1571
      %v1752 = vpop.f32.mrb[0].mxu0
      %v1753 = vadd.f32 0.0, %v1752
      %v1754 = vpop.f32.mrb[0].mxu0
      %v1755 = vpop.f32.mrb[0].mxu0
      %v1756 = vadd.f32 0.0, %v1755
      %v1757 = vpop.f32.mrb[0].mxu0
      %1758 = vmatprep.mubr.bf16.mxu0 %v1692
      %1759 = vmatmul.mubr.bf16.gmra.mrb[0].mxu0 %v1573
      %v1760 = vpop.f32.mrb[0].mxu0
      %v1761 = vadd.f32 0.0, %v1760
      %v1762 = vpop.f32.mrb[0].mxu0
      %v1763 = vpop.f32.mrb[0].mxu0
      %v1764 = vadd.f32 0.0, %v1763
      %v1765 = vpop.f32.mrb[0].mxu0
      %1766 = vmatprep.mubr.bf16.mxu0 %v1695
      %1767 = vmatmul.mubr.bf16.gmra.mrb[0].mxu0 %v1575
      %v1768 = vpop.f32.mrb[0].mxu0
      %v1769 = vadd.f32 0.0, %v1768
      %v1770 = vpop.f32.mrb[0].mxu0
      %v1771 = vpop.f32.mrb[0].mxu0
      %v1772 = vadd.f32 0.0, %v1771
      %v1773 = vpop.f32.mrb[0].mxu0
      %1774 = vmatprep.mubr.bf16.mxu0 %v1698
      %1775 = vmatmul.mubr.bf16.gmra.mrb[0].mxu0 %v1577
      %v1776 = vpop.f32.mrb[0].mxu0
      %v1777 = vadd.f32 0.0, %v1776
      %v1778 = vpop.f32.mrb[0].mxu0
      %v1779 = vpop.f32.mrb[0].mxu0
      %v1780 = vadd.f32 0.0, %v1779
      %v1781 = vpop.f32.mrb[0].mxu0
      %1782 = vmatprep.mubr.bf16.mxu0 %v1701
      %1783 = vmatmul.mubr.bf16.gmra.mrb[0].mxu0 %v1579
      %v1784 = vpop.f32.mrb[0].mxu0
      %v1785 = vadd.f32 0.0, %v1784
      %v1786 = vpop.f32.mrb[0].mxu0
      %v1787 = vpop.f32.mrb[0].mxu0
      %v1788 = vadd.f32 0.0, %v1787
      %v1789 = vpop.f32.mrb[0].mxu0
      %1790 = vmatprep.mubr.bf16.mxu0 %v1704
      %1791 = vmatmul.mubr.bf16.gmra.mrb[0].mxu0 %v1581
      %v1792 = vpop.f32.mrb[0].mxu0
      %v1793 = vadd.f32 0.0, %v1792
      %v1794 = vpop.f32.mrb[0].mxu0
      %v1795 = vpop.f32.mrb[0].mxu0
      %v1796 = vadd.f32 0.0, %v1795
      %v1797 = vpop.f32.mrb[0].mxu0
      %1798 = vmatprep.mubr.bf16.mxu0 %v1707
      %1799 = vmatmul.mubr.bf16.gmra.mrb[0].mxu0 %v1583
      %v1800 = vpop.f32.mrb[0].mxu0
      %v1801 = vadd.f32 0.0, %v1800
      %v1802 = vpop.f32.mrb[0].mxu0
      %v1803 = vpop.f32.mrb[0].mxu0
      %v1804 = vadd.f32 0.0, %v1803
      %v1805 = vpop.f32.mrb[0].mxu0
      %1806 = vmatprep.mubr.bf16.mxu0 %v1710
      %1807 = vmatmul.mubr.bf16.gmra.mrb[0].mxu0 %v1585
      %v1808 = vpop.f32.mrb[0].mxu0
      %v1809 = vadd.f32 0.0, %v1808
      %v1810 = vpop.f32.mrb[0].mxu0
      %v1811 = vpop.f32.mrb[0].mxu0
      %v1812 = vadd.f32 0.0, %v1811
      %v1813 = vpop.f32.mrb[0].mxu0
      %1814 = vmatprep.mubr.bf16.mxu0 %v1713
      %1815 = vmatmul.mubr.bf16.gmra.mrb[0].mxu0 %v1587
      %v1816 = vpop.f32.mrb[0].mxu0
      %v1817 = vadd.f32 0.0, %v1816
      %v1818 = vpop.f32.mrb[0].mxu0
      %v1819 = vpop.f32.mrb[0].mxu0
      %v1820 = vadd.f32 0.0, %v1819
      %v1821 = vpop.f32.mrb[0].mxu0
      %1822 = vmatprep.mubr.bf16.mxu0 %v1716
      %1823 = vmatmul.mubr.bf16.gmra.mrb[0].mxu0 %v1589
      %v1824 = vpop.f32.mrb[0].mxu0
      %v1825 = vadd.f32 0.0, %v1824
      %v1826 = vpop.f32.mrb[0].mxu0
      %v1827 = vpop.f32.mrb[0].mxu0
      %v1828 = vadd.f32 0.0, %v1827
      %v1829 = vpop.f32.mrb[0].mxu0
      %1830 = vdwg.mxu0
      %v1831 = vld [vmem:[#allocation5] sm:$0xff]
      %v1832 = vld [vmem:[#allocation5 + $0x8] sm:$0xff]
      %v1833 = vld [vmem:[#allocation5 + $0x10] sm:$0xff]
      %v1834 = vld [vmem:[#allocation5 + $0x18] sm:$0xff]
      %v1835 = vld [vmem:[#allocation5 + $0x20] sm:$0xff]
      %v1836 = vld [vmem:[#allocation5 + $0x28] sm:$0xff]
      %v1837 = vld [vmem:[#allocation5 + $0x30] sm:$0xff]
      %v1838 = vld [vmem:[#allocation5 + $0x38] sm:$0xff]
      %v1839 = vld [vmem:[#allocation5 + $0x40] sm:$0xff]
      %v1840 = vld [vmem:[#allocation5 + $0x48] sm:$0xff]
      %v1841 = vld [vmem:[#allocation5 + $0x50] sm:$0xff]
      %v1842 = vld [vmem:[#allocation5 + $0x58] sm:$0xff]
      %v1843 = vld [vmem:[#allocation5 + $0x60] sm:$0xff]
      %v1844 = vld [vmem:[#allocation5 + $0x68] sm:$0xff]
      %v1845 = vld [vmem:[#allocation5 + $0x70] sm:$0xff]
      %v1846 = vld [vmem:[#allocation5 + $0x78] sm:$0xff]
      %v1847 = vld [vmem:[#allocation5 + $0x80] sm:$0xff]
      %v1848 = vld [vmem:[#allocation5 + $0x88] sm:$0xff]
      %v1849 = vld [vmem:[#allocation5 + $0x90] sm:$0xff]
      %v1850 = vld [vmem:[#allocation5 + $0x98] sm:$0xff]
      %v1851 = vadd.f32 %v1831, %v1753
      %v1852 = vadd.f32 %v1832, %v1756
      %v1853 = vadd.f32 %v1833, %v1761
      %v1854 = vadd.f32 %v1834, %v1764
      %v1855 = vadd.f32 %v1835, %v1769
      %v1856 = vadd.f32 %v1836, %v1772
      %v1857 = vadd.f32 %v1837, %v1777
      %v1858 = vadd.f32 %v1838, %v1780
      %v1859 = vadd.f32 %v1839, %v1785
      %v1860 = vadd.f32 %v1840, %v1788
      %v1861 = vadd.f32 %v1841, %v1793
      %v1862 = vadd.f32 %v1842, %v1796
      %v1863 = vadd.f32 %v1843, %v1801
      %v1864 = vadd.f32 %v1844, %v1804
      %v1865 = vadd.f32 %v1845, %v1809
      %v1866 = vadd.f32 %v1846, %v1812
      %v1867 = vadd.f32 %v1847, %v1817
      %v1868 = vadd.f32 %v1848, %v1820
      %v1869 = vadd.f32 %v1849, %v1825
      %v1870 = vadd.f32 %v1850, %v1828
      %1871 = vst.msk [vmem:[#allocation5] sm:$0xff] %vm391, %v1851
      %1872 = vst.msk [vmem:[#allocation5 + $0x8] sm:$0xff] %vm391, %v1852
      %1873 = vst.msk [vmem:[#allocation5 + $0x10] sm:$0xff] %vm391, %v1853
      %1874 = vst.msk [vmem:[#allocation5 + $0x18] sm:$0xff] %vm391, %v1854
      %1875 = vst.msk [vmem:[#allocation5 + $0x20] sm:$0xff] %vm391, %v1855
      %1876 = vst.msk [vmem:[#allocation5 + $0x28] sm:$0xff] %vm391, %v1856
      %1877 = vst.msk [vmem:[#allocation5 + $0x30] sm:$0xff] %vm391, %v1857
      %1878 = vst.msk [vmem:[#allocation5 + $0x38] sm:$0xff] %vm391, %v1858
      %1879 = vst.msk [vmem:[#allocation5 + $0x40] sm:$0xff] %vm391, %v1859
      %1880 = vst.msk [vmem:[#allocation5 + $0x48] sm:$0xff] %vm391, %v1860
      %1881 = vst.msk [vmem:[#allocation5 + $0x50] sm:$0xff] %vm391, %v1861
      %1882 = vst.msk [vmem:[#allocation5 + $0x58] sm:$0xff] %vm391, %v1862
      %1883 = vst.msk [vmem:[#allocation5 + $0x60] sm:$0xff] %vm391, %v1863
      %1884 = vst.msk [vmem:[#allocation5 + $0x68] sm:$0xff] %vm391, %v1864
      %1885 = vst.msk [vmem:[#allocation5 + $0x70] sm:$0xff] %vm391, %v1865
      %1886 = vst.msk [vmem:[#allocation5 + $0x78] sm:$0xff] %vm391, %v1866
      %1887 = vst.msk [vmem:[#allocation5 + $0x80] sm:$0xff] %vm391, %v1867
      %1888 = vst.msk [vmem:[#allocation5 + $0x88] sm:$0xff] %vm391, %v1868
      %1889 = vst.msk [vmem:[#allocation5 + $0x90] sm:$0xff] %vm391, %v1869
      %1890 = vst.msk [vmem:[#allocation5 + $0x98] sm:$0xff] %vm391, %v1870
      %v1891 = vld [vmem:[#allocation5] sm:$0xff]
      %v1892 = vld [vmem:[#allocation5 + $0x8] sm:$0xff]
      %v1893 = vld [vmem:[#allocation5 + $0x10] sm:$0xff]
      %v1894 = vld [vmem:[#allocation5 + $0x18] sm:$0xff]
      %v1895 = vld [vmem:[#allocation5 + $0x20] sm:$0xff]
      %v1896 = vld [vmem:[#allocation5 + $0x28] sm:$0xff]
      %v1897 = vld [vmem:[#allocation5 + $0x30] sm:$0xff]
      %v1898 = vld [vmem:[#allocation5 + $0x38] sm:$0xff]
      %v1899 = vld [vmem:[#allocation5 + $0x40] sm:$0xff]
      %v1900 = vld [vmem:[#allocation5 + $0x48] sm:$0xff]
      %v1901 = vld [vmem:[#allocation5 + $0x50] sm:$0xff]
      %v1902 = vld [vmem:[#allocation5 + $0x58] sm:$0xff]
      %v1903 = vld [vmem:[#allocation5 + $0x60] sm:$0xff]
      %v1904 = vld [vmem:[#allocation5 + $0x68] sm:$0xff]
      %v1905 = vld [vmem:[#allocation5 + $0x70] sm:$0xff]
      %v1906 = vld [vmem:[#allocation5 + $0x78] sm:$0xff]
      %v1907 = vld [vmem:[#allocation5 + $0x80] sm:$0xff]
      %v1908 = vld [vmem:[#allocation5 + $0x88] sm:$0xff]
      %v1909 = vld [vmem:[#allocation5 + $0x90] sm:$0xff]
      %v1910 = vld [vmem:[#allocation5 + $0x98] sm:$0xff]
      %v1911 = vld [vmem:[%s2] sm:$0x1]
      %v1913 = vlaneseq
      %v1914 = vshrl.u32 %v1913, 7
      %v1915 = vsub.s32 0, %v1914
      %v1916 = vrot.slane %v1911, %v1915
      %v1918 = vadd.f32 %v1891, %v1916
      %v1919 = vadd.f32 %v1892, %v1916
      %v1920 = vadd.f32 %v1893, %v1916
      %v1921 = vadd.f32 %v1894, %v1916
      %v1922 = vadd.f32 %v1895, %v1916
      %v1923 = vadd.f32 %v1896, %v1916
      %v1924 = vadd.f32 %v1897, %v1916
      %v1925 = vadd.f32 %v1898, %v1916
      %v1926 = vadd.f32 %v1899, %v1916
      %v1927 = vadd.f32 %v1900, %v1916
      %v1928 = vadd.f32 %v1901, %v1916
      %v1929 = vadd.f32 %v1902, %v1916
      %v1930 = vadd.f32 %v1903, %v1916
      %v1931 = vadd.f32 %v1904, %v1916
      %v1932 = vadd.f32 %v1905, %v1916
      %v1933 = vadd.f32 %v1906, %v1916
      %v1934 = vadd.f32 %v1907, %v1916
      %v1935 = vadd.f32 %v1908, %v1916
      %v1936 = vadd.f32 %v1909, %v1916
      %v1937 = vadd.f32 %v1910, %v1916
      %v1938 = vmax.f32 %v1918, 0.0
      %v1939 = vmax.f32 %v1919, 0.0
      %v1940 = vmax.f32 %v1920, 0.0
      %v1941 = vmax.f32 %v1921, 0.0
      %v1942 = vmax.f32 %v1922, 0.0
      %v1943 = vmax.f32 %v1923, 0.0
      %v1944 = vmax.f32 %v1924, 0.0
      %v1945 = vmax.f32 %v1925, 0.0
      %v1946 = vmax.f32 %v1926, 0.0
      %v1947 = vmax.f32 %v1927, 0.0
      %v1948 = vmax.f32 %v1928, 0.0
      %v1949 = vmax.f32 %v1929, 0.0
      %v1950 = vmax.f32 %v1930, 0.0
      %v1951 = vmax.f32 %v1931, 0.0
      %v1952 = vmax.f32 %v1932, 0.0
      %v1953 = vmax.f32 %v1933, 0.0
      %v1954 = vmax.f32 %v1934, 0.0
      %v1955 = vmax.f32 %v1935, 0.0
      %v1956 = vmax.f32 %v1936, 0.0
      %v1957 = vmax.f32 %v1937, 0.0
      %1958 = vst.msk [vmem:[#allocation3 + $0x1] sm:$0xff] %vm391, %v1938
      %1959 = vst.msk [vmem:[#allocation3 + $0x9] sm:$0xff] %vm391, %v1939
      %1960 = vst.msk [vmem:[#allocation3 + $0x19] sm:$0xff] %vm391, %v1940
      %1961 = vst.msk [vmem:[#allocation3 + $0x21] sm:$0xff] %vm391, %v1941
      %1962 = vst.msk [vmem:[#allocation3 + $0x31] sm:$0xff] %vm391, %v1942
      %1963 = vst.msk [vmem:[#allocation3 + $0x39] sm:$0xff] %vm391, %v1943
      %1964 = vst.msk [vmem:[#allocation3 + $0x49] sm:$0xff] %vm391, %v1944
      %1965 = vst.msk [vmem:[#allocation3 + $0x51] sm:$0xff] %vm391, %v1945
      %1966 = vst.msk [vmem:[#allocation3 + $0x61] sm:$0xff] %vm391, %v1946
      %1967 = vst.msk [vmem:[#allocation3 + $0x69] sm:$0xff] %vm391, %v1947
      %1968 = vst.msk [vmem:[#allocation3 + $0x79] sm:$0xff] %vm391, %v1948
      %1969 = vst.msk [vmem:[#allocation3 + $0x81] sm:$0xff] %vm391, %v1949
      %1970 = vst.msk [vmem:[#allocation3 + $0x91] sm:$0xff] %vm391, %v1950
      %1971 = vst.msk [vmem:[#allocation3 + $0x99] sm:$0xff] %vm391, %v1951
      %1972 = vst.msk [vmem:[#allocation3 + $0xa9] sm:$0xff] %vm391, %v1952
      %1973 = vst.msk [vmem:[#allocation3 + $0xb1] sm:$0xff] %vm391, %v1953
      %1974 = vst.msk [vmem:[#allocation3 + $0xc1] sm:$0xff] %vm391, %v1954
      %1975 = vst.msk [vmem:[#allocation3 + $0xc9] sm:$0xff] %vm391, %v1955
      %1976 = vst.msk [vmem:[#allocation3 + $0xd9] sm:$0xff] %vm391, %v1956
      %1977 = vst.msk [vmem:[#allocation3 + $0xe1] sm:$0xff] %vm391, %v1957
      %1978 = vst.msk [vmem:[#allocation3] sm:$0x1] %vm348, 0.0
      %1979 = vst.msk [vmem:[#allocation3 + $0x18] sm:$0x1] %vm348, 0.0
      %1980 = vst.msk [vmem:[#allocation3 + $0x30] sm:$0x1] %vm348, 0.0
      %1981 = vst.msk [vmem:[#allocation3 + $0x48] sm:$0x1] %vm348, 0.0
      %1982 = vst.msk [vmem:[#allocation3 + $0x60] sm:$0x1] %vm348, 0.0
      %1983 = vst.msk [vmem:[#allocation3 + $0x78] sm:$0x1] %vm348, 0.0
      %1984 = vst.msk [vmem:[#allocation3 + $0x90] sm:$0x1] %vm348, 0.0
      %1985 = vst.msk [vmem:[#allocation3 + $0xa8] sm:$0x1] %vm348, 0.0
      %1986 = vst.msk [vmem:[#allocation3 + $0xc0] sm:$0x1] %vm348, 0.0
      %1987 = vst.msk [vmem:[#allocation3 + $0xd8] sm:$0x1] %vm348, 0.0
      %1988 = vst.msk [vmem:[#allocation3 + $0x11] sm:$0x1] %vm348, 0.0
      %1989 = vst.msk [vmem:[#allocation3 + $0x29] sm:$0x1] %vm348, 0.0
      %1990 = vst.msk [vmem:[#allocation3 + $0x41] sm:$0x1] %vm348, 0.0
      %1991 = vst.msk [vmem:[#allocation3 + $0x59] sm:$0x1] %vm348, 0.0
      %1992 = vst.msk [vmem:[#allocation3 + $0x71] sm:$0x1] %vm348, 0.0
      %1993 = vst.msk [vmem:[#allocation3 + $0x89] sm:$0x1] %vm348, 0.0
      %1994 = vst.msk [vmem:[#allocation3 + $0xa1] sm:$0x1] %vm348, 0.0
      %1995 = vst.msk [vmem:[#allocation3 + $0xb9] sm:$0x1] %vm348, 0.0
      %1996 = vst.msk [vmem:[#allocation3 + $0xd1] sm:$0x1] %vm348, 0.0
      %1997 = vst.msk [vmem:[#allocation3 + $0xe9] sm:$0x1] %vm348, 0.0
      %p1998 = scmp.eq.s32.totalorder %s346, 0
      // Predicated region
      $region57: #{tpu_custom_call.1} parent=55 // pred_check
        %p1999 = pneg %p1998
      $region58: #{tpu_custom_call.1} parent=55 // pred_check_branch
        %2001 = sbr.rel (%p1999) target = $region60
      $region59: #{tpu_custom_call.1} parent=55 // pred_region
        %2002 = vst.msk [vmem:[#allocation3] sm:$0xff] %vm391, 0.0
        %2003 = vst.msk [vmem:[#allocation3 + $0x8] sm:$0xff] %vm391, 0.0
        %vm2004 = vcmask 517120
        %2005 = vst.msk [vmem:[#allocation3 + $0x10] sm:$0x3] %vm2004, 0.0
      $region60: #{tpu_custom_call.1} parent=55 // pred_fallthru
        _
      %p2006 = scmp.eq.s32.totalorder %s449, 16
      // Predicated region
      $region61: #{tpu_custom_call.1} parent=55 // pred_check
        %p2007 = pneg %p2006
      $region62: #{tpu_custom_call.1} parent=55 // pred_check_branch
        %2009 = sbr.rel (%p2007) target = $region64
      $region63: #{tpu_custom_call.1} parent=55 // pred_region
        %s2010 = scalar_lea.vmem [#allocation3], 216
        %2011 = vst.msk [vmem:[%s2010] sm:$0xff] %vm391, 0.0
        %2012 = vst.msk [vmem:[%s2010 + $0x8] sm:$0xff] %vm391, 0.0
        %vm2013 = vcmask 517120
        %2014 = vst.msk [vmem:[%s2010 + $0x10] sm:$0x3] %vm2013, 0.0
      $region64: #{tpu_custom_call.1} parent=55 // pred_fallthru
        _
      %v2015 = vld [vmem:[#allocation3] sm:$0xff]
      %v2016 = vld [vmem:[#allocation3 + $0x8] sm:$0xff]
      %v2017 = vld [vmem:[#allocation3 + $0x18] sm:$0xff]
      %v2018 = vld [vmem:[#allocation3 + $0x20] sm:$0xff]
      %v2019 = vld [vmem:[#allocation3 + $0x30] sm:$0xff]
      %v2020 = vld [vmem:[#allocation3 + $0x38] sm:$0xff]
      %v2021 = vld [vmem:[#allocation3 + $0x48] sm:$0xff]
      %v2022 = vld [vmem:[#allocation3 + $0x50] sm:$0xff]
      %v2023 = vld [vmem:[#allocation3 + $0x60] sm:$0xff]
      %v2024 = vld [vmem:[#allocation3 + $0x68] sm:$0xff]
      %v2025 = vld [vmem:[#allocation3 + $0x78] sm:$0xff]
      %v2026 = vld [vmem:[#allocation3 + $0x80] sm:$0xff]
      %v2027 = vld [vmem:[#allocation3 + $0x90] sm:$0xff]
      %v2028 = vld [vmem:[#allocation3 + $0x98] sm:$0xff]
      %v2029 = vld [vmem:[#allocation3 + $0xa8] sm:$0xff]
      %v2030 = vld [vmem:[#allocation3 + $0xb0] sm:$0xff]
      %v2031 = vpack.c.bf16 %v2016, %v2015
      %v2032 = vpack.c.bf16 %v2018, %v2017
      %v2033 = vpack.c.bf16 %v2020, %v2019
      %v2034 = vpack.c.bf16 %v2022, %v2021
      %v2035 = vpack.c.bf16 %v2024, %v2023
      %v2036 = vpack.c.bf16 %v2026, %v2025
      %v2037 = vpack.c.bf16 %v2028, %v2027
      %v2038 = vpack.c.bf16 %v2030, %v2029
      %2039 = vst.msk [vmem:[#allocation4] sm:$0xff] %vm391, %v2031
      %2040 = vst.msk [vmem:[#allocation4 + $0x10] sm:$0xff] %vm391, %v2032
      %2041 = vst.msk [vmem:[#allocation4 + $0x20] sm:$0xff] %vm391, %v2033
      %2042 = vst.msk [vmem:[#allocation4 + $0x30] sm:$0xff] %vm391, %v2034
      %2043 = vst.msk [vmem:[#allocation4 + $0x40] sm:$0xff] %vm391, %v2035
      %2044 = vst.msk [vmem:[#allocation4 + $0x50] sm:$0xff] %vm391, %v2036
      %2045 = vst.msk [vmem:[#allocation4 + $0x60] sm:$0xff] %vm391, %v2037
      %2046 = vst.msk [vmem:[#allocation4 + $0x70] sm:$0xff] %vm391, %v2038
      %v2047 = vld [vmem:[#allocation3 + $0x1] sm:$0xff]
      %v2048 = vld [vmem:[#allocation3 + $0x9] sm:$0xff]
      %v2049 = vld [vmem:[#allocation3 + $0x19] sm:$0xff]
      %v2050 = vld [vmem:[#allocation3 + $0x21] sm:$0xff]
      %v2051 = vld [vmem:[#allocation3 + $0x31] sm:$0xff]
      %v2052 = vld [vmem:[#allocation3 + $0x39] sm:$0xff]
      %v2053 = vld [vmem:[#allocation3 + $0x49] sm:$0xff]
      %v2054 = vld [vmem:[#allocation3 + $0x51] sm:$0xff]
      %v2055 = vld [vmem:[#allocation3 + $0x61] sm:$0xff]
      %v2056 = vld [vmem:[#allocation3 + $0x69] sm:$0xff]
      %v2057 = vld [vmem:[#allocation3 + $0x79] sm:$0xff]
      %v2058 = vld [vmem:[#allocation3 + $0x81] sm:$0xff]
      %v2059 = vld [vmem:[#allocation3 + $0x91] sm:$0xff]
      %v2060 = vld [vmem:[#allocation3 + $0x99] sm:$0xff]
      %v2061 = vld [vmem:[#allocation3 + $0xa9] sm:$0xff]
      %v2062 = vld [vmem:[#allocation3 + $0xb1] sm:$0xff]
      %v2063 = vpack.c.bf16 %v2048, %v2047
      %v2064 = vpack.c.bf16 %v2050, %v2049
      %v2065 = vpack.c.bf16 %v2052, %v2051
      %v2066 = vpack.c.bf16 %v2054, %v2053
      %v2067 = vpack.c.bf16 %v2056, %v2055
      %v2068 = vpack.c.bf16 %v2058, %v2057
      %v2069 = vpack.c.bf16 %v2060, %v2059
      %v2070 = vpack.c.bf16 %v2062, %v2061
      %2079 = vrot.lane.b32.xlu0 %v2063, 64
      %v2080 = vpop.permute.xlu0 %2079
      %2081 = vrot.lane.b32.xlu0 %v2064, 64
      %v2082 = vpop.permute.xlu0 %2081
      %2083 = vrot.lane.b32.xlu0 %v2065, 64
      %v2084 = vpop.permute.xlu0 %2083
      %2085 = vrot.lane.b32.xlu0 %v2066, 64
      %v2086 = vpop.permute.xlu0 %2085
      %2087 = vrot.lane.b32.xlu0 %v2067, 64
      %v2088 = vpop.permute.xlu0 %2087
      %2089 = vrot.lane.b32.xlu0 %v2068, 64
      %v2090 = vpop.permute.xlu0 %2089
      %2091 = vrot.lane.b32.xlu0 %v2069, 64
      %v2092 = vpop.permute.xlu0 %2091
      %2093 = vrot.lane.b32.xlu0 %v2070, 64
      %v2094 = vpop.permute.xlu0 %2093
      %2103 = vst.msk [vmem:[#allocation4] sm:$0xff] %vm601, %v2080
      %2104 = vst.msk [vmem:[#allocation4 + $0x10] sm:$0xff] %vm601, %v2082
      %2105 = vst.msk [vmem:[#allocation4 + $0x20] sm:$0xff] %vm601, %v2084
      %2106 = vst.msk [vmem:[#allocation4 + $0x30] sm:$0xff] %vm601, %v2086
      %2107 = vst.msk [vmem:[#allocation4 + $0x40] sm:$0xff] %vm601, %v2088
      %2108 = vst.msk [vmem:[#allocation4 + $0x50] sm:$0xff] %vm601, %v2090
      %2109 = vst.msk [vmem:[#allocation4 + $0x60] sm:$0xff] %vm601, %v2092
      %2110 = vst.msk [vmem:[#allocation4 + $0x70] sm:$0xff] %vm601, %v2094
      %v2111 = vld [vmem:[#allocation3 + $0x2] sm:$0xff]
      %v2112 = vld [vmem:[#allocation3 + $0xa] sm:$0xff]
      %v2113 = vld [vmem:[#allocation3 + $0x1a] sm:$0xff]
      %v2114 = vld [vmem:[#allocation3 + $0x22] sm:$0xff]
      %v2115 = vld [vmem:[#allocation3 + $0x32] sm:$0xff]
      %v2116 = vld [vmem:[#allocation3 + $0x3a] sm:$0xff]
      %v2117 = vld [vmem:[#allocation3 + $0x4a] sm:$0xff]
      %v2118 = vld [vmem:[#allocation3 + $0x52] sm:$0xff]
      %v2119 = vld [vmem:[#allocation3 + $0x62] sm:$0xff]
      %v2120 = vld [vmem:[#allocation3 + $0x6a] sm:$0xff]
      %v2121 = vld [vmem:[#allocation3 + $0x7a] sm:$0xff]
      %v2122 = vld [vmem:[#allocation3 + $0x82] sm:$0xff]
      %v2123 = vld [vmem:[#allocation3 + $0x92] sm:$0xff]
      %v2124 = vld [vmem:[#allocation3 + $0x9a] sm:$0xff]
      %v2125 = vld [vmem:[#allocation3 + $0xaa] sm:$0xff]
      %v2126 = vld [vmem:[#allocation3 + $0xb2] sm:$0xff]
      %v2127 = vpack.c.bf16 %v2112, %v2111
      %v2128 = vpack.c.bf16 %v2114, %v2113
      %v2129 = vpack.c.bf16 %v2116, %v2115
      %v2130 = vpack.c.bf16 %v2118, %v2117
      %v2131 = vpack.c.bf16 %v2120, %v2119
      %v2132 = vpack.c.bf16 %v2122, %v2121
      %v2133 = vpack.c.bf16 %v2124, %v2123
      %v2134 = vpack.c.bf16 %v2126, %v2125
      %2135 = vst.msk [vmem:[#allocation4 + $0x8] sm:$0xff] %vm391, %v2127
      %2136 = vst.msk [vmem:[#allocation4 + $0x18] sm:$0xff] %vm391, %v2128
      %2137 = vst.msk [vmem:[#allocation4 + $0x28] sm:$0xff] %vm391, %v2129
      %2138 = vst.msk [vmem:[#allocation4 + $0x38] sm:$0xff] %vm391, %v2130
      %2139 = vst.msk [vmem:[#allocation4 + $0x48] sm:$0xff] %vm391, %v2131
      %2140 = vst.msk [vmem:[#allocation4 + $0x58] sm:$0xff] %vm391, %v2132
      %2141 = vst.msk [vmem:[#allocation4 + $0x68] sm:$0xff] %vm391, %v2133
      %2142 = vst.msk [vmem:[#allocation4 + $0x78] sm:$0xff] %vm391, %v2134
      %v2143 = vld [vmem:[#allocation4] sm:$0xff]
      %v2144 = vld [vmem:[#allocation4 + $0x8] sm:$0xff]
      %v2145 = vld [vmem:[#allocation4 + $0x10] sm:$0xff]
      %v2146 = vld [vmem:[#allocation4 + $0x18] sm:$0xff]
      %v2147 = vld [vmem:[#allocation4 + $0x20] sm:$0xff]
      %v2148 = vld [vmem:[#allocation4 + $0x28] sm:$0xff]
      %v2149 = vld [vmem:[#allocation4 + $0x30] sm:$0xff]
      %v2150 = vld [vmem:[#allocation4 + $0x38] sm:$0xff]
      %v2151 = vld [vmem:[#allocation4 + $0x40] sm:$0xff]
      %v2152 = vld [vmem:[#allocation4 + $0x48] sm:$0xff]
      %v2153 = vld [vmem:[#allocation4 + $0x50] sm:$0xff]
      %v2154 = vld [vmem:[#allocation4 + $0x58] sm:$0xff]
      %v2155 = vld [vmem:[#allocation4 + $0x60] sm:$0xff]
      %v2156 = vld [vmem:[#allocation4 + $0x68] sm:$0xff]
      %v2157 = vld [vmem:[#allocation4 + $0x70] sm:$0xff]
      %v2158 = vld [vmem:[#allocation4 + $0x78] sm:$0xff]
      %v2159 = vld [vmem:[%s3] sm:$0xf]
      %v2160 = vld [vmem:[%s3 + $0x4] sm:$0xf]
      %v2161 = vld [vmem:[%s3 + $0x8] sm:$0xf]
      %v2162 = vld [vmem:[%s3 + $0xc] sm:$0xf]
      %v2163 = vld [vmem:[%s3 + $0x10] sm:$0xf]
      %v2164 = vld [vmem:[%s3 + $0x14] sm:$0xf]
      %v2165 = vld [vmem:[%s3 + $0x18] sm:$0xf]
      %v2166 = vld [vmem:[%s3 + $0x1c] sm:$0xf]
      %v2167 = vld [vmem:[%s3 + $0x20] sm:$0xf]
      %v2168 = vld [vmem:[%s3 + $0x24] sm:$0xf]
      %v2169 = vld [vmem:[%s3 + $0x28] sm:$0xf]
      %v2170 = vld [vmem:[%s3 + $0x2c] sm:$0xf]
      %v2171 = vld [vmem:[%s3 + $0x30] sm:$0xf]
      %v2172 = vld [vmem:[%s3 + $0x34] sm:$0xf]
      %v2173 = vld [vmem:[%s3 + $0x38] sm:$0xf]
      %v2174 = vld [vmem:[%s3 + $0x3c] sm:$0xf]
      %v2175 = vld [vmem:[%s3 + $0x40] sm:$0xf]
      %v2176 = vld [vmem:[%s3 + $0x44] sm:$0xf]
      %v2177 = vld [vmem:[%s3 + $0x48] sm:$0xf]
      %v2178 = vld [vmem:[%s3 + $0x4c] sm:$0xf]
      %v2179 = vld [vmem:[%s3 + $0x50] sm:$0xf]
      %v2180 = vld [vmem:[%s3 + $0x54] sm:$0xf]
      %v2181 = vld [vmem:[%s3 + $0x58] sm:$0xf]
      %v2182 = vld [vmem:[%s3 + $0x5c] sm:$0xf]
      %v2207 = vunpack.c.l.b16 %v2159
      %v2208 = vunpack.c.l.b16 %v2160
      %v2209 = vunpack.c.l.b16 %v2161
      %v2210 = vunpack.c.l.b16 %v2162
      %v2211 = vunpack.c.l.b16 %v2163
      %v2212 = vunpack.c.l.b16 %v2164
      %v2213 = vunpack.c.l.b16 %v2165
      %v2214 = vunpack.c.l.b16 %v2166
      %v2215 = vunpack.c.l.b16 %v2167
      %v2216 = vunpack.c.l.b16 %v2168
      %v2217 = vunpack.c.l.b16 %v2169
      %v2218 = vunpack.c.l.b16 %v2170
      %v2219 = vunpack.c.l.b16 %v2171
      %v2220 = vunpack.c.l.b16 %v2172
      %v2221 = vunpack.c.l.b16 %v2173
      %v2222 = vunpack.c.l.b16 %v2174
      %v2223 = vunpack.c.l.b16 %v2175
      %v2224 = vunpack.c.l.b16 %v2176
      %v2225 = vunpack.c.l.b16 %v2177
      %v2226 = vunpack.c.l.b16 %v2178
      %v2227 = vunpack.c.l.b16 %v2179
      %v2228 = vunpack.c.l.b16 %v2180
      %v2229 = vunpack.c.l.b16 %v2181
      %v2230 = vunpack.c.l.b16 %v2182
      %v2231 = vpack.c.b16 %v2208, %v2207
      %v2232 = vpack.c.b16 %v2210, %v2209
      %v2233 = vpack.c.b16 %v2212, %v2211
      %v2234 = vpack.c.b16 %v2214, %v2213
      %v2235 = vpack.c.b16 %v2216, %v2215
      %v2236 = vpack.c.b16 %v2218, %v2217
      %v2237 = vpack.c.b16 %v2220, %v2219
      %v2238 = vpack.c.b16 %v2222, %v2221
      %v2239 = vpack.c.b16 %v2224, %v2223
      %v2240 = vpack.c.b16 %v2226, %v2225
      %v2241 = vpack.c.b16 %v2228, %v2227
      %v2242 = vpack.c.b16 %v2230, %v2229
      %v2256 = vsel %vm391, %v2144, 0
      %v2259 = vsel %vm391, %v2146, 0
      %v2262 = vsel %vm391, %v2148, 0
      %v2265 = vsel %vm391, %v2150, 0
      %v2268 = vsel %vm391, %v2152, 0
      %v2271 = vsel %vm391, %v2154, 0
      %v2274 = vsel %vm391, %v2156, 0
      %v2277 = vsel %vm391, %v2158, 0
      %2279 = vmatprep.subr.bf16.mxu0 0
      %2280 = vmatpush1.bf16.msra.mxu0 %v2231
      %2281 = vmatprep.subr.bf16.mxu0 0
      %2282 = vmatpush1.bf16.msra.mxu0 %v2232
      %2283 = vmatprep.subr.bf16.mxu0 0
      %2284 = vmatpush1.bf16.msra.mxu0 %v2233
      %2285 = vmatprep.subr.bf16.mxu0 0
      %2286 = vmatpush1.bf16.msra.mxu0 %v2234
      %2287 = vmatprep.subr.bf16.mxu0 0
      %2288 = vmatpush1.bf16.msra.mxu0 %v2235
      %2289 = vmatprep.subr.bf16.mxu0 0
      %2290 = vmatpush1.bf16.msra.mxu0 %v2236
      %2291 = vmatprep.subr.bf16.mxu0 0
      %2292 = vmatpush1.bf16.msra.mxu0 %v2237
      %2293 = vmatprep.subr.bf16.mxu0 0
      %2294 = vmatpush1.bf16.msra.mxu0 %v2238
      %2295 = vmatprep.subr.bf16.mxu0 0
      %2296 = vmatpush1.bf16.msra.mxu0 %v2239
      %2297 = vmatprep.subr.bf16.mxu0 0
      %2298 = vmatpush1.bf16.msra.mxu0 %v2240
      %2299 = vmatprep.subr.bf16.mxu0 0
      %2300 = vmatpush1.bf16.msra.mxu0 %v2241
      %2301 = vmatprep.subr.bf16.mxu0 0
      %2302 = vmatpush1.bf16.msra.mxu0 %v2242
      %2303 = vmatprep.subr.bf16.mxu0 0
      %2304 = vmatpush1.bf16.msra.mxu0 0
      %2305 = vmatprep.subr.bf16.mxu0 0
      %2306 = vmatpush1.bf16.msra.mxu0 0
      %2307 = vmatprep.subr.bf16.mxu0 0
      %2308 = vmatpush1.bf16.msra.mxu0 0
      %2309 = vmatprep.subr.bf16.mxu0 0
      %2310 = vmatpush1.bf16.msra.mxu0 0
      %2311 = vmatprep.mubr.bf16.mxu0 %v2256
      %2312 = vmatmul.mubr.bf16.gmra.mrb[0].mxu0 %v2143
      %v2313 = vpop.f32.mrb[0].mxu0
      %v2314 = vadd.f32 0.0, %v2313
      %v2315 = vpop.f32.mrb[0].mxu0
      %v2316 = vpop.f32.mrb[0].mxu0
      %v2317 = vadd.f32 0.0, %v2316
      %v2318 = vpop.f32.mrb[0].mxu0
      %2319 = vmatprep.mubr.bf16.mxu0 %v2259
      %2320 = vmatmul.mubr.bf16.gmra.mrb[0].mxu0 %v2145
      %v2321 = vpop.f32.mrb[0].mxu0
      %v2322 = vadd.f32 0.0, %v2321
      %v2323 = vpop.f32.mrb[0].mxu0
      %v2324 = vpop.f32.mrb[0].mxu0
      %v2325 = vadd.f32 0.0, %v2324
      %v2326 = vpop.f32.mrb[0].mxu0
      %2327 = vmatprep.mubr.bf16.mxu0 %v2262
      %2328 = vmatmul.mubr.bf16.gmra.mrb[0].mxu0 %v2147
      %v2329 = vpop.f32.mrb[0].mxu0
      %v2330 = vadd.f32 0.0, %v2329
      %v2331 = vpop.f32.mrb[0].mxu0
      %v2332 = vpop.f32.mrb[0].mxu0
      %v2333 = vadd.f32 0.0, %v2332
      %v2334 = vpop.f32.mrb[0].mxu0
      %2335 = vmatprep.mubr.bf16.mxu0 %v2265
      %2336 = vmatmul.mubr.bf16.gmra.mrb[0].mxu0 %v2149
      %v2337 = vpop.f32.mrb[0].mxu0
      %v2338 = vadd.f32 0.0, %v2337
      %v2339 = vpop.f32.mrb[0].mxu0
      %v2340 = vpop.f32.mrb[0].mxu0
      %v2341 = vadd.f32 0.0, %v2340
      %v2342 = vpop.f32.mrb[0].mxu0
      %2343 = vmatprep.mubr.bf16.mxu0 %v2268
      %2344 = vmatmul.mubr.bf16.gmra.mrb[0].mxu0 %v2151
      %v2345 = vpop.f32.mrb[0].mxu0
      %v2346 = vadd.f32 0.0, %v2345
      %v2347 = vpop.f32.mrb[0].mxu0
      %v2348 = vpop.f32.mrb[0].mxu0
      %v2349 = vadd.f32 0.0, %v2348
      %v2350 = vpop.f32.mrb[0].mxu0
      %2351 = vmatprep.mubr.bf16.mxu0 %v2271
      %2352 = vmatmul.mubr.bf16.gmra.mrb[0].mxu0 %v2153
      %v2353 = vpop.f32.mrb[0].mxu0
      %v2354 = vadd.f32 0.0, %v2353
      %v2355 = vpop.f32.mrb[0].mxu0
      %v2356 = vpop.f32.mrb[0].mxu0
      %v2357 = vadd.f32 0.0, %v2356
      %v2358 = vpop.f32.mrb[0].mxu0
      %2359 = vmatprep.mubr.bf16.mxu0 %v2274
      %2360 = vmatmul.mubr.bf16.gmra.mrb[0].mxu0 %v2155
      %v2361 = vpop.f32.mrb[0].mxu0
      %v2362 = vadd.f32 0.0, %v2361
      %v2363 = vpop.f32.mrb[0].mxu0
      %v2364 = vpop.f32.mrb[0].mxu0
      %v2365 = vadd.f32 0.0, %v2364
      %v2366 = vpop.f32.mrb[0].mxu0
      %2367 = vmatprep.mubr.bf16.mxu0 %v2277
      %2368 = vmatmul.mubr.bf16.gmra.mrb[0].mxu0 %v2157
      %v2369 = vpop.f32.mrb[0].mxu0
      %v2370 = vadd.f32 0.0, %v2369
      %v2371 = vpop.f32.mrb[0].mxu0
      %v2372 = vpop.f32.mrb[0].mxu0
      %v2373 = vadd.f32 0.0, %v2372
      %v2374 = vpop.f32.mrb[0].mxu0
      %2375 = vdwg.mxu0
      %2376 = vst.msk [vmem:[#allocation5] sm:$0xff] %vm391, %v2314
      %2377 = vst.msk [vmem:[#allocation5 + $0x8] sm:$0xff] %vm391, %v2317
      %2378 = vst.msk [vmem:[#allocation5 + $0x10] sm:$0xff] %vm391, %v2322
      %2379 = vst.msk [vmem:[#allocation5 + $0x18] sm:$0xff] %vm391, %v2325
      %2380 = vst.msk [vmem:[#allocation5 + $0x20] sm:$0xff] %vm391, %v2330
      %2381 = vst.msk [vmem:[#allocation5 + $0x28] sm:$0xff] %vm391, %v2333
      %2382 = vst.msk [vmem:[#allocation5 + $0x30] sm:$0xff] %vm391, %v2338
      %2383 = vst.msk [vmem:[#allocation5 + $0x38] sm:$0xff] %vm391, %v2341
      %2384 = vst.msk [vmem:[#allocation5 + $0x40] sm:$0xff] %vm391, %v2346
      %2385 = vst.msk [vmem:[#allocation5 + $0x48] sm:$0xff] %vm391, %v2349
      %2386 = vst.msk [vmem:[#allocation5 + $0x50] sm:$0xff] %vm391, %v2354
      %2387 = vst.msk [vmem:[#allocation5 + $0x58] sm:$0xff] %vm391, %v2357
      %2388 = vst.msk [vmem:[#allocation5 + $0x60] sm:$0xff] %vm391, %v2362
      %2389 = vst.msk [vmem:[#allocation5 + $0x68] sm:$0xff] %vm391, %v2365
      %2390 = vst.msk [vmem:[#allocation5 + $0x70] sm:$0xff] %vm391, %v2370
      %2391 = vst.msk [vmem:[#allocation5 + $0x78] sm:$0xff] %vm391, %v2373
      %s2392 = scalar_lea.vmem [#allocation3], 24
      %v2393 = vld [vmem:[%s2392] sm:$0xff]
      %v2394 = vld [vmem:[%s2392 + $0x8] sm:$0xff]
      %v2395 = vld [vmem:[%s2392 + $0x18] sm:$0xff]
      %v2396 = vld [vmem:[%s2392 + $0x20] sm:$0xff]
      %v2397 = vld [vmem:[%s2392 + $0x30] sm:$0xff]
      %v2398 = vld [vmem:[%s2392 + $0x38] sm:$0xff]
      %v2399 = vld [vmem:[%s2392 + $0x48] sm:$0xff]
      %v2400 = vld [vmem:[%s2392 + $0x50] sm:$0xff]
      %v2401 = vld [vmem:[%s2392 + $0x60] sm:$0xff]
      %v2402 = vld [vmem:[%s2392 + $0x68] sm:$0xff]
      %v2403 = vld [vmem:[%s2392 + $0x78] sm:$0xff]
      %v2404 = vld [vmem:[%s2392 + $0x80] sm:$0xff]
      %v2405 = vld [vmem:[%s2392 + $0x90] sm:$0xff]
      %v2406 = vld [vmem:[%s2392 + $0x98] sm:$0xff]
      %v2407 = vld [vmem:[%s2392 + $0xa8] sm:$0xff]
      %v2408 = vld [vmem:[%s2392 + $0xb0] sm:$0xff]
      %v2409 = vpack.c.bf16 %v2394, %v2393
      %v2410 = vpack.c.bf16 %v2396, %v2395
      %v2411 = vpack.c.bf16 %v2398, %v2397
      %v2412 = vpack.c.bf16 %v2400, %v2399
      %v2413 = vpack.c.bf16 %v2402, %v2401
      %v2414 = vpack.c.bf16 %v2404, %v2403
      %v2415 = vpack.c.bf16 %v2406, %v2405
      %v2416 = vpack.c.bf16 %v2408, %v2407
      %2417 = vst.msk [vmem:[#allocation4] sm:$0xff] %vm391, %v2409
      %2418 = vst.msk [vmem:[#allocation4 + $0x10] sm:$0xff] %vm391, %v2410
      %2419 = vst.msk [vmem:[#allocation4 + $0x20] sm:$0xff] %vm391, %v2411
      %2420 = vst.msk [vmem:[#allocation4 + $0x30] sm:$0xff] %vm391, %v2412
      %2421 = vst.msk [vmem:[#allocation4 + $0x40] sm:$0xff] %vm391, %v2413
      %2422 = vst.msk [vmem:[#allocation4 + $0x50] sm:$0xff] %vm391, %v2414
      %2423 = vst.msk [vmem:[#allocation4 + $0x60] sm:$0xff] %vm391, %v2415
      %2424 = vst.msk [vmem:[#allocation4 + $0x70] sm:$0xff] %vm391, %v2416
      %v2425 = vld [vmem:[%s2392 + $0x1] sm:$0xff]
      %v2426 = vld [vmem:[%s2392 + $0x9] sm:$0xff]
      %v2427 = vld [vmem:[%s2392 + $0x19] sm:$0xff]
      %v2428 = vld [vmem:[%s2392 + $0x21] sm:$0xff]
      %v2429 = vld [vmem:[%s2392 + $0x31] sm:$0xff]
      %v2430 = vld [vmem:[%s2392 + $0x39] sm:$0xff]
      %v2431 = vld [vmem:[%s2392 + $0x49] sm:$0xff]
      %v2432 = vld [vmem:[%s2392 + $0x51] sm:$0xff]
      %v2433 = vld [vmem:[%s2392 + $0x61] sm:$0xff]
      %v2434 = vld [vmem:[%s2392 + $0x69] sm:$0xff]
      %v2435 = vld [vmem:[%s2392 + $0x79] sm:$0xff]
      %v2436 = vld [vmem:[%s2392 + $0x81] sm:$0xff]
      %v2437 = vld [vmem:[%s2392 + $0x91] sm:$0xff]
      %v2438 = vld [vmem:[%s2392 + $0x99] sm:$0xff]
      %v2439 = vld [vmem:[%s2392 + $0xa9] sm:$0xff]
      %v2440 = vld [vmem:[%s2392 + $0xb1] sm:$0xff]
      %v2441 = vpack.c.bf16 %v2426, %v2425
      %v2442 = vpack.c.bf16 %v2428, %v2427
      %v2443 = vpack.c.bf16 %v2430, %v2429
      %v2444 = vpack.c.bf16 %v2432, %v2431
      %v2445 = vpack.c.bf16 %v2434, %v2433
      %v2446 = vpack.c.bf16 %v2436, %v2435
      %v2447 = vpack.c.bf16 %v2438, %v2437
      %v2448 = vpack.c.bf16 %v2440, %v2439
      %2457 = vrot.lane.b32.xlu0 %v2441, 64
      %v2458 = vpop.permute.xlu0 %2457
      %2459 = vrot.lane.b32.xlu0 %v2442, 64
      %v2460 = vpop.permute.xlu0 %2459
      %2461 = vrot.lane.b32.xlu0 %v2443, 64
      %v2462 = vpop.permute.xlu0 %2461
      %2463 = vrot.lane.b32.xlu0 %v2444, 64
      %v2464 = vpop.permute.xlu0 %2463
      %2465 = vrot.lane.b32.xlu0 %v2445, 64
      %v2466 = vpop.permute.xlu0 %2465
      %2467 = vrot.lane.b32.xlu0 %v2446, 64
      %v2468 = vpop.permute.xlu0 %2467
      %2469 = vrot.lane.b32.xlu0 %v2447, 64
      %v2470 = vpop.permute.xlu0 %2469
      %2471 = vrot.lane.b32.xlu0 %v2448, 64
      %v2472 = vpop.permute.xlu0 %2471
      %2481 = vst.msk [vmem:[#allocation4] sm:$0xff] %vm601, %v2458
      %2482 = vst.msk [vmem:[#allocation4 + $0x10] sm:$0xff] %vm601, %v2460
      %2483 = vst.msk [vmem:[#allocation4 + $0x20] sm:$0xff] %vm601, %v2462
      %2484 = vst.msk [vmem:[#allocation4 + $0x30] sm:$0xff] %vm601, %v2464
      %2485 = vst.msk [vmem:[#allocation4 + $0x40] sm:$0xff] %vm601, %v2466
      %2486 = vst.msk [vmem:[#allocation4 + $0x50] sm:$0xff] %vm601, %v2468
      %2487 = vst.msk [vmem:[#allocation4 + $0x60] sm:$0xff] %vm601, %v2470
      %2488 = vst.msk [vmem:[#allocation4 + $0x70] sm:$0xff] %vm601, %v2472
      %v2489 = vld [vmem:[%s2392 + $0x2] sm:$0xff]
      %v2490 = vld [vmem:[%s2392 + $0xa] sm:$0xff]
      %v2491 = vld [vmem:[%s2392 + $0x1a] sm:$0xff]
      %v2492 = vld [vmem:[%s2392 + $0x22] sm:$0xff]
      %v2493 = vld [vmem:[%s2392 + $0x32] sm:$0xff]
      %v2494 = vld [vmem:[%s2392 + $0x3a] sm:$0xff]
      %v2495 = vld [vmem:[%s2392 + $0x4a] sm:$0xff]
      %v2496 = vld [vmem:[%s2392 + $0x52] sm:$0xff]
      %v2497 = vld [vmem:[%s2392 + $0x62] sm:$0xff]
      %v2498 = vld [vmem:[%s2392 + $0x6a] sm:$0xff]
      %v2499 = vld [vmem:[%s2392 + $0x7a] sm:$0xff]
      %v2500 = vld [vmem:[%s2392 + $0x82] sm:$0xff]
      %v2501 = vld [vmem:[%s2392 + $0x92] sm:$0xff]
      %v2502 = vld [vmem:[%s2392 + $0x9a] sm:$0xff]
      %v2503 = vld [vmem:[%s2392 + $0xaa] sm:$0xff]
      %v2504 = vld [vmem:[%s2392 + $0xb2] sm:$0xff]
      %v2505 = vpack.c.bf16 %v2490, %v2489
      %v2506 = vpack.c.bf16 %v2492, %v2491
      %v2507 = vpack.c.bf16 %v2494, %v2493
      %v2508 = vpack.c.bf16 %v2496, %v2495
      %v2509 = vpack.c.bf16 %v2498, %v2497
      %v2510 = vpack.c.bf16 %v2500, %v2499
      %v2511 = vpack.c.bf16 %v2502, %v2501
      %v2512 = vpack.c.bf16 %v2504, %v2503
      %2513 = vst.msk [vmem:[#allocation4 + $0x8] sm:$0xff] %vm391, %v2505
      %2514 = vst.msk [vmem:[#allocation4 + $0x18] sm:$0xff] %vm391, %v2506
      %2515 = vst.msk [vmem:[#allocation4 + $0x28] sm:$0xff] %vm391, %v2507
      %2516 = vst.msk [vmem:[#allocation4 + $0x38] sm:$0xff] %vm391, %v2508
      %2517 = vst.msk [vmem:[#allocation4 + $0x48] sm:$0xff] %vm391, %v2509
      %2518 = vst.msk [vmem:[#allocation4 + $0x58] sm:$0xff] %vm391, %v2510
      %2519 = vst.msk [vmem:[#allocation4 + $0x68] sm:$0xff] %vm391, %v2511
      %2520 = vst.msk [vmem:[#allocation4 + $0x78] sm:$0xff] %vm391, %v2512
      %v2521 = vld [vmem:[#allocation4] sm:$0xff]
      %v2522 = vld [vmem:[#allocation4 + $0x8] sm:$0xff]
      %v2523 = vld [vmem:[#allocation4 + $0x10] sm:$0xff]
      %v2524 = vld [vmem:[#allocation4 + $0x18] sm:$0xff]
      %v2525 = vld [vmem:[#allocation4 + $0x20] sm:$0xff]
      %v2526 = vld [vmem:[#allocation4 + $0x28] sm:$0xff]
      %v2527 = vld [vmem:[#allocation4 + $0x30] sm:$0xff]
      %v2528 = vld [vmem:[#allocation4 + $0x38] sm:$0xff]
      %v2529 = vld [vmem:[#allocation4 + $0x40] sm:$0xff]
      %v2530 = vld [vmem:[#allocation4 + $0x48] sm:$0xff]
      %v2531 = vld [vmem:[#allocation4 + $0x50] sm:$0xff]
      %v2532 = vld [vmem:[#allocation4 + $0x58] sm:$0xff]
      %v2533 = vld [vmem:[#allocation4 + $0x60] sm:$0xff]
      %v2534 = vld [vmem:[#allocation4 + $0x68] sm:$0xff]
      %v2535 = vld [vmem:[#allocation4 + $0x70] sm:$0xff]
      %v2536 = vld [vmem:[#allocation4 + $0x78] sm:$0xff]
      %s2537 = scalar_lea.vmem %s3, 96
      %v2538 = vld [vmem:[%s2537] sm:$0xf]
      %v2539 = vld [vmem:[%s2537 + $0x4] sm:$0xf]
      %v2540 = vld [vmem:[%s2537 + $0x8] sm:$0xf]
      %v2541 = vld [vmem:[%s2537 + $0xc] sm:$0xf]
      %v2542 = vld [vmem:[%s2537 + $0x10] sm:$0xf]
      %v2543 = vld [vmem:[%s2537 + $0x14] sm:$0xf]
      %v2544 = vld [vmem:[%s2537 + $0x18] sm:$0xf]
      %v2545 = vld [vmem:[%s2537 + $0x1c] sm:$0xf]
      %v2546 = vld [vmem:[%s2537 + $0x20] sm:$0xf]
      %v2547 = vld [vmem:[%s2537 + $0x24] sm:$0xf]
      %v2548 = vld [vmem:[%s2537 + $0x28] sm:$0xf]
      %v2549 = vld [vmem:[%s2537 + $0x2c] sm:$0xf]
      %v2550 = vld [vmem:[%s2537 + $0x30] sm:$0xf]
      %v2551 = vld [vmem:[%s2537 + $0x34] sm:$0xf]
      %v2552 = vld [vmem:[%s2537 + $0x38] sm:$0xf]
      %v2553 = vld [vmem:[%s2537 + $0x3c] sm:$0xf]
      %v2554 = vld [vmem:[%s2537 + $0x40] sm:$0xf]
      %v2555 = vld [vmem:[%s2537 + $0x44] sm:$0xf]
      %v2556 = vld [vmem:[%s2537 + $0x48] sm:$0xf]
      %v2557 = vld [vmem:[%s2537 + $0x4c] sm:$0xf]
      %v2558 = vld [vmem:[%s2537 + $0x50] sm:$0xf]
      %v2559 = vld [vmem:[%s2537 + $0x54] sm:$0xf]
      %v2560 = vld [vmem:[%s2537 + $0x58] sm:$0xf]
      %v2561 = vld [vmem:[%s2537 + $0x5c] sm:$0xf]
      %v2586 = vunpack.c.l.b16 %v2538
      %v2587 = vunpack.c.l.b16 %v2539
      %v2588 = vunpack.c.l.b16 %v2540
      %v2589 = vunpack.c.l.b16 %v2541
      %v2590 = vunpack.c.l.b16 %v2542
      %v2591 = vunpack.c.l.b16 %v2543
      %v2592 = vunpack.c.l.b16 %v2544
      %v2593 = vunpack.c.l.b16 %v2545
      %v2594 = vunpack.c.l.b16 %v2546
      %v2595 = vunpack.c.l.b16 %v2547
      %v2596 = vunpack.c.l.b16 %v2548
      %v2597 = vunpack.c.l.b16 %v2549
      %v2598 = vunpack.c.l.b16 %v2550
      %v2599 = vunpack.c.l.b16 %v2551
      %v2600 = vunpack.c.l.b16 %v2552
      %v2601 = vunpack.c.l.b16 %v2553
      %v2602 = vunpack.c.l.b16 %v2554
      %v2603 = vunpack.c.l.b16 %v2555
      %v2604 = vunpack.c.l.b16 %v2556
      %v2605 = vunpack.c.l.b16 %v2557
      %v2606 = vunpack.c.l.b16 %v2558
      %v2607 = vunpack.c.l.b16 %v2559
      %v2608 = vunpack.c.l.b16 %v2560
      %v2609 = vunpack.c.l.b16 %v2561
      %v2610 = vpack.c.b16 %v2587, %v2586
      %v2611 = vpack.c.b16 %v2589, %v2588
      %v2612 = vpack.c.b16 %v2591, %v2590
      %v2613 = vpack.c.b16 %v2593, %v2592
      %v2614 = vpack.c.b16 %v2595, %v2594
      %v2615 = vpack.c.b16 %v2597, %v2596
      %v2616 = vpack.c.b16 %v2599, %v2598
      %v2617 = vpack.c.b16 %v2601, %v2600
      %v2618 = vpack.c.b16 %v2603, %v2602
      %v2619 = vpack.c.b16 %v2605, %v2604
      %v2620 = vpack.c.b16 %v2607, %v2606
      %v2621 = vpack.c.b16 %v2609, %v2608
      %v2635 = vsel %vm391, %v2522, 0
      %v2638 = vsel %vm391, %v2524, 0
      %v2641 = vsel %vm391, %v2526, 0
      %v2644 = vsel %vm391, %v2528, 0
      %v2647 = vsel %vm391, %v2530, 0
      %v2650 = vsel %vm391, %v2532, 0
      %v2653 = vsel %vm391, %v2534, 0
      %v2656 = vsel %vm391, %v2536, 0
      %2658 = vmatprep.subr.bf16.mxu0 0
      %2659 = vmatpush1.bf16.msra.mxu0 %v2610
      %2660 = vmatprep.subr.bf16.mxu0 0
      %2661 = vmatpush1.bf16.msra.mxu0 %v2611
      %2662 = vmatprep.subr.bf16.mxu0 0
      %2663 = vmatpush1.bf16.msra.mxu0 %v2612
      %2664 = vmatprep.subr.bf16.mxu0 0
      %2665 = vmatpush1.bf16.msra.mxu0 %v2613
      %2666 = vmatprep.subr.bf16.mxu0 0
      %2667 = vmatpush1.bf16.msra.mxu0 %v2614
      %2668 = vmatprep.subr.bf16.mxu0 0
      %2669 = vmatpush1.bf16.msra.mxu0 %v2615
      %2670 = vmatprep.subr.bf16.mxu0 0
      %2671 = vmatpush1.bf16.msra.mxu0 %v2616
      %2672 = vmatprep.subr.bf16.mxu0 0
      %2673 = vmatpush1.bf16.msra.mxu0 %v2617
      %2674 = vmatprep.subr.bf16.mxu0 0
      %2675 = vmatpush1.bf16.msra.mxu0 %v2618
      %2676 = vmatprep.subr.bf16.mxu0 0
      %2677 = vmatpush1.bf16.msra.mxu0 %v2619
      %2678 = vmatprep.subr.bf16.mxu0 0
      %2679 = vmatpush1.bf16.msra.mxu0 %v2620
      %2680 = vmatprep.subr.bf16.mxu0 0
      %2681 = vmatpush1.bf16.msra.mxu0 %v2621
      %2682 = vmatprep.subr.bf16.mxu0 0
      %2683 = vmatpush1.bf16.msra.mxu0 0
      %2684 = vmatprep.subr.bf16.mxu0 0
      %2685 = vmatpush1.bf16.msra.mxu0 0
      %2686 = vmatprep.subr.bf16.mxu0 0
      %2687 = vmatpush1.bf16.msra.mxu0 0
      %2688 = vmatprep.subr.bf16.mxu0 0
      %2689 = vmatpush1.bf16.msra.mxu0 0
      %2690 = vmatprep.mubr.bf16.mxu0 %v2635
      %2691 = vmatmul.mubr.bf16.gmra.mrb[0].mxu0 %v2521
      %v2692 = vpop.f32.mrb[0].mxu0
      %v2693 = vadd.f32 0.0, %v2692
      %v2694 = vpop.f32.mrb[0].mxu0
      %v2695 = vpop.f32.mrb[0].mxu0
      %v2696 = vadd.f32 0.0, %v2695
      %v2697 = vpop.f32.mrb[0].mxu0
      %2698 = vmatprep.mubr.bf16.mxu0 %v2638
      %2699 = vmatmul.mubr.bf16.gmra.mrb[0].mxu0 %v2523
      %v2700 = vpop.f32.mrb[0].mxu0
      %v2701 = vadd.f32 0.0, %v2700
      %v2702 = vpop.f32.mrb[0].mxu0
      %v2703 = vpop.f32.mrb[0].mxu0
      %v2704 = vadd.f32 0.0, %v2703
      %v2705 = vpop.f32.mrb[0].mxu0
      %2706 = vmatprep.mubr.bf16.mxu0 %v2641
      %2707 = vmatmul.mubr.bf16.gmra.mrb[0].mxu0 %v2525
      %v2708 = vpop.f32.mrb[0].mxu0
      %v2709 = vadd.f32 0.0, %v2708
      %v2710 = vpop.f32.mrb[0].mxu0
      %v2711 = vpop.f32.mrb[0].mxu0
      %v2712 = vadd.f32 0.0, %v2711
      %v2713 = vpop.f32.mrb[0].mxu0
      %2714 = vmatprep.mubr.bf16.mxu0 %v2644
      %2715 = vmatmul.mubr.bf16.gmra.mrb[0].mxu0 %v2527
      %v2716 = vpop.f32.mrb[0].mxu0
      %v2717 = vadd.f32 0.0, %v2716
      %v2718 = vpop.f32.mrb[0].mxu0
      %v2719 = vpop.f32.mrb[0].mxu0
      %v2720 = vadd.f32 0.0, %v2719
      %v2721 = vpop.f32.mrb[0].mxu0
      %2722 = vmatprep.mubr.bf16.mxu0 %v2647
      %2723 = vmatmul.mubr.bf16.gmra.mrb[0].mxu0 %v2529
      %v2724 = vpop.f32.mrb[0].mxu0
      %v2725 = vadd.f32 0.0, %v2724
      %v2726 = vpop.f32.mrb[0].mxu0
      %v2727 = vpop.f32.mrb[0].mxu0
      %v2728 = vadd.f32 0.0, %v2727
      %v2729 = vpop.f32.mrb[0].mxu0
      %2730 = vmatprep.mubr.bf16.mxu0 %v2650
      %2731 = vmatmul.mubr.bf16.gmra.mrb[0].mxu0 %v2531
      %v2732 = vpop.f32.mrb[0].mxu0
      %v2733 = vadd.f32 0.0, %v2732
      %v2734 = vpop.f32.mrb[0].mxu0
      %v2735 = vpop.f32.mrb[0].mxu0
      %v2736 = vadd.f32 0.0, %v2735
      %v2737 = vpop.f32.mrb[0].mxu0
      %2738 = vmatprep.mubr.bf16.mxu0 %v2653
      %2739 = vmatmul.mubr.bf16.gmra.mrb[0].mxu0 %v2533
      %v2740 = vpop.f32.mrb[0].mxu0
      %v2741 = vadd.f32 0.0, %v2740
      %v2742 = vpop.f32.mrb[0].mxu0
      %v2743 = vpop.f32.mrb[0].mxu0
      %v2744 = vadd.f32 0.0, %v2743
      %v2745 = vpop.f32.mrb[0].mxu0
      %2746 = vmatprep.mubr.bf16.mxu0 %v2656
      %2747 = vmatmul.mubr.bf16.gmra.mrb[0].mxu0 %v2535
      %v2748 = vpop.f32.mrb[0].mxu0
      %v2749 = vadd.f32 0.0, %v2748
      %v2750 = vpop.f32.mrb[0].mxu0
      %v2751 = vpop.f32.mrb[0].mxu0
      %v2752 = vadd.f32 0.0, %v2751
      %v2753 = vpop.f32.mrb[0].mxu0
      %2754 = vdwg.mxu0
      %v2755 = vld [vmem:[#allocation5] sm:$0xff]
      %v2756 = vld [vmem:[#allocation5 + $0x8] sm:$0xff]
      %v2757 = vld [vmem:[#allocation5 + $0x10] sm:$0xff]
      %v2758 = vld [vmem:[#allocation5 + $0x18] sm:$0xff]
      %v2759 = vld [vmem:[#allocation5 + $0x20] sm:$0xff]
      %v2760 = vld [vmem:[#allocation5 + $0x28] sm:$0xff]
      %v2761 = vld [vmem:[#allocation5 + $0x30] sm:$0xff]
      %v2762 = vld [vmem:[#allocation5 + $0x38] sm:$0xff]
      %v2763 = vld [vmem:[#allocation5 + $0x40] sm:$0xff]
      %v2764 = vld [vmem:[#allocation5 + $0x48] sm:$0xff]
      %v2765 = vld [vmem:[#allocation5 + $0x50] sm:$0xff]
      %v2766 = vld [vmem:[#allocation5 + $0x58] sm:$0xff]
      %v2767 = vld [vmem:[#allocation5 + $0x60] sm:$0xff]
      %v2768 = vld [vmem:[#allocation5 + $0x68] sm:$0xff]
      %v2769 = vld [vmem:[#allocation5 + $0x70] sm:$0xff]
      %v2770 = vld [vmem:[#allocation5 + $0x78] sm:$0xff]
      %v2771 = vadd.f32 %v2755, %v2693
      %v2772 = vadd.f32 %v2756, %v2696
      %v2773 = vadd.f32 %v2757, %v2701
      %v2774 = vadd.f32 %v2758, %v2704
      %v2775 = vadd.f32 %v2759, %v2709
      %v2776 = vadd.f32 %v2760, %v2712
      %v2777 = vadd.f32 %v2761, %v2717
      %v2778 = vadd.f32 %v2762, %v2720
      %v2779 = vadd.f32 %v2763, %v2725
      %v2780 = vadd.f32 %v2764, %v2728
      %v2781 = vadd.f32 %v2765, %v2733
      %v2782 = vadd.f32 %v2766, %v2736
      %v2783 = vadd.f32 %v2767, %v2741
      %v2784 = vadd.f32 %v2768, %v2744
      %v2785 = vadd.f32 %v2769, %v2749
      %v2786 = vadd.f32 %v2770, %v2752
      %2787 = vst.msk [vmem:[#allocation5] sm:$0xff] %vm391, %v2771
      %2788 = vst.msk [vmem:[#allocation5 + $0x8] sm:$0xff] %vm391, %v2772
      %2789 = vst.msk [vmem:[#allocation5 + $0x10] sm:$0xff] %vm391, %v2773
      %2790 = vst.msk [vmem:[#allocation5 + $0x18] sm:$0xff] %vm391, %v2774
      %2791 = vst.msk [vmem:[#allocation5 + $0x20] sm:$0xff] %vm391, %v2775
      %2792 = vst.msk [vmem:[#allocation5 + $0x28] sm:$0xff] %vm391, %v2776
      %2793 = vst.msk [vmem:[#allocation5 + $0x30] sm:$0xff] %vm391, %v2777
      %2794 = vst.msk [vmem:[#allocation5 + $0x38] sm:$0xff] %vm391, %v2778
      %2795 = vst.msk [vmem:[#allocation5 + $0x40] sm:$0xff] %vm391, %v2779
      %2796 = vst.msk [vmem:[#allocation5 + $0x48] sm:$0xff] %vm391, %v2780
      %2797 = vst.msk [vmem:[#allocation5 + $0x50] sm:$0xff] %vm391, %v2781
      %2798 = vst.msk [vmem:[#allocation5 + $0x58] sm:$0xff] %vm391, %v2782
      %2799 = vst.msk [vmem:[#allocation5 + $0x60] sm:$0xff] %vm391, %v2783
      %2800 = vst.msk [vmem:[#allocation5 + $0x68] sm:$0xff] %vm391, %v2784
      %2801 = vst.msk [vmem:[#allocation5 + $0x70] sm:$0xff] %vm391, %v2785
      %2802 = vst.msk [vmem:[#allocation5 + $0x78] sm:$0xff] %vm391, %v2786
      %s2803 = scalar_lea.vmem [#allocation3], 48
      %v2804 = vld [vmem:[%s2803] sm:$0xff]
      %v2805 = vld [vmem:[%s2803 + $0x8] sm:$0xff]
      %v2806 = vld [vmem:[%s2803 + $0x18] sm:$0xff]
      %v2807 = vld [vmem:[%s2803 + $0x20] sm:$0xff]
      %v2808 = vld [vmem:[%s2803 + $0x30] sm:$0xff]
      %v2809 = vld [vmem:[%s2803 + $0x38] sm:$0xff]
      %v2810 = vld [vmem:[%s2803 + $0x48] sm:$0xff]
      %v2811 = vld [vmem:[%s2803 + $0x50] sm:$0xff]
      %v2812 = vld [vmem:[%s2803 + $0x60] sm:$0xff]
      %v2813 = vld [vmem:[%s2803 + $0x68] sm:$0xff]
      %v2814 = vld [vmem:[%s2803 + $0x78] sm:$0xff]
      %v2815 = vld [vmem:[%s2803 + $0x80] sm:$0xff]
      %v2816 = vld [vmem:[%s2803 + $0x90] sm:$0xff]
      %v2817 = vld [vmem:[%s2803 + $0x98] sm:$0xff]
      %v2818 = vld [vmem:[%s2803 + $0xa8] sm:$0xff]
      %v2819 = vld [vmem:[%s2803 + $0xb0] sm:$0xff]
      %v2820 = vpack.c.bf16 %v2805, %v2804
      %v2821 = vpack.c.bf16 %v2807, %v2806
      %v2822 = vpack.c.bf16 %v2809, %v2808
      %v2823 = vpack.c.bf16 %v2811, %v2810
      %v2824 = vpack.c.bf16 %v2813, %v2812
      %v2825 = vpack.c.bf16 %v2815, %v2814
      %v2826 = vpack.c.bf16 %v2817, %v2816
      %v2827 = vpack.c.bf16 %v2819, %v2818
      %2828 = vst.msk [vmem:[#allocation4] sm:$0xff] %vm391, %v2820
      %2829 = vst.msk [vmem:[#allocation4 + $0x10] sm:$0xff] %vm391, %v2821
      %2830 = vst.msk [vmem:[#allocation4 + $0x20] sm:$0xff] %vm391, %v2822
      %2831 = vst.msk [vmem:[#allocation4 + $0x30] sm:$0xff] %vm391, %v2823
      %2832 = vst.msk [vmem:[#allocation4 + $0x40] sm:$0xff] %vm391, %v2824
      %2833 = vst.msk [vmem:[#allocation4 + $0x50] sm:$0xff] %vm391, %v2825
      %2834 = vst.msk [vmem:[#allocation4 + $0x60] sm:$0xff] %vm391, %v2826
      %2835 = vst.msk [vmem:[#allocation4 + $0x70] sm:$0xff] %vm391, %v2827
      %v2836 = vld [vmem:[%s2803 + $0x1] sm:$0xff]
      %v2837 = vld [vmem:[%s2803 + $0x9] sm:$0xff]
      %v2838 = vld [vmem:[%s2803 + $0x19] sm:$0xff]
      %v2839 = vld [vmem:[%s2803 + $0x21] sm:$0xff]
      %v2840 = vld [vmem:[%s2803 + $0x31] sm:$0xff]
      %v2841 = vld [vmem:[%s2803 + $0x39] sm:$0xff]
      %v2842 = vld [vmem:[%s2803 + $0x49] sm:$0xff]
      %v2843 = vld [vmem:[%s2803 + $0x51] sm:$0xff]
      %v2844 = vld [vmem:[%s2803 + $0x61] sm:$0xff]
      %v2845 = vld [vmem:[%s2803 + $0x69] sm:$0xff]
      %v2846 = vld [vmem:[%s2803 + $0x79] sm:$0xff]
      %v2847 = vld [vmem:[%s2803 + $0x81] sm:$0xff]
      %v2848 = vld [vmem:[%s2803 + $0x91] sm:$0xff]
      %v2849 = vld [vmem:[%s2803 + $0x99] sm:$0xff]
      %v2850 = vld [vmem:[%s2803 + $0xa9] sm:$0xff]
      %v2851 = vld [vmem:[%s2803 + $0xb1] sm:$0xff]
      %v2852 = vpack.c.bf16 %v2837, %v2836
      %v2853 = vpack.c.bf16 %v2839, %v2838
      %v2854 = vpack.c.bf16 %v2841, %v2840
      %v2855 = vpack.c.bf16 %v2843, %v2842
      %v2856 = vpack.c.bf16 %v2845, %v2844
      %v2857 = vpack.c.bf16 %v2847, %v2846
      %v2858 = vpack.c.bf16 %v2849, %v2848
      %v2859 = vpack.c.bf16 %v2851, %v2850
      %2868 = vrot.lane.b32.xlu0 %v2852, 64
      %v2869 = vpop.permute.xlu0 %2868
      %2870 = vrot.lane.b32.xlu0 %v2853, 64
      %v2871 = vpop.permute.xlu0 %2870
      %2872 = vrot.lane.b32.xlu0 %v2854, 64
      %v2873 = vpop.permute.xlu0 %2872
      %2874 = vrot.lane.b32.xlu0 %v2855, 64
      %v2875 = vpop.permute.xlu0 %2874
      %2876 = vrot.lane.b32.xlu0 %v2856, 64
      %v2877 = vpop.permute.xlu0 %2876
      %2878 = vrot.lane.b32.xlu0 %v2857, 64
      %v2879 = vpop.permute.xlu0 %2878
      %2880 = vrot.lane.b32.xlu0 %v2858, 64
      %v2881 = vpop.permute.xlu0 %2880
      %2882 = vrot.lane.b32.xlu0 %v2859, 64
      %v2883 = vpop.permute.xlu0 %2882
      %2892 = vst.msk [vmem:[#allocation4] sm:$0xff] %vm601, %v2869
      %2893 = vst.msk [vmem:[#allocation4 + $0x10] sm:$0xff] %vm601, %v2871
      %2894 = vst.msk [vmem:[#allocation4 + $0x20] sm:$0xff] %vm601, %v2873
      %2895 = vst.msk [vmem:[#allocation4 + $0x30] sm:$0xff] %vm601, %v2875
      %2896 = vst.msk [vmem:[#allocation4 + $0x40] sm:$0xff] %vm601, %v2877
      %2897 = vst.msk [vmem:[#allocation4 + $0x50] sm:$0xff] %vm601, %v2879
      %2898 = vst.msk [vmem:[#allocation4 + $0x60] sm:$0xff] %vm601, %v2881
      %2899 = vst.msk [vmem:[#allocation4 + $0x70] sm:$0xff] %vm601, %v2883
      %v2900 = vld [vmem:[%s2803 + $0x2] sm:$0xff]
      %v2901 = vld [vmem:[%s2803 + $0xa] sm:$0xff]
      %v2902 = vld [vmem:[%s2803 + $0x1a] sm:$0xff]
      %v2903 = vld [vmem:[%s2803 + $0x22] sm:$0xff]
      %v2904 = vld [vmem:[%s2803 + $0x32] sm:$0xff]
      %v2905 = vld [vmem:[%s2803 + $0x3a] sm:$0xff]
      %v2906 = vld [vmem:[%s2803 + $0x4a] sm:$0xff]
      %v2907 = vld [vmem:[%s2803 + $0x52] sm:$0xff]
      %v2908 = vld [vmem:[%s2803 + $0x62] sm:$0xff]
      %v2909 = vld [vmem:[%s2803 + $0x6a] sm:$0xff]
      %v2910 = vld [vmem:[%s2803 + $0x7a] sm:$0xff]
      %v2911 = vld [vmem:[%s2803 + $0x82] sm:$0xff]
      %v2912 = vld [vmem:[%s2803 + $0x92] sm:$0xff]
      %v2913 = vld [vmem:[%s2803 + $0x9a] sm:$0xff]
      %v2914 = vld [vmem:[%s2803 + $0xaa] sm:$0xff]
      %v2915 = vld [vmem:[%s2803 + $0xb2] sm:$0xff]
      %v2916 = vpack.c.bf16 %v2901, %v2900
      %v2917 = vpack.c.bf16 %v2903, %v2902
      %v2918 = vpack.c.bf16 %v2905, %v2904
      %v2919 = vpack.c.bf16 %v2907, %v2906
      %v2920 = vpack.c.bf16 %v2909, %v2908
      %v2921 = vpack.c.bf16 %v2911, %v2910
      %v2922 = vpack.c.bf16 %v2913, %v2912
      %v2923 = vpack.c.bf16 %v2915, %v2914
      %2924 = vst.msk [vmem:[#allocation4 + $0x8] sm:$0xff] %vm391, %v2916
      %2925 = vst.msk [vmem:[#allocation4 + $0x18] sm:$0xff] %vm391, %v2917
      %2926 = vst.msk [vmem:[#allocation4 + $0x28] sm:$0xff] %vm391, %v2918
      %2927 = vst.msk [vmem:[#allocation4 + $0x38] sm:$0xff] %vm391, %v2919
      %2928 = vst.msk [vmem:[#allocation4 + $0x48] sm:$0xff] %vm391, %v2920
      %2929 = vst.msk [vmem:[#allocation4 + $0x58] sm:$0xff] %vm391, %v2921
      %2930 = vst.msk [vmem:[#allocation4 + $0x68] sm:$0xff] %vm391, %v2922
      %2931 = vst.msk [vmem:[#allocation4 + $0x78] sm:$0xff] %vm391, %v2923
      %v2932 = vld [vmem:[#allocation4] sm:$0xff]
      %v2933 = vld [vmem:[#allocation4 + $0x8] sm:$0xff]
      %v2934 = vld [vmem:[#allocation4 + $0x10] sm:$0xff]
      %v2935 = vld [vmem:[#allocation4 + $0x18] sm:$0xff]
      %v2936 = vld [vmem:[#allocation4 + $0x20] sm:$0xff]
      %v2937 = vld [vmem:[#allocation4 + $0x28] sm:$0xff]
      %v2938 = vld [vmem:[#allocation4 + $0x30] sm:$0xff]
      %v2939 = vld [vmem:[#allocation4 + $0x38] sm:$0xff]
      %v2940 = vld [vmem:[#allocation4 + $0x40] sm:$0xff]
      %v2941 = vld [vmem:[#allocation4 + $0x48] sm:$0xff]
      %v2942 = vld [vmem:[#allocation4 + $0x50] sm:$0xff]
      %v2943 = vld [vmem:[#allocation4 + $0x58] sm:$0xff]
      %v2944 = vld [vmem:[#allocation4 + $0x60] sm:$0xff]
      %v2945 = vld [vmem:[#allocation4 + $0x68] sm:$0xff]
      %v2946 = vld [vmem:[#allocation4 + $0x70] sm:$0xff]
      %v2947 = vld [vmem:[#allocation4 + $0x78] sm:$0xff]
      %s2948 = scalar_lea.vmem %s3, 192
      %v2949 = vld [vmem:[%s2948] sm:$0xf]
      %v2950 = vld [vmem:[%s2948 + $0x4] sm:$0xf]
      %v2951 = vld [vmem:[%s2948 + $0x8] sm:$0xf]
      %v2952 = vld [vmem:[%s2948 + $0xc] sm:$0xf]
      %v2953 = vld [vmem:[%s2948 + $0x10] sm:$0xf]
      %v2954 = vld [vmem:[%s2948 + $0x14] sm:$0xf]
      %v2955 = vld [vmem:[%s2948 + $0x18] sm:$0xf]
      %v2956 = vld [vmem:[%s2948 + $0x1c] sm:$0xf]
      %v2957 = vld [vmem:[%s2948 + $0x20] sm:$0xf]
      %v2958 = vld [vmem:[%s2948 + $0x24] sm:$0xf]
      %v2959 = vld [vmem:[%s2948 + $0x28] sm:$0xf]
      %v2960 = vld [vmem:[%s2948 + $0x2c] sm:$0xf]
      %v2961 = vld [vmem:[%s2948 + $0x30] sm:$0xf]
      %v2962 = vld [vmem:[%s2948 + $0x34] sm:$0xf]
      %v2963 = vld [vmem:[%s2948 + $0x38] sm:$0xf]
      %v2964 = vld [vmem:[%s2948 + $0x3c] sm:$0xf]
      %v2965 = vld [vmem:[%s2948 + $0x40] sm:$0xf]
      %v2966 = vld [vmem:[%s2948 + $0x44] sm:$0xf]
      %v2967 = vld [vmem:[%s2948 + $0x48] sm:$0xf]
      %v2968 = vld [vmem:[%s2948 + $0x4c] sm:$0xf]
      %v2969 = vld [vmem:[%s2948 + $0x50] sm:$0xf]
      %v2970 = vld [vmem:[%s2948 + $0x54] sm:$0xf]
      %v2971 = vld [vmem:[%s2948 + $0x58] sm:$0xf]
      %v2972 = vld [vmem:[%s2948 + $0x5c] sm:$0xf]
      %v2997 = vunpack.c.l.b16 %v2949
      %v2998 = vunpack.c.l.b16 %v2950
      %v2999 = vunpack.c.l.b16 %v2951
      %v3000 = vunpack.c.l.b16 %v2952
      %v3001 = vunpack.c.l.b16 %v2953
      %v3002 = vunpack.c.l.b16 %v2954
      %v3003 = vunpack.c.l.b16 %v2955
      %v3004 = vunpack.c.l.b16 %v2956
      %v3005 = vunpack.c.l.b16 %v2957
      %v3006 = vunpack.c.l.b16 %v2958
      %v3007 = vunpack.c.l.b16 %v2959
      %v3008 = vunpack.c.l.b16 %v2960
      %v3009 = vunpack.c.l.b16 %v2961
      %v3010 = vunpack.c.l.b16 %v2962
      %v3011 = vunpack.c.l.b16 %v2963
      %v3012 = vunpack.c.l.b16 %v2964
      %v3013 = vunpack.c.l.b16 %v2965
      %v3014 = vunpack.c.l.b16 %v2966
      %v3015 = vunpack.c.l.b16 %v2967
      %v3016 = vunpack.c.l.b16 %v2968
      %v3017 = vunpack.c.l.b16 %v2969
      %v3018 = vunpack.c.l.b16 %v2970
      %v3019 = vunpack.c.l.b16 %v2971
      %v3020 = vunpack.c.l.b16 %v2972
      %v3021 = vpack.c.b16 %v2998, %v2997
      %v3022 = vpack.c.b16 %v3000, %v2999
      %v3023 = vpack.c.b16 %v3002, %v3001
      %v3024 = vpack.c.b16 %v3004, %v3003
      %v3025 = vpack.c.b16 %v3006, %v3005
      %v3026 = vpack.c.b16 %v3008, %v3007
      %v3027 = vpack.c.b16 %v3010, %v3009
      %v3028 = vpack.c.b16 %v3012, %v3011
      %v3029 = vpack.c.b16 %v3014, %v3013
      %v3030 = vpack.c.b16 %v3016, %v3015
      %v3031 = vpack.c.b16 %v3018, %v3017
      %v3032 = vpack.c.b16 %v3020, %v3019
      %v3046 = vsel %vm391, %v2933, 0
      %v3049 = vsel %vm391, %v2935, 0
      %v3052 = vsel %vm391, %v2937, 0
      %v3055 = vsel %vm391, %v2939, 0
      %v3058 = vsel %vm391, %v2941, 0
      %v3061 = vsel %vm391, %v2943, 0
      %v3064 = vsel %vm391, %v2945, 0
      %v3067 = vsel %vm391, %v2947, 0
      %3069 = vmatprep.subr.bf16.mxu0 0
      %3070 = vmatpush1.bf16.msra.mxu0 %v3021
      %3071 = vmatprep.subr.bf16.mxu0 0
      %3072 = vmatpush1.bf16.msra.mxu0 %v3022
      %3073 = vmatprep.subr.bf16.mxu0 0
      %3074 = vmatpush1.bf16.msra.mxu0 %v3023
      %3075 = vmatprep.subr.bf16.mxu0 0
      %3076 = vmatpush1.bf16.msra.mxu0 %v3024
      %3077 = vmatprep.subr.bf16.mxu0 0
      %3078 = vmatpush1.bf16.msra.mxu0 %v3025
      %3079 = vmatprep.subr.bf16.mxu0 0
      %3080 = vmatpush1.bf16.msra.mxu0 %v3026
      %3081 = vmatprep.subr.bf16.mxu0 0
      %3082 = vmatpush1.bf16.msra.mxu0 %v3027
      %3083 = vmatprep.subr.bf16.mxu0 0
      %3084 = vmatpush1.bf16.msra.mxu0 %v3028
      %3085 = vmatprep.subr.bf16.mxu0 0
      %3086 = vmatpush1.bf16.msra.mxu0 %v3029
      %3087 = vmatprep.subr.bf16.mxu0 0
      %3088 = vmatpush1.bf16.msra.mxu0 %v3030
      %3089 = vmatprep.subr.bf16.mxu0 0
      %3090 = vmatpush1.bf16.msra.mxu0 %v3031
      %3091 = vmatprep.subr.bf16.mxu0 0
      %3092 = vmatpush1.bf16.msra.mxu0 %v3032
      %3093 = vmatprep.subr.bf16.mxu0 0
      %3094 = vmatpush1.bf16.msra.mxu0 0
      %3095 = vmatprep.subr.bf16.mxu0 0
      %3096 = vmatpush1.bf16.msra.mxu0 0
      %3097 = vmatprep.subr.bf16.mxu0 0
      %3098 = vmatpush1.bf16.msra.mxu0 0
      %3099 = vmatprep.subr.bf16.mxu0 0
      %3100 = vmatpush1.bf16.msra.mxu0 0
      %3101 = vmatprep.mubr.bf16.mxu0 %v3046
      %3102 = vmatmul.mubr.bf16.gmra.mrb[0].mxu0 %v2932
      %v3103 = vpop.f32.mrb[0].mxu0
      %v3104 = vadd.f32 0.0, %v3103
      %v3105 = vpop.f32.mrb[0].mxu0
      %v3106 = vpop.f32.mrb[0].mxu0
      %v3107 = vadd.f32 0.0, %v3106
      %v3108 = vpop.f32.mrb[0].mxu0
      %3109 = vmatprep.mubr.bf16.mxu0 %v3049
      %3110 = vmatmul.mubr.bf16.gmra.mrb[0].mxu0 %v2934
      %v3111 = vpop.f32.mrb[0].mxu0
      %v3112 = vadd.f32 0.0, %v3111
      %v3113 = vpop.f32.mrb[0].mxu0
      %v3114 = vpop.f32.mrb[0].mxu0
      %v3115 = vadd.f32 0.0, %v3114
      %v3116 = vpop.f32.mrb[0].mxu0
      %3117 = vmatprep.mubr.bf16.mxu0 %v3052
      %3118 = vmatmul.mubr.bf16.gmra.mrb[0].mxu0 %v2936
      %v3119 = vpop.f32.mrb[0].mxu0
      %v3120 = vadd.f32 0.0, %v3119
      %v3121 = vpop.f32.mrb[0].mxu0
      %v3122 = vpop.f32.mrb[0].mxu0
      %v3123 = vadd.f32 0.0, %v3122
      %v3124 = vpop.f32.mrb[0].mxu0
      %3125 = vmatprep.mubr.bf16.mxu0 %v3055
      %3126 = vmatmul.mubr.bf16.gmra.mrb[0].mxu0 %v2938
      %v3127 = vpop.f32.mrb[0].mxu0
      %v3128 = vadd.f32 0.0, %v3127
      %v3129 = vpop.f32.mrb[0].mxu0
      %v3130 = vpop.f32.mrb[0].mxu0
      %v3131 = vadd.f32 0.0, %v3130
      %v3132 = vpop.f32.mrb[0].mxu0
      %3133 = vmatprep.mubr.bf16.mxu0 %v3058
      %3134 = vmatmul.mubr.bf16.gmra.mrb[0].mxu0 %v2940
      %v3135 = vpop.f32.mrb[0].mxu0
      %v3136 = vadd.f32 0.0, %v3135
      %v3137 = vpop.f32.mrb[0].mxu0
      %v3138 = vpop.f32.mrb[0].mxu0
      %v3139 = vadd.f32 0.0, %v3138
      %v3140 = vpop.f32.mrb[0].mxu0
      %3141 = vmatprep.mubr.bf16.mxu0 %v3061
      %3142 = vmatmul.mubr.bf16.gmra.mrb[0].mxu0 %v2942
      %v3143 = vpop.f32.mrb[0].mxu0
      %v3144 = vadd.f32 0.0, %v3143
      %v3145 = vpop.f32.mrb[0].mxu0
      %v3146 = vpop.f32.mrb[0].mxu0
      %v3147 = vadd.f32 0.0, %v3146
      %v3148 = vpop.f32.mrb[0].mxu0
      %3149 = vmatprep.mubr.bf16.mxu0 %v3064
      %3150 = vmatmul.mubr.bf16.gmra.mrb[0].mxu0 %v2944
      %v3151 = vpop.f32.mrb[0].mxu0
      %v3152 = vadd.f32 0.0, %v3151
      %v3153 = vpop.f32.mrb[0].mxu0
      %v3154 = vpop.f32.mrb[0].mxu0
      %v3155 = vadd.f32 0.0, %v3154
      %v3156 = vpop.f32.mrb[0].mxu0
      %3157 = vmatprep.mubr.bf16.mxu0 %v3067
      %3158 = vmatmul.mubr.bf16.gmra.mrb[0].mxu0 %v2946
      %v3159 = vpop.f32.mrb[0].mxu0
      %v3160 = vadd.f32 0.0, %v3159
      %v3161 = vpop.f32.mrb[0].mxu0
      %v3162 = vpop.f32.mrb[0].mxu0
      %v3163 = vadd.f32 0.0, %v3162
      %v3164 = vpop.f32.mrb[0].mxu0
      %3165 = vdwg.mxu0
      %v3166 = vld [vmem:[#allocation5] sm:$0xff]
      %v3167 = vld [vmem:[#allocation5 + $0x8] sm:$0xff]
      %v3168 = vld [vmem:[#allocation5 + $0x10] sm:$0xff]
      %v3169 = vld [vmem:[#allocation5 + $0x18] sm:$0xff]
      %v3170 = vld [vmem:[#allocation5 + $0x20] sm:$0xff]
      %v3171 = vld [vmem:[#allocation5 + $0x28] sm:$0xff]
      %v3172 = vld [vmem:[#allocation5 + $0x30] sm:$0xff]
      %v3173 = vld [vmem:[#allocation5 + $0x38] sm:$0xff]
      %v3174 = vld [vmem:[#allocation5 + $0x40] sm:$0xff]
      %v3175 = vld [vmem:[#allocation5 + $0x48] sm:$0xff]
      %v3176 = vld [vmem:[#allocation5 + $0x50] sm:$0xff]
      %v3177 = vld [vmem:[#allocation5 + $0x58] sm:$0xff]
      %v3178 = vld [vmem:[#allocation5 + $0x60] sm:$0xff]
      %v3179 = vld [vmem:[#allocation5 + $0x68] sm:$0xff]
      %v3180 = vld [vmem:[#allocation5 + $0x70] sm:$0xff]
      %v3181 = vld [vmem:[#allocation5 + $0x78] sm:$0xff]
      %v3182 = vadd.f32 %v3166, %v3104
      %v3183 = vadd.f32 %v3167, %v3107
      %v3184 = vadd.f32 %v3168, %v3112
      %v3185 = vadd.f32 %v3169, %v3115
      %v3186 = vadd.f32 %v3170, %v3120
      %v3187 = vadd.f32 %v3171, %v3123
      %v3188 = vadd.f32 %v3172, %v3128
      %v3189 = vadd.f32 %v3173, %v3131
      %v3190 = vadd.f32 %v3174, %v3136
      %v3191 = vadd.f32 %v3175, %v3139
      %v3192 = vadd.f32 %v3176, %v3144
      %v3193 = vadd.f32 %v3177, %v3147
      %v3194 = vadd.f32 %v3178, %v3152
      %v3195 = vadd.f32 %v3179, %v3155
      %v3196 = vadd.f32 %v3180, %v3160
      %v3197 = vadd.f32 %v3181, %v3163
      %3198 = vst.msk [vmem:[#allocation5] sm:$0xff] %vm391, %v3182
      %3199 = vst.msk [vmem:[#allocation5 + $0x8] sm:$0xff] %vm391, %v3183
      %3200 = vst.msk [vmem:[#allocation5 + $0x10] sm:$0xff] %vm391, %v3184
      %3201 = vst.msk [vmem:[#allocation5 + $0x18] sm:$0xff] %vm391, %v3185
      %3202 = vst.msk [vmem:[#allocation5 + $0x20] sm:$0xff] %vm391, %v3186
      %3203 = vst.msk [vmem:[#allocation5 + $0x28] sm:$0xff] %vm391, %v3187
      %3204 = vst.msk [vmem:[#allocation5 + $0x30] sm:$0xff] %vm391, %v3188
      %3205 = vst.msk [vmem:[#allocation5 + $0x38] sm:$0xff] %vm391, %v3189
      %3206 = vst.msk [vmem:[#allocation5 + $0x40] sm:$0xff] %vm391, %v3190
      %3207 = vst.msk [vmem:[#allocation5 + $0x48] sm:$0xff] %vm391, %v3191
      %3208 = vst.msk [vmem:[#allocation5 + $0x50] sm:$0xff] %vm391, %v3192
      %3209 = vst.msk [vmem:[#allocation5 + $0x58] sm:$0xff] %vm391, %v3193
      %3210 = vst.msk [vmem:[#allocation5 + $0x60] sm:$0xff] %vm391, %v3194
      %3211 = vst.msk [vmem:[#allocation5 + $0x68] sm:$0xff] %vm391, %v3195
      %3212 = vst.msk [vmem:[#allocation5 + $0x70] sm:$0xff] %vm391, %v3196
      %3213 = vst.msk [vmem:[#allocation5 + $0x78] sm:$0xff] %vm391, %v3197
      %v3214 = vld [vmem:[#allocation5] sm:$0xff]
      %v3215 = vld [vmem:[#allocation5 + $0x8] sm:$0xff]
      %v3216 = vld [vmem:[#allocation5 + $0x10] sm:$0xff]
      %v3217 = vld [vmem:[#allocation5 + $0x18] sm:$0xff]
      %v3218 = vld [vmem:[#allocation5 + $0x20] sm:$0xff]
      %v3219 = vld [vmem:[#allocation5 + $0x28] sm:$0xff]
      %v3220 = vld [vmem:[#allocation5 + $0x30] sm:$0xff]
      %v3221 = vld [vmem:[#allocation5 + $0x38] sm:$0xff]
      %v3222 = vld [vmem:[#allocation5 + $0x40] sm:$0xff]
      %v3223 = vld [vmem:[#allocation5 + $0x48] sm:$0xff]
      %v3224 = vld [vmem:[#allocation5 + $0x50] sm:$0xff]
      %v3225 = vld [vmem:[#allocation5 + $0x58] sm:$0xff]
      %v3226 = vld [vmem:[#allocation5 + $0x60] sm:$0xff]
      %v3227 = vld [vmem:[#allocation5 + $0x68] sm:$0xff]
      %v3228 = vld [vmem:[#allocation5 + $0x70] sm:$0xff]
      %v3229 = vld [vmem:[#allocation5 + $0x78] sm:$0xff]
      %v3230 = vld [vmem:[%s4] sm:$0x1]
      %v3232 = vlaneseq
      %v3233 = vshrl.u32 %v3232, 7
      %v3234 = vsub.s32 0, %v3233
      %v3235 = vrot.slane %v3230, %v3234
      %v3237 = vadd.f32 %v3214, %v3235
      %v3238 = vadd.f32 %v3215, %v3235
      %v3239 = vadd.f32 %v3216, %v3235
      %v3240 = vadd.f32 %v3217, %v3235
      %v3241 = vadd.f32 %v3218, %v3235
      %v3242 = vadd.f32 %v3219, %v3235
      %v3243 = vadd.f32 %v3220, %v3235
      %v3244 = vadd.f32 %v3221, %v3235
      %v3245 = vadd.f32 %v3222, %v3235
      %v3246 = vadd.f32 %v3223, %v3235
      %v3247 = vadd.f32 %v3224, %v3235
      %v3248 = vadd.f32 %v3225, %v3235
      %v3249 = vadd.f32 %v3226, %v3235
      %v3250 = vadd.f32 %v3227, %v3235
      %v3251 = vadd.f32 %v3228, %v3235
      %v3252 = vadd.f32 %v3229, %v3235
      %s3253 = scalar_lea.vmem %s344, %s347
      %3254 = vst.msk [vmem:[%s3253] sm:$0xff] %vm391, %v3237
      %3255 = vst.msk [vmem:[%s3253 + $0x8] sm:$0xff] %vm391, %v3238
      %3256 = vst.msk [vmem:[%s3253 + $0x10] sm:$0xff] %vm391, %v3239
      %3257 = vst.msk [vmem:[%s3253 + $0x18] sm:$0xff] %vm391, %v3240
      %3258 = vst.msk [vmem:[%s3253 + $0x20] sm:$0xff] %vm391, %v3241
      %3259 = vst.msk [vmem:[%s3253 + $0x28] sm:$0xff] %vm391, %v3242
      %3260 = vst.msk [vmem:[%s3253 + $0x30] sm:$0xff] %vm391, %v3243
      %3261 = vst.msk [vmem:[%s3253 + $0x38] sm:$0xff] %vm391, %v3244
      %3262 = vst.msk [vmem:[%s3253 + $0x40] sm:$0xff] %vm391, %v3245
      %3263 = vst.msk [vmem:[%s3253 + $0x48] sm:$0xff] %vm391, %v3246
      %3264 = vst.msk [vmem:[%s3253 + $0x50] sm:$0xff] %vm391, %v3247
      %3265 = vst.msk [vmem:[%s3253 + $0x58] sm:$0xff] %vm391, %v3248
      %3266 = vst.msk [vmem:[%s3253 + $0x60] sm:$0xff] %vm391, %v3249
      %3267 = vst.msk [vmem:[%s3253 + $0x68] sm:$0xff] %vm391, %v3250
      %3268 = vst.msk [vmem:[%s3253 + $0x70] sm:$0xff] %vm391, %v3251
      %3269 = vst.msk [vmem:[%s3253 + $0x78] sm:$0xff] %vm391, %v3252
      %p3270 = scmp.eq.s32.totalorder %s25, 0
      // Predicated region
      $region65: #{tpu_custom_call.1} parent=55 // pred_check
        %p3271 = pneg %p3270
      $region66: #{tpu_custom_call.1} parent=55 // pred_check_branch
        %3273 = sbr.rel (%p3271) target = $region68
      $region67: #{tpu_custom_call.1} parent=55 // pred_region
        %3274 = vst.msk [vmem:[#allocation6] sm:$0x1] %vm348, 0.0
      $region68: #{tpu_custom_call.1} parent=55 // pred_fallthru
        _
      %v3275 = vld [vmem:[#allocation6] sm:$0x1]
      %v3276 = vsel %vm391, %v3237, 0.0
      %v3277 = vsel %vm391, %v3238, 0.0
      %v3278 = vadd.f32 %v3276, %v3277
      %v3279 = vsel %vm391, %v3239, 0.0
      %v3280 = vadd.f32 %v3278, %v3279
      %v3281 = vsel %vm391, %v3240, 0.0
      %v3282 = vadd.f32 %v3280, %v3281
      %v3283 = vsel %vm391, %v3241, 0.0
      %v3284 = vadd.f32 %v3282, %v3283
      %v3285 = vsel %vm391, %v3242, 0.0
      %v3286 = vadd.f32 %v3284, %v3285
      %v3287 = vsel %vm391, %v3243, 0.0
      %v3288 = vadd.f32 %v3286, %v3287
      %v3289 = vsel %vm391, %v3244, 0.0
      %v3290 = vadd.f32 %v3288, %v3289
      %v3291 = vsel %vm391, %v3245, 0.0
      %v3292 = vadd.f32 %v3290, %v3291
      %v3293 = vsel %vm391, %v3246, 0.0
      %v3294 = vadd.f32 %v3292, %v3293
      %v3295 = vsel %vm391, %v3247, 0.0
      %v3296 = vadd.f32 %v3294, %v3295
      %v3297 = vsel %vm391, %v3248, 0.0
      %v3298 = vadd.f32 %v3296, %v3297
      %v3299 = vsel %vm391, %v3249, 0.0
      %v3300 = vadd.f32 %v3298, %v3299
      %v3301 = vsel %vm391, %v3250, 0.0
      %v3302 = vadd.f32 %v3300, %v3301
      %v3303 = vsel %vm391, %v3251, 0.0
      %v3304 = vadd.f32 %v3302, %v3303
      %v3305 = vsel %vm391, %v3252, 0.0
      %v3306 = vadd.f32 %v3304, %v3305
      %v3307 = vrot.slane %v3306, 4
      %v3308 = vadd.f32 %v3306, %v3307
      %v3309 = vrot.slane %v3308, 2
      %v3310 = vadd.f32 %v3308, %v3309
      %v3311 = vrot.slane %v3310, 1
      %v3312 = vadd.f32 %v3310, %v3311
      %v3313 = vadd.f32 %v3275, %v3312
      %3314 = vst.msk [vmem:[#allocation6] sm:$0x1] %vm348, %v3313
      %p3315 = scmp.eq.s32.totalorder %s25, 1
      // Predicated region
      $region69: #{tpu_custom_call.1} parent=55 // pred_check
        %p3316 = pneg %p3315
      $region70: #{tpu_custom_call.1} parent=55 // pred_check_branch
        %3318 = sbr.rel (%p3316) target = $region72
      $region71: #{tpu_custom_call.1} parent=55 // pred_region
        %v3319 = vld [vmem:[#allocation6] sm:$0x1]
        %v3320 = vmul.f32 %v3319, 0.00390625
        %v3321 = vld [vmem:[%s5] sm:$0xff]
        %v3322 = vld [vmem:[%s5 + $0x8] sm:$0xff]
        %v3323 = vld [vmem:[%s5 + $0x10] sm:$0xff]
        %v3324 = vld [vmem:[%s5 + $0x18] sm:$0xff]
        %v3325 = vld [vmem:[%s5 + $0x20] sm:$0xff]
        %v3326 = vld [vmem:[%s5 + $0x28] sm:$0xff]
        %v3327 = vld [vmem:[%s5 + $0x30] sm:$0xff]
        %v3328 = vld [vmem:[%s5 + $0x38] sm:$0xff]
        %v3329 = vld [vmem:[%s6] sm:$0x1]
        %v3331 = vsel %vm391, %v3320, 0
        %3333 = vmatprep.subr.mxu0 0.0
        %3334 = vmatpush1.msra.mxu0 %v3321
        %3335 = vmatprep.subr.mxu0 0.0
        %3336 = vmatpush1.msra.mxu0 %v3322
        %3337 = vmatprep.subr.mxu0 0.0
        %3338 = vmatpush1.msra.mxu0 %v3323
        %3339 = vmatprep.subr.mxu0 0.0
        %3340 = vmatpush1.msra.mxu0 %v3324
        %3341 = vmatprep.subr.mxu0 0.0
        %3342 = vmatpush1.msra.mxu0 %v3325
        %3343 = vmatprep.subr.mxu0 0.0
        %3344 = vmatpush1.msra.mxu0 %v3326
        %3345 = vmatprep.subr.mxu0 0.0
        %3346 = vmatpush1.msra.mxu0 %v3327
        %3347 = vmatprep.subr.mxu0 0.0
        %3348 = vmatpush1.msra.mxu0 %v3328
        %3349 = vmatprep.subr.mxu0 0.0
        %3350 = vmatpush1.msra.mxu0 0.0
        %3351 = vmatprep.subr.mxu0 0.0
        %3352 = vmatpush1.msra.mxu0 0.0
        %3353 = vmatprep.subr.mxu0 0.0
        %3354 = vmatpush1.msra.mxu0 0.0
        %3355 = vmatprep.subr.mxu0 0.0
        %3356 = vmatpush1.msra.mxu0 0.0
        %3357 = vmatprep.subr.mxu0 0.0
        %3358 = vmatpush1.msra.mxu0 0.0
        %3359 = vmatprep.subr.mxu0 0.0
        %3360 = vmatpush1.msra.mxu0 0.0
        %3361 = vmatprep.subr.mxu0 0.0
        %3362 = vmatpush1.msra.mxu0 0.0
        %3363 = vmatprep.subr.mxu0 0.0
        %3364 = vmatpush1.msra.mxu0 0.0
        %3365 = vmatprep.subr.mxu0 0.0
        %3366 = vmatpush1.msra.mxu0 0.0
        %3367 = vmatprep.subr.mxu0 0.0
        %3368 = vmatpush1.msra.mxu0 0.0
        %3369 = vmatprep.subr.mxu0 0.0
        %3370 = vmatpush1.msra.mxu0 0.0
        %3371 = vmatprep.subr.mxu0 0.0
        %3372 = vmatpush1.msra.mxu0 0.0
        %3373 = vmatprep.subr.mxu0 0.0
        %3374 = vmatpush1.msra.mxu0 0.0
        %3375 = vmatprep.subr.mxu0 0.0
        %3376 = vmatpush1.msra.mxu0 0.0
        %3377 = vmatprep.subr.mxu0 0.0
        %3378 = vmatpush1.msra.mxu0 0.0
        %3379 = vmatprep.subr.mxu0 0.0
        %3380 = vmatpush1.msra.mxu0 0.0
        %3381 = vmatprep.subr.mxu0 0.0
        %3382 = vmatpush1.msra.mxu0 0.0
        %3383 = vmatprep.subr.mxu0 0.0
        %3384 = vmatpush1.msra.mxu0 0.0
        %3385 = vmatprep.subr.mxu0 0.0
        %3386 = vmatpush1.msra.mxu0 0.0
        %3387 = vmatprep.subr.mxu0 0.0
        %3388 = vmatpush1.msra.mxu0 0.0
        %3389 = vmatprep.subr.mxu0 0.0
        %3390 = vmatpush1.msra.mxu0 0.0
        %3391 = vmatprep.subr.mxu0 0.0
        %3392 = vmatpush1.msra.mxu0 0.0
        %3393 = vmatprep.subr.mxu0 0.0
        %3394 = vmatpush1.msra.mxu0 0.0
        %3395 = vmatprep.subr.mxu0 0.0
        %3396 = vmatpush1.msra.mxu0 0.0
        %3397 = vmatprep.mubr.f32.mxu0 0.0
        %3398 = vmatmul.mubr.f32.gmra.mrb[0].mxu0 %v3331
        %v3399 = vpop.f32.mrb[0].mxu0
        %v3400 = vadd.f32 %v3329, %v3399
        %v3401 = vpop.f32.mrb[0].mxu0
        %3402 = vdwg.mxu0
        %v3403 = vmax.f32 %v3400, 0.0
        %v3404 = vld [vmem:[%s7] sm:$0xf]
        %v3405 = vld [vmem:[%s8] sm:$0x1]
        %vm3406 = vcmask 31744
        %v3408 = vsel %vm3406, %v3403, 0
        %vm3410 = vcmask 1043456
        %v3412 = vsel %vm3410, %v3404, 0
        %3414 = vmatprep.subr.mxu0 0.0
        %3415 = vmatpush1.msra.mxu0 %v3412
        %3416 = vmatprep.subr.mxu0 0.0
        %3417 = vmatpush1.msra.mxu0 0.0
        %3418 = vmatprep.subr.mxu0 0.0
        %3419 = vmatpush1.msra.mxu0 0.0
        %3420 = vmatprep.subr.mxu0 0.0
        %3421 = vmatpush1.msra.mxu0 0.0
        %3422 = vmatprep.subr.mxu0 0.0
        %3423 = vmatpush1.msra.mxu0 0.0
        %3424 = vmatprep.subr.mxu0 0.0
        %3425 = vmatpush1.msra.mxu0 0.0
        %3426 = vmatprep.subr.mxu0 0.0
        %3427 = vmatpush1.msra.mxu0 0.0
        %3428 = vmatprep.subr.mxu0 0.0
        %3429 = vmatpush1.msra.mxu0 0.0
        %3430 = vmatprep.subr.mxu0 0.0
        %3431 = vmatpush1.msra.mxu0 0.0
        %3432 = vmatprep.subr.mxu0 0.0
        %3433 = vmatpush1.msra.mxu0 0.0
        %3434 = vmatprep.subr.mxu0 0.0
        %3435 = vmatpush1.msra.mxu0 0.0
        %3436 = vmatprep.subr.mxu0 0.0
        %3437 = vmatpush1.msra.mxu0 0.0
        %3438 = vmatprep.subr.mxu0 0.0
        %3439 = vmatpush1.msra.mxu0 0.0
        %3440 = vmatprep.subr.mxu0 0.0
        %3441 = vmatpush1.msra.mxu0 0.0
        %3442 = vmatprep.subr.mxu0 0.0
        %3443 = vmatpush1.msra.mxu0 0.0
        %3444 = vmatprep.subr.mxu0 0.0
        %3445 = vmatpush1.msra.mxu0 0.0
        %3446 = vmatprep.subr.mxu0 0.0
        %3447 = vmatpush1.msra.mxu0 0.0
        %3448 = vmatprep.subr.mxu0 0.0
        %3449 = vmatpush1.msra.mxu0 0.0
        %3450 = vmatprep.subr.mxu0 0.0
        %3451 = vmatpush1.msra.mxu0 0.0
        %3452 = vmatprep.subr.mxu0 0.0
        %3453 = vmatpush1.msra.mxu0 0.0
        %3454 = vmatprep.subr.mxu0 0.0
        %3455 = vmatpush1.msra.mxu0 0.0
        %3456 = vmatprep.subr.mxu0 0.0
        %3457 = vmatpush1.msra.mxu0 0.0
        %3458 = vmatprep.subr.mxu0 0.0
        %3459 = vmatpush1.msra.mxu0 0.0
        %3460 = vmatprep.subr.mxu0 0.0
        %3461 = vmatpush1.msra.mxu0 0.0
        %3462 = vmatprep.subr.mxu0 0.0
        %3463 = vmatpush1.msra.mxu0 0.0
        %3464 = vmatprep.subr.mxu0 0.0
        %3465 = vmatpush1.msra.mxu0 0.0
        %3466 = vmatprep.subr.mxu0 0.0
        %3467 = vmatpush1.msra.mxu0 0.0
        %3468 = vmatprep.subr.mxu0 0.0
        %3469 = vmatpush1.msra.mxu0 0.0
        %3470 = vmatprep.subr.mxu0 0.0
        %3471 = vmatpush1.msra.mxu0 0.0
        %3472 = vmatprep.subr.mxu0 0.0
        %3473 = vmatpush1.msra.mxu0 0.0
        %3474 = vmatprep.subr.mxu0 0.0
        %3475 = vmatpush1.msra.mxu0 0.0
        %3476 = vmatprep.subr.mxu0 0.0
        %3477 = vmatpush1.msra.mxu0 0.0
        %3478 = vmatprep.mubr.f32.mxu0 0.0
        %3479 = vmatmul.mubr.f32.gmra.mrb[0].mxu0 %v3408
        %v3480 = vpop.f32.mrb[0].mxu0
        %v3481 = vadd.f32 %v3405, %v3480
        %v3482 = vpop.f32.mrb[0].mxu0
        %3483 = vdwg.mxu0
        %v3484 = vxor.u32 %v3481, 2147483648
        %v3485 = vmul.f32 %v3484, 1.442695
        %v3486 = vpow.pop %v3485
        %v3487 = vadd.f32 %v3486, 1.0
        %v3488 = vrcp.pop %v3487
        %v3489 = vmul.f32 1.0, %v3488
        %v3490 = vld [vmem:[%s339] sm:$0xff]
        %v3491 = vld [vmem:[%s339 + $0x8] sm:$0xff]
        %v3492 = vld [vmem:[%s339 + $0x10] sm:$0xff]
        %v3493 = vld [vmem:[%s339 + $0x18] sm:$0xff]
        %v3494 = vld [vmem:[%s339 + $0x20] sm:$0xff]
        %v3495 = vld [vmem:[%s339 + $0x28] sm:$0xff]
        %v3496 = vld [vmem:[%s339 + $0x30] sm:$0xff]
        %v3497 = vld [vmem:[%s339 + $0x38] sm:$0xff]
        %v3498 = vld [vmem:[%s339 + $0x40] sm:$0xff]
        %v3499 = vld [vmem:[%s339 + $0x48] sm:$0xff]
        %v3500 = vld [vmem:[%s339 + $0x50] sm:$0xff]
        %v3501 = vld [vmem:[%s339 + $0x58] sm:$0xff]
        %v3502 = vld [vmem:[%s339 + $0x60] sm:$0xff]
        %v3503 = vld [vmem:[%s339 + $0x68] sm:$0xff]
        %v3504 = vld [vmem:[%s339 + $0x70] sm:$0xff]
        %v3505 = vld [vmem:[%s339 + $0x78] sm:$0xff]
        %v3506 = vld [vmem:[%s339 + $0x80] sm:$0xff]
        %v3507 = vld [vmem:[%s339 + $0x88] sm:$0xff]
        %v3508 = vld [vmem:[%s339 + $0x90] sm:$0xff]
        %v3509 = vld [vmem:[%s339 + $0x98] sm:$0xff]
        %v3510 = vld [vmem:[%s339 + $0xa0] sm:$0xff]
        %v3511 = vld [vmem:[%s339 + $0xa8] sm:$0xff]
        %v3512 = vld [vmem:[%s339 + $0xb0] sm:$0xff]
        %v3513 = vld [vmem:[%s339 + $0xb8] sm:$0xff]
        %v3514 = vld [vmem:[%s339 + $0xc0] sm:$0xff]
        %v3515 = vld [vmem:[%s339 + $0xc8] sm:$0xff]
        %v3516 = vld [vmem:[%s339 + $0xd0] sm:$0xff]
        %v3517 = vld [vmem:[%s339 + $0xd8] sm:$0xff]
        %v3518 = vld [vmem:[%s339 + $0xe0] sm:$0xff]
        %v3519 = vld [vmem:[%s339 + $0xe8] sm:$0xff]
        %v3520 = vld [vmem:[%s339 + $0xf0] sm:$0xff]
        %v3521 = vld [vmem:[%s339 + $0xf8] sm:$0xff]
        %v3522 = vld [vmem:[%s344] sm:$0xff]
        %v3523 = vld [vmem:[%s344 + $0x8] sm:$0xff]
        %v3524 = vld [vmem:[%s344 + $0x10] sm:$0xff]
        %v3525 = vld [vmem:[%s344 + $0x18] sm:$0xff]
        %v3526 = vld [vmem:[%s344 + $0x20] sm:$0xff]
        %v3527 = vld [vmem:[%s344 + $0x28] sm:$0xff]
        %v3528 = vld [vmem:[%s344 + $0x30] sm:$0xff]
        %v3529 = vld [vmem:[%s344 + $0x38] sm:$0xff]
        %v3530 = vld [vmem:[%s344 + $0x40] sm:$0xff]
        %v3531 = vld [vmem:[%s344 + $0x48] sm:$0xff]
        %v3532 = vld [vmem:[%s344 + $0x50] sm:$0xff]
        %v3533 = vld [vmem:[%s344 + $0x58] sm:$0xff]
        %v3534 = vld [vmem:[%s344 + $0x60] sm:$0xff]
        %v3535 = vld [vmem:[%s344 + $0x68] sm:$0xff]
        %v3536 = vld [vmem:[%s344 + $0x70] sm:$0xff]
        %v3537 = vld [vmem:[%s344 + $0x78] sm:$0xff]
        %v3538 = vld [vmem:[%s344 + $0x80] sm:$0xff]
        %v3539 = vld [vmem:[%s344 + $0x88] sm:$0xff]
        %v3540 = vld [vmem:[%s344 + $0x90] sm:$0xff]
        %v3541 = vld [vmem:[%s344 + $0x98] sm:$0xff]
        %v3542 = vld [vmem:[%s344 + $0xa0] sm:$0xff]
        %v3543 = vld [vmem:[%s344 + $0xa8] sm:$0xff]
        %v3544 = vld [vmem:[%s344 + $0xb0] sm:$0xff]
        %v3545 = vld [vmem:[%s344 + $0xb8] sm:$0xff]
        %v3546 = vld [vmem:[%s344 + $0xc0] sm:$0xff]
        %v3547 = vld [vmem:[%s344 + $0xc8] sm:$0xff]
        %v3548 = vld [vmem:[%s344 + $0xd0] sm:$0xff]
        %v3549 = vld [vmem:[%s344 + $0xd8] sm:$0xff]
        %v3550 = vld [vmem:[%s344 + $0xe0] sm:$0xff]
        %v3551 = vld [vmem:[%s344 + $0xe8] sm:$0xff]
        %v3552 = vld [vmem:[%s344 + $0xf0] sm:$0xff]
        %v3553 = vld [vmem:[%s344 + $0xf8] sm:$0xff]
        %v3554 = vlaneseq
        %v3555 = vshrl.u32 %v3554, 7
        %v3556 = vsub.s32 0, %v3555
        %v3557 = vrot.slane %v3489, %v3556
        %v3558 = vmul.f32 %v3522, %v3557
        %v3559 = vmul.f32 %v3523, %v3557
        %v3560 = vmul.f32 %v3524, %v3557
        %v3561 = vmul.f32 %v3525, %v3557
        %v3562 = vmul.f32 %v3526, %v3557
        %v3563 = vmul.f32 %v3527, %v3557
        %v3564 = vmul.f32 %v3528, %v3557
        %v3565 = vmul.f32 %v3529, %v3557
        %v3566 = vmul.f32 %v3530, %v3557
        %v3567 = vmul.f32 %v3531, %v3557
        %v3568 = vmul.f32 %v3532, %v3557
        %v3569 = vmul.f32 %v3533, %v3557
        %v3570 = vmul.f32 %v3534, %v3557
        %v3571 = vmul.f32 %v3535, %v3557
        %v3572 = vmul.f32 %v3536, %v3557
        %v3573 = vmul.f32 %v3537, %v3557
        %v3574 = vmul.f32 %v3538, %v3557
        %v3575 = vmul.f32 %v3539, %v3557
        %v3576 = vmul.f32 %v3540, %v3557
        %v3577 = vmul.f32 %v3541, %v3557
        %v3578 = vmul.f32 %v3542, %v3557
        %v3579 = vmul.f32 %v3543, %v3557
        %v3580 = vmul.f32 %v3544, %v3557
        %v3581 = vmul.f32 %v3545, %v3557
        %v3582 = vmul.f32 %v3546, %v3557
        %v3583 = vmul.f32 %v3547, %v3557
        %v3584 = vmul.f32 %v3548, %v3557
        %v3585 = vmul.f32 %v3549, %v3557
        %v3586 = vmul.f32 %v3550, %v3557
        %v3587 = vmul.f32 %v3551, %v3557
        %v3588 = vmul.f32 %v3552, %v3557
        %v3589 = vmul.f32 %v3553, %v3557
        %v3590 = vadd.f32 %v3490, %v3558
        %v3591 = vadd.f32 %v3491, %v3559
        %v3592 = vadd.f32 %v3492, %v3560
        %v3593 = vadd.f32 %v3493, %v3561
        %v3594 = vadd.f32 %v3494, %v3562
        %v3595 = vadd.f32 %v3495, %v3563
        %v3596 = vadd.f32 %v3496, %v3564
        %v3597 = vadd.f32 %v3497, %v3565
        %v3598 = vadd.f32 %v3498, %v3566
        %v3599 = vadd.f32 %v3499, %v3567
        %v3600 = vadd.f32 %v3500, %v3568
        %v3601 = vadd.f32 %v3501, %v3569
        %v3602 = vadd.f32 %v3502, %v3570
        %v3603 = vadd.f32 %v3503, %v3571
        %v3604 = vadd.f32 %v3504, %v3572
        %v3605 = vadd.f32 %v3505, %v3573
        %v3606 = vadd.f32 %v3506, %v3574
        %v3607 = vadd.f32 %v3507, %v3575
        %v3608 = vadd.f32 %v3508, %v3576
        %v3609 = vadd.f32 %v3509, %v3577
        %v3610 = vadd.f32 %v3510, %v3578
        %v3611 = vadd.f32 %v3511, %v3579
        %v3612 = vadd.f32 %v3512, %v3580
        %v3613 = vadd.f32 %v3513, %v3581
        %v3614 = vadd.f32 %v3514, %v3582
        %v3615 = vadd.f32 %v3515, %v3583
        %v3616 = vadd.f32 %v3516, %v3584
        %v3617 = vadd.f32 %v3517, %v3585
        %v3618 = vadd.f32 %v3518, %v3586
        %v3619 = vadd.f32 %v3519, %v3587
        %v3620 = vadd.f32 %v3520, %v3588
        %v3621 = vadd.f32 %v3521, %v3589
        %3622 = vst.msk [vmem:[%s344] sm:$0xff] %vm391, %v3590
        %3623 = vst.msk [vmem:[%s344 + $0x8] sm:$0xff] %vm391, %v3591
        %3624 = vst.msk [vmem:[%s344 + $0x10] sm:$0xff] %vm391, %v3592
        %3625 = vst.msk [vmem:[%s344 + $0x18] sm:$0xff] %vm391, %v3593
        %3626 = vst.msk [vmem:[%s344 + $0x20] sm:$0xff] %vm391, %v3594
        %3627 = vst.msk [vmem:[%s344 + $0x28] sm:$0xff] %vm391, %v3595
        %3628 = vst.msk [vmem:[%s344 + $0x30] sm:$0xff] %vm391, %v3596
        %3629 = vst.msk [vmem:[%s344 + $0x38] sm:$0xff] %vm391, %v3597
        %3630 = vst.msk [vmem:[%s344 + $0x40] sm:$0xff] %vm391, %v3598
        %3631 = vst.msk [vmem:[%s344 + $0x48] sm:$0xff] %vm391, %v3599
        %3632 = vst.msk [vmem:[%s344 + $0x50] sm:$0xff] %vm391, %v3600
        %3633 = vst.msk [vmem:[%s344 + $0x58] sm:$0xff] %vm391, %v3601
        %3634 = vst.msk [vmem:[%s344 + $0x60] sm:$0xff] %vm391, %v3602
        %3635 = vst.msk [vmem:[%s344 + $0x68] sm:$0xff] %vm391, %v3603
        %3636 = vst.msk [vmem:[%s344 + $0x70] sm:$0xff] %vm391, %v3604
        %3637 = vst.msk [vmem:[%s344 + $0x78] sm:$0xff] %vm391, %v3605
        %3638 = vst.msk [vmem:[%s344 + $0x80] sm:$0xff] %vm391, %v3606
        %3639 = vst.msk [vmem:[%s344 + $0x88] sm:$0xff] %vm391, %v3607
        %3640 = vst.msk [vmem:[%s344 + $0x90] sm:$0xff] %vm391, %v3608
        %3641 = vst.msk [vmem:[%s344 + $0x98] sm:$0xff] %vm391, %v3609
        %3642 = vst.msk [vmem:[%s344 + $0xa0] sm:$0xff] %vm391, %v3610
        %3643 = vst.msk [vmem:[%s344 + $0xa8] sm:$0xff] %vm391, %v3611
        %3644 = vst.msk [vmem:[%s344 + $0xb0] sm:$0xff] %vm391, %v3612
        %3645 = vst.msk [vmem:[%s344 + $0xb8] sm:$0xff] %vm391, %v3613
        %3646 = vst.msk [vmem:[%s344 + $0xc0] sm:$0xff] %vm391, %v3614
        %3647 = vst.msk [vmem:[%s344 + $0xc8] sm:$0xff] %vm391, %v3615
        %3648 = vst.msk [vmem:[%s344 + $0xd0] sm:$0xff] %vm391, %v3616
        %3649 = vst.msk [vmem:[%s344 + $0xd8] sm:$0xff] %vm391, %v3617
        %3650 = vst.msk [vmem:[%s344 + $0xe0] sm:$0xff] %vm391, %v3618
        %3651 = vst.msk [vmem:[%s344 + $0xe8] sm:$0xff] %vm391, %v3619
        %3652 = vst.msk [vmem:[%s344 + $0xf0] sm:$0xff] %vm391, %v3620
        %3653 = vst.msk [vmem:[%s344 + $0xf8] sm:$0xff] %vm391, %v3621
      $region72: #{tpu_custom_call.1} parent=55 // pred_fallthru
        _
      %p3654 = scmp.lt.s32.totalorder %s24, 1
      %s3655 = scalar_select %p3654, %s24, 1
      %s3656 = smul.addr %s3655, 32
      %s3657 = smul.addr %s3656, 8
      %s3658 = scalar_lea.vmem %s9, %s3657
      // Predicated region
      $region73: #{tpu_custom_call.1} parent=55 // pred_check
        %p3659 = pneg %p244
      $region74: #{tpu_custom_call.1} parent=55 // pred_check_branch
        %3661 = sbr.rel (%p3659) target = $region76
      $region75: #{tpu_custom_call.1} parent=55 // pred_region
        _
      $region76: #{tpu_custom_call.1} parent=55 // pred_fallthru
        _
    $region56: #{tpu_custom_call.1} parent=5 // pred_fallthru
      _
    %p3662 = scmp.le.s32.totalorder 2, %s15
    // Predicated region
    $region77: #{tpu_custom_call.1} parent=5 // pred_check
      %p3663 = pneg %p3662
    $region78: #{tpu_custom_call.1} parent=5 // pred_check_branch
      %3665 = sbr.rel (%p3663) target = $region80
    $region79: #{tpu_custom_call.1} parent=5 // pred_region
      %s3666 = ssub.s32 %s15, 2
      // Predicated region
      $region81: #{tpu_custom_call.1} parent=79 // pred_check
        %p3667 = pneg %p250
      $region82: #{tpu_custom_call.1} parent=79 // pred_check_branch
        %3669 = sbr.rel (%p3667) target = $region84
      $region83: #{tpu_custom_call.1} parent=79 // pred_region
        %p3670 = scmp.lt.s32.totalorder %s26, 1
        %s3671 = scalar_select %p3670, %s26, 1
        %s3672 = smul.addr %s3671, 32
        %s3673 = smul.addr %s3672, 8
        %s3674 = scalar_lea.vmem %s9, %s3673
      $region84: #{tpu_custom_call.1} parent=79 // pred_fallthru
        _
    $region80: #{tpu_custom_call.1} parent=5 // pred_fallthru
      _
  $region6: #{tpu_custom_call.1} parent=0 // loop_footer
    %s19 = sadd.s32 1, %s15
  $region7: #{tpu_custom_call.1} parent=0 // loop_footer_branch
    %14 = sbr.rel target = $region3
  $region8: #{tpu_custom_call.1} parent=0 // loop_exit
    _

</llo_original>
